<compile_context>
chip_gen: v6e
topology: v6e:2x2x1
jax: 0.10.0
libtpu: 0.0.40
codegen_flags: <defaults>
</compile_context>

<pallas_src>
import functools
import math

import jax
import jax.numpy as jnp
from jax.experimental import pallas as pl
from jax.experimental.pallas import tpu as pltpu


_LN_EPS = 1e-6
_NEG_INF = -1e18


def _layernorm_f32(x, g, b):
    mu = jnp.mean(x, axis=-1, keepdims=True)
    var = jnp.mean((x - mu) ** 2, axis=-1, keepdims=True)
    return (x - mu) * jax.lax.rsqrt(var + _LN_EPS) * g + b


# ----------------------------- Pallas kernels -------------------------------

def _ln_qkv_kernel(x_ref, g_ref, b_ref, w_ref, bias_ref, q_ref, k_ref, v_ref):
    # LayerNorm(x) @ W_qkv (D,3D) fused; splits into q/k/v outputs (bf16).
    x = x_ref[...].astype(jnp.float32)
    xn = _layernorm_f32(x, g_ref[...], b_ref[...])
    h = jnp.dot(xn.astype(jnp.bfloat16), w_ref[...],
                preferred_element_type=jnp.float32) + bias_ref[...]
    d = q_ref.shape[-1]
    q_ref[...] = h[:, :d].astype(q_ref.dtype)
    k_ref[...] = h[:, d:2 * d].astype(k_ref.dtype)
    v_ref[...] = h[:, 2 * d:].astype(v_ref.dtype)


def _kv_kernel(x_ref, w_ref, bias_ref, k_ref, v_ref):
    # memory_bank @ W_kv (D,2D) fused; splits into k/v outputs (bf16).
    h = jnp.dot(x_ref[...].astype(jnp.bfloat16), w_ref[...],
                preferred_element_type=jnp.float32) + bias_ref[...]
    d = k_ref.shape[-1]
    k_ref[...] = h[:, :d].astype(k_ref.dtype)
    v_ref[...] = h[:, d:].astype(v_ref.dtype)


def _out_res_ln_q_kernel(ctx_ref, wo_ref, bo_ref, res_ref, g_ref, b_ref,
                         wq_ref, bq_ref, x_ref, q_ref):
    # attention out-proj + residual add + LayerNorm + next Q projection, all fused.
    y = jnp.dot(ctx_ref[...].astype(jnp.bfloat16), wo_ref[...],
                preferred_element_type=jnp.float32)
    x = y + bo_ref[...] + res_ref[...].astype(jnp.float32)
    x_ref[...] = x.astype(x_ref.dtype)                       # residual stream (f32)
    xn = _layernorm_f32(x, g_ref[...], b_ref[...])
    q_ref[...] = (jnp.dot(xn.astype(jnp.bfloat16), wq_ref[...],
                          preferred_element_type=jnp.float32)
                  + bq_ref[...]).astype(q_ref.dtype)          # next query (bf16)


def _out_res_ffn_kernel(ctx_ref, wo_ref, bo_ref, res_ref, g_ref, bt_ref,
                        w1_ref, b1_ref, w2_ref, b2_ref, o_ref):
    # attention out-proj + residual + PositionwiseFeedForward (LN -> Lin -> ReLU -> Lin -> +x).
    y = jnp.dot(ctx_ref[...].astype(jnp.bfloat16), wo_ref[...],
                preferred_element_type=jnp.float32)
    x = y + bo_ref[...] + res_ref[...].astype(jnp.float32)
    xn = _layernorm_f32(x, g_ref[...], bt_ref[...])
    h = jnp.dot(xn.astype(jnp.bfloat16), w1_ref[...],
                preferred_element_type=jnp.float32) + b1_ref[...]
    h = jnp.maximum(h, 0.0)
    y2 = jnp.dot(h.astype(jnp.bfloat16), w2_ref[...],
                 preferred_element_type=jnp.float32) + b2_ref[...]
    o_ref[...] = (y2 + x).astype(o_ref.dtype)


def _attn_kernel(q_ref, k_ref, v_ref, mask_ref, o_ref, p_ref=None, *,
                 num_heads, scale):
    # One batch per grid step, all heads processed from lane-dense [L, H*Dh] tiles.
    q = q_ref[0]          # [Lq, D]  bf16
    k = k_ref[0]          # [Lk, D]  bf16
    v = v_ref[0]          # [Lk, D]  bf16
    m = mask_ref[0]       # [Lq, Lk] int32, nonzero == masked
    dh = q.shape[-1] // num_heads
    ctx_parts = []
    for h in range(num_heads):
        qh = q[:, h * dh:(h + 1) * dh]
        kh = k[:, h * dh:(h + 1) * dh]
        vh = v[:, h * dh:(h + 1) * dh]
        # QK^T via dot_general (contract Dh), f32 accumulation.
        s = jax.lax.dot_general(qh, kh, (((1,), (1,)), ((), ())),
                                preferred_element_type=jnp.float32) * scale
        s = jnp.where(m > 0, jnp.float32(_NEG_INF), s)
        s = s - jnp.max(s, axis=-1, keepdims=True)
        p = jnp.exp(s)
        p = p * pl.reciprocal(jnp.sum(p, axis=-1, keepdims=True), approx=True)
        if h == 0 and p_ref is not None:
            p_ref[0] = p.astype(p_ref.dtype)   # only head-0 probabilities to HBM
        ctx_parts.append(jnp.dot(p.astype(jnp.bfloat16), vh,
                                 preferred_element_type=jnp.float32))
    o_ref[0] = jnp.concatenate(ctx_parts, axis=-1).astype(o_ref.dtype)


# ------------------------------ Pallas wrappers ------------------------------

def _row_block(n, target=256):
    """Largest row tile <= target that divides n (falls back to full n)."""
    if n <= target:
        return n
    for blk in (512, 256, 128, 64, 32, 16, 8):
        if blk <= target and n % blk == 0:
            return blk
    return n


def _cparams():
    return pltpu.CompilerParams(dimension_semantics=("parallel",))


def ln_qkv_pallas(x2d, g, b, w, bias):
    n, d = x2d.shape
    blk = _row_block(n)
    shp = jax.ShapeDtypeStruct((n, d), jnp.bfloat16)
    return pl.pallas_call(
        _ln_qkv_kernel,
        out_shape=(shp, shp, shp),
        grid=(n // blk,),
        in_specs=[pl.BlockSpec((blk, d), lambda i: (i, 0)),
                  pl.BlockSpec((1, d), lambda i: (0, 0)),
                  pl.BlockSpec((1, d), lambda i: (0, 0)),
                  pl.BlockSpec((d, 3 * d), lambda i: (0, 0)),
                  pl.BlockSpec((1, 3 * d), lambda i: (0, 0))],
        out_specs=tuple(pl.BlockSpec((blk, d), lambda i: (i, 0)) for _ in range(3)),
        compiler_params=_cparams(),
    )(x2d, g, b, w, bias)


def kv_pallas(x2d, w, bias):
    n, d = x2d.shape
    blk = _row_block(n)
    shp = jax.ShapeDtypeStruct((n, d), jnp.bfloat16)
    return pl.pallas_call(
        _kv_kernel,
        out_shape=(shp, shp),
        grid=(n // blk,),
        in_specs=[pl.BlockSpec((blk, d), lambda i: (i, 0)),
                  pl.BlockSpec((d, 2 * d), lambda i: (0, 0)),
                  pl.BlockSpec((1, 2 * d), lambda i: (0, 0))],
        out_specs=tuple(pl.BlockSpec((blk, d), lambda i: (i, 0)) for _ in range(2)),
        compiler_params=_cparams(),
    )(x2d, w, bias)


def out_res_ln_q_pallas(ctx2d, wo, bo, res2d, g, b, wq, bq):
    n, d = res2d.shape
    blk = _row_block(n)
    return pl.pallas_call(
        _out_res_ln_q_kernel,
        out_shape=(jax.ShapeDtypeStruct((n, d), jnp.float32),
                   jax.ShapeDtypeStruct((n, d), jnp.bfloat16)),
        grid=(n // blk,),
        in_specs=[pl.BlockSpec((blk, d), lambda i: (i, 0)),
                  pl.BlockSpec((d, d), lambda i: (0, 0)),
                  pl.BlockSpec((1, d), lambda i: (0, 0)),
                  pl.BlockSpec((blk, d), lambda i: (i, 0)),
                  pl.BlockSpec((1, d), lambda i: (0, 0)),
                  pl.BlockSpec((1, d), lambda i: (0, 0)),
                  pl.BlockSpec((d, d), lambda i: (0, 0)),
                  pl.BlockSpec((1, d), lambda i: (0, 0))],
        out_specs=(pl.BlockSpec((blk, d), lambda i: (i, 0)),
                   pl.BlockSpec((blk, d), lambda i: (i, 0))),
        compiler_params=_cparams(),
    )(ctx2d, wo, bo, res2d, g, b, wq, bq)


def out_res_ffn_pallas(ctx2d, wo, bo, res2d, ffn):
    n, d = res2d.shape
    dff = ffn["w1"].shape[1]
    blk = _row_block(n)
    return pl.pallas_call(
        _out_res_ffn_kernel,
        out_shape=jax.ShapeDtypeStruct((n, d), jnp.float32),
        grid=(n // blk,),
        in_specs=[pl.BlockSpec((blk, d), lambda i: (i, 0)),
                  pl.BlockSpec((d, d), lambda i: (0, 0)),
                  pl.BlockSpec((1, d), lambda i: (0, 0)),
                  pl.BlockSpec((blk, d), lambda i: (i, 0)),
                  pl.BlockSpec((1, d), lambda i: (0, 0)),
                  pl.BlockSpec((1, d), lambda i: (0, 0)),
                  pl.BlockSpec((d, dff), lambda i: (0, 0)),
                  pl.BlockSpec((1, dff), lambda i: (0, 0)),
                  pl.BlockSpec((dff, d), lambda i: (0, 0)),
                  pl.BlockSpec((1, d), lambda i: (0, 0))],
        out_specs=pl.BlockSpec((blk, d), lambda i: (i, 0)),
        compiler_params=_cparams(),
    )(ctx2d, wo, bo, res2d, ffn["ln_g"], ffn["ln_b"],
      ffn["w1"], ffn["b1"], ffn["w2"], ffn["b2"])


def attn_pallas(q, k, v, mask, num_heads, return_probs=False):
    # q: [B,Lq,D], k/v: [B,Lk,D], mask: [B,Lq,Lk] int32 (nonzero == masked)
    B, Lq, D = q.shape
    Lk = k.shape[1]
    scale = 1.0 / math.sqrt(D // num_heads)
    kern = functools.partial(_attn_kernel, num_heads=num_heads, scale=scale)
    out_shapes = [jax.ShapeDtypeStruct((B, Lq, D), jnp.bfloat16)]
    out_specs = [pl.BlockSpec((1, Lq, D), lambda b: (b, 0, 0))]
    if return_probs:
        out_shapes.append(jax.ShapeDtypeStruct((B, Lq, Lk), jnp.float32))
        out_specs.append(pl.BlockSpec((1, Lq, Lk), lambda b: (b, 0, 0)))
    res = pl.pallas_call(
        kern,
        out_shape=tuple(out_shapes),
        grid=(B,),
        in_specs=[pl.BlockSpec((1, Lq, D), lambda b: (b, 0, 0)),
                  pl.BlockSpec((1, Lk, D), lambda b: (b, 0, 0)),
                  pl.BlockSpec((1, Lk, D), lambda b: (b, 0, 0)),
                  pl.BlockSpec((1, Lq, Lk), lambda b: (b, 0, 0))],
        out_specs=tuple(out_specs),
        compiler_params=_cparams(),
    )(q, k, v, mask)
    if return_probs:
        return res[0], res[1]
    return res[0], None


# ------------------------------ Module forward -------------------------------

def transformer_decoder_layer(params, inputs, memory_bank, src_pad_mask,
                              tgt_pad_mask, doc_memory_bank, doc_pad_mask,
                              num_heads):
    B, L, D = inputs.shape
    Ls = memory_bank.shape[1]
    Ld = doc_memory_bank.shape[1]

    # dec_mask = (tgt_pad_mask + subsequent_mask) > 0   (glue: mask construction)
    causal = jnp.triu(jnp.ones((L, L), jnp.int32), k=1)
    dec_mask = ((tgt_pad_mask + causal[None]) > 0).astype(jnp.int32)

    x2 = inputs.reshape(B * L, D)
    sa, ca, da = params["self_attn"], params["context_attn"], params["document_attn"]

    # ---- self attention: LN1 fused into QKV projection -----------------------
    q, k, v = ln_qkv_pallas(x2, params["ln1_g"], params["ln1_b"],
                            sa["wqkv"], sa["bqkv"])
    ctx_self, _ = attn_pallas(q.reshape(B, L, D), k.reshape(B, L, D),
                              v.reshape(B, L, D), dec_mask, num_heads)

    # self out-proj + residual + LN2 + context-Q projection (one kernel)
    query2, q_ctx = out_res_ln_q_pallas(ctx_self.reshape(B * L, D),
                                        sa["wo"], sa["bo"], x2,
                                        params["ln2_g"], params["ln2_b"],
                                        ca["wq"], ca["bq"])

    # ---- context attention (K/V from memory_bank, no LN on memory) ----------
    k_c, v_c = kv_pallas(memory_bank.reshape(B * Ls, D), ca["wkv"], ca["bkv"])
    ctx_ctx, attn_probs = attn_pallas(q_ctx.reshape(B, L, D),
                                      k_c.reshape(B, Ls, D),
                                      v_c.reshape(B, Ls, D),
                                      src_pad_mask, num_heads, return_probs=True)

    # context out-proj + residual + LN3 + document-Q projection (one kernel)
    mid2, q_doc = out_res_ln_q_pallas(ctx_ctx.reshape(B * L, D),
                                      ca["wo"], ca["bo"], query2,
                                      params["ln3_g"], params["ln3_b"],
                                      da["wq"], da["bq"])

    # ---- document attention ---------------------------------------------------
    k_d, v_d = kv_pallas(doc_memory_bank.reshape(B * Ld, D), da["wkv"], da["bkv"])
    ctx_doc, _ = attn_pallas(q_doc.reshape(B, L, D),
                             k_d.reshape(B, Ld, D),
                             v_d.reshape(B, Ld, D),
                             doc_pad_mask, num_heads)

    # document out-proj + residual + FFN (LN -> Lin -> ReLU -> Lin -> +x), one kernel
    output2 = out_res_ffn_pallas(ctx_doc.reshape(B * L, D),
                                 da["wo"], da["bo"], mid2, params["ffn"])
    return output2.reshape(B, L, D), attn_probs


# --------------------------- deterministic params ----------------------------

def _init_params(key, d_model, d_ff):
    keys = iter(jax.random.split(key, 64))

    def lin(din, dout):
        w = 0.02 * jax.random.normal(next(keys), (din, dout), jnp.float32)
        b = 0.01 * jax.random.normal(next(keys), (1, dout), jnp.float32)
        return w.astype(jnp.bfloat16), b      # bf16 weights, f32 biases

    def self_mha():
        wq, bq = lin(d_model, d_model)
        wk, bk = lin(d_model, d_model)
        wv, bv = lin(d_model, d_model)
        wo, bo = lin(d_model, d_model)
        return dict(wqkv=jnp.concatenate([wq, wk, wv], axis=1),
                    bqkv=jnp.concatenate([bq, bk, bv], axis=1),
                    wo=wo, bo=bo)

    def cross_mha():
        wq, bq = lin(d_model, d_model)
        wk, bk = lin(d_model, d_model)
        wv, bv = lin(d_model, d_model)
        wo, bo = lin(d_model, d_model)
        return dict(wq=wq, bq=bq,
                    wkv=jnp.concatenate([wk, wv], axis=1),
                    bkv=jnp.concatenate([bk, bv], axis=1),
                    wo=wo, bo=bo)

    def ln():
        return (jnp.ones((1, d_model), jnp.float32),
                jnp.zeros((1, d_model), jnp.float32))

    w1, b1 = lin(d_model, d_ff)
    w2, b2 = lin(d_ff, d_model)
    ffn_g, ffn_b = ln()
    ln1_g, ln1_b = ln()
    ln2_g, ln2_b = ln()
    ln3_g, ln3_b = ln()
    return dict(
        self_attn=self_mha(), context_attn=cross_mha(), document_attn=cross_mha(),
        ffn=dict(ln_g=ffn_g, ln_b=ffn_b, w1=w1, b1=b1, w2=w2, b2=b2),
        ln1_g=ln1_g, ln1_b=ln1_b, ln2_g=ln2_g, ln2_b=ln2_b,
        ln3_g=ln3_g, ln3_b=ln3_b,
    )


# ----------------------------------- main ------------------------------------

if __name__ == "__main__":
    B, L_TGT, L_SRC, L_DOC = 2, 8, 8, 8
    HIDDEN, HEADS, D_FF = 32, 4, 64

    root = jax.random.PRNGKey(0)
    k_par, k_in, k_mem, k_doc = jax.random.split(root, 4)

    params = _init_params(k_par, HIDDEN, D_FF)
    inputs = jax.random.normal(k_in, (B, L_TGT, HIDDEN), jnp.float32)
    memory_bank = jax.random.normal(k_mem, (B, L_SRC, HIDDEN), jnp.float32)
    doc_memory_bank = jax.random.normal(k_doc, (B, L_DOC, HIDDEN), jnp.float32)

    def pad_mask(lens, lq, lk):
        m = (jnp.arange(lk)[None, :] >= lens[:, None]).astype(jnp.int32)  # [B, lk]
        return jnp.broadcast_to(m[:, None, :], (B, lq, lk)).astype(jnp.int32)

    tgt_pad_mask = pad_mask(jnp.array([8, 6]), L_TGT, L_TGT)
    src_pad_mask = pad_mask(jnp.array([8, 5]), L_TGT, L_SRC)
    doc_pad_mask = pad_mask(jnp.array([7, 8]), L_TGT, L_DOC)

    fwd = jax.jit(functools.partial(transformer_decoder_layer, num_heads=HEADS))
    output, attn = fwd(params, inputs, memory_bank, src_pad_mask,
                       tgt_pad_mask, doc_memory_bank, doc_pad_mask)
    jax.block_until_ready(output)
    jax.block_until_ready(attn)

    assert output.shape == (B, L_TGT, HIDDEN)
    assert attn.shape == (B, L_TGT, L_SRC)
    assert bool(jnp.all(jnp.isfinite(output)))
    assert bool(jnp.all(jnp.isfinite(attn)))
    print("KERNEL_OK")
</pallas_src>

<mosaic_0001>
module attributes {stable_mosaic.version = 11 : i64} {
  func.func @_kv_kernel(%arg0: i32, %arg1: memref<16x32xf32, #tpu.memory_space<vmem>>, %arg2: memref<32x64xbf16, #tpu.memory_space<vmem>>, %arg3: memref<1x64xf32, #tpu.memory_space<vmem>>, %arg4: memref<16x32xbf16, #tpu.memory_space<vmem>>, %arg5: memref<16x32xbf16, #tpu.memory_space<vmem>>) attributes {dimension_semantics = [#tpu.dimension_semantics<parallel>], iteration_bounds = array<i64: 1>, scalar_prefetch = 0 : i64, scratch_operands = 0 : i64, tpu.core_type = #tpu.core_type<tc>, window_params = [{transform_indices = @transform_0, window_bounds = array<i64: 16, 32>}, {pipeline_mode = #tpu.pipeline_mode<synchronous>, transform_indices = @transform_1, window_bounds = array<i64: 32, 64>}, {pipeline_mode = #tpu.pipeline_mode<synchronous>, transform_indices = @transform_2, window_bounds = array<i64: 1, 64>}, {transform_indices = @transform_3, window_bounds = array<i64: 16, 32>}, {transform_indices = @transform_4, window_bounds = array<i64: 16, 32>}]} {
    %c0 = arith.constant 0 : index
    %c0_0 = arith.constant 0 : index
    %0 = vector.load %arg1[%c0, %c0_0] : memref<16x32xf32, #tpu.memory_space<vmem>>, vector<16x32xf32>
    %1 = arith.truncf %0 : vector<16x32xf32> to vector<16x32xbf16>
    %c0_1 = arith.constant 0 : index
    %c0_2 = arith.constant 0 : index
    %2 = vector.load %arg2[%c0_1, %c0_2] : memref<32x64xbf16, #tpu.memory_space<vmem>>, vector<32x64xbf16>
    %cst = arith.constant dense<0.000000e+00> : vector<16x64xf32>
    %3 = tpu.matmul %1, %2, %cst {dimension_numbers = #tpu.dot_dimension_numbers<[1], [0], [0], [1], [0, 0, 1, 1], [], []>} : vector<16x32xbf16>, vector<32x64xbf16>, vector<16x64xf32> -> vector<16x64xf32>
    %c0_3 = arith.constant 0 : index
    %c0_4 = arith.constant 0 : index
    %4 = vector.load %arg3[%c0_3, %c0_4] : memref<1x64xf32, #tpu.memory_space<vmem>>, vector<1x64xf32>
    %5 = vector.broadcast %4 : vector<1x64xf32> to vector<16x64xf32>
    %6 = arith.addf %3, %5 : vector<16x64xf32>
    %7 = vector.extract_strided_slice %6 {offsets = [0, 0], sizes = [16, 32], strides = [1, 1]} : vector<16x64xf32> to vector<16x32xf32>
    %8 = arith.truncf %7 : vector<16x32xf32> to vector<16x32xbf16>
    %c0_5 = arith.constant 0 : index
    %c0_6 = arith.constant 0 : index
    %9 = vector.load %arg4[%c0_5, %c0_6] : memref<16x32xbf16, #tpu.memory_space<vmem>>, vector<16x32xbf16>
    tpu.vector_store %arg4[%c0_5, %c0_6], %8 {strides = array<i32>} : memref<16x32xbf16, #tpu.memory_space<vmem>>, vector<16x32xbf16>,
    %10 = vector.extract_strided_slice %6 {offsets = [0, 32], sizes = [16, 32], strides = [1, 1]} : vector<16x64xf32> to vector<16x32xf32>
    %11 = arith.truncf %10 : vector<16x32xf32> to vector<16x32xbf16>
    %c0_7 = arith.constant 0 : index
    %c0_8 = arith.constant 0 : index
    %12 = vector.load %arg5[%c0_7, %c0_8] : memref<16x32xbf16, #tpu.memory_space<vmem>>, vector<16x32xbf16>
    tpu.vector_store %arg5[%c0_7, %c0_8], %11 {strides = array<i32>} : memref<16x32xbf16, #tpu.memory_space<vmem>>, vector<16x32xbf16>,
    return
  }
  func.func @transform_0(%arg0: i32) -> (i32, i32) {
    %c0_i32 = arith.constant 0 : i32
    %c0_i32_0 = arith.constant 0 : i32
    return %arg0, %c0_i32 : i32, i32
  }
  func.func @transform_1(%arg0: i32) -> (i32, i32) {
    %c0_i32 = arith.constant 0 : i32
    %c0_i32_0 = arith.constant 0 : i32
    %c0_i32_1 = arith.constant 0 : i32
    return %c0_i32, %c0_i32_0 : i32, i32
  }
  func.func @transform_2(%arg0: i32) -> (i32, i32) {
    %c0_i32 = arith.constant 0 : i32
    %c0_i32_0 = arith.constant 0 : i32
    %c0_i32_1 = arith.constant 0 : i32
    return %c0_i32, %c0_i32_0 : i32, i32
  }
  func.func @transform_3(%arg0: i32) -> (i32, i32) {
    %c0_i32 = arith.constant 0 : i32
    %c0_i32_0 = arith.constant 0 : i32
    return %arg0, %c0_i32 : i32, i32
  }
  func.func @transform_4(%arg0: i32) -> (i32, i32) {
    %c0_i32 = arith.constant 0 : i32
    %c0_i32_0 = arith.constant 0 : i32
    return %arg0, %c0_i32 : i32, i32
  }
}

module attributes {stable_mosaic.version = 11 : i64} {
  func.func @_ln_qkv_kernel(%arg0: i32, %arg1: memref<16x32xf32, #tpu.memory_space<vmem>>, %arg2: memref<1x32xf32, #tpu.memory_space<vmem>>, %arg3: memref<1x32xf32, #tpu.memory_space<vmem>>, %arg4: memref<32x96xbf16, #tpu.memory_space<vmem>>, %arg5: memref<1x96xf32, #tpu.memory_space<vmem>>, %arg6: memref<16x32xbf16, #tpu.memory_space<vmem>>, %arg7: memref<16x32xbf16, #tpu.memory_space<vmem>>, %arg8: memref<16x32xbf16, #tpu.memory_space<vmem>>) attributes {dimension_semantics = [#tpu.dimension_semantics<parallel>], iteration_bounds = array<i64: 1>, scalar_prefetch = 0 : i64, scratch_operands = 0 : i64, tpu.core_type = #tpu.core_type<tc>, window_params = [{transform_indices = @transform_0, window_bounds = array<i64: 16, 32>}, {pipeline_mode = #tpu.pipeline_mode<synchronous>, transform_indices = @transform_1, window_bounds = array<i64: 1, 32>}, {pipeline_mode = #tpu.pipeline_mode<synchronous>, transform_indices = @transform_2, window_bounds = array<i64: 1, 32>}, {pipeline_mode = #tpu.pipeline_mode<synchronous>, transform_indices = @transform_3, window_bounds = array<i64: 32, 96>}, {pipeline_mode = #tpu.pipeline_mode<synchronous>, transform_indices = @transform_4, window_bounds = array<i64: 1, 96>}, {transform_indices = @transform_5, window_bounds = array<i64: 16, 32>}, {transform_indices = @transform_6, window_bounds = array<i64: 16, 32>}, {transform_indices = @transform_7, window_bounds = array<i64: 16, 32>}]} {
    %c0 = arith.constant 0 : index
    %c0_0 = arith.constant 0 : index
    %0 = vector.load %arg1[%c0, %c0_0] : memref<16x32xf32, #tpu.memory_space<vmem>>, vector<16x32xf32>
    %c0_1 = arith.constant 0 : index
    %c0_2 = arith.constant 0 : index
    %1 = vector.load %arg2[%c0_1, %c0_2] : memref<1x32xf32, #tpu.memory_space<vmem>>, vector<1x32xf32>
    %c0_3 = arith.constant 0 : index
    %c0_4 = arith.constant 0 : index
    %2 = vector.load %arg3[%c0_3, %c0_4] : memref<1x32xf32, #tpu.memory_space<vmem>>, vector<1x32xf32>
    %cst = arith.constant dense<0.000000e+00> : vector<16xf32>
    %3 = vector.multi_reduction <add>, %0, %cst [1] : vector<16x32xf32> to vector<16xf32>
    %4 = vector.shape_cast %3 : vector<16xf32> to vector<16x1xf32>
    %cst_5 = arith.constant 3.200000e+01 : f32
    %5 = vector.broadcast %cst_5 : f32 to vector<16x1xf32>
    %6 = arith.divf %4, %5 : vector<16x1xf32>
    %7 = vector.broadcast %6 : vector<16x1xf32> to vector<16x32xf32>
    %8 = arith.subf %0, %7 : vector<16x32xf32>
    %9 = arith.mulf %8, %8 : vector<16x32xf32>
    %cst_6 = arith.constant dense<0.000000e+00> : vector<16xf32>
    %10 = vector.multi_reduction <add>, %9, %cst_6 [1] : vector<16x32xf32> to vector<16xf32>
    %11 = vector.shape_cast %10 : vector<16xf32> to vector<16x1xf32>
    %cst_7 = arith.constant 3.200000e+01 : f32
    %12 = vector.broadcast %cst_7 : f32 to vector<16x1xf32>
    %13 = arith.divf %11, %12 : vector<16x1xf32>
    %14 = vector.broadcast %6 : vector<16x1xf32> to vector<16x32xf32>
    %15 = arith.subf %0, %14 : vector<16x32xf32>
    %cst_8 = arith.constant 9.99999997E-7 : f32
    %16 = vector.broadcast %cst_8 : f32 to vector<16x1xf32>
    %17 = arith.addf %13, %16 : vector<16x1xf32>
    %18 = math.rsqrt %17 : vector<16x1xf32>
    %19 = vector.broadcast %18 : vector<16x1xf32> to vector<16x32xf32>
    %20 = arith.mulf %15, %19 : vector<16x32xf32>
    %21 = vector.broadcast %1 : vector<1x32xf32> to vector<16x32xf32>
    %22 = arith.mulf %20, %21 : vector<16x32xf32>
    %23 = vector.broadcast %2 : vector<1x32xf32> to vector<16x32xf32>
    %24 = arith.addf %22, %23 : vector<16x32xf32>
    %25 = arith.truncf %24 : vector<16x32xf32> to vector<16x32xbf16>
    %c0_9 = arith.constant 0 : index
    %c0_10 = arith.constant 0 : index
    %26 = vector.load %arg4[%c0_9, %c0_10] : memref<32x96xbf16, #tpu.memory_space<vmem>>, vector<32x96xbf16>
    %cst_11 = arith.constant dense<0.000000e+00> : vector<16x96xf32>
    %27 = tpu.matmul %25, %26, %cst_11 {dimension_numbers = #tpu.dot_dimension_numbers<[1], [0], [0], [1], [0, 0, 1, 1], [], []>} : vector<16x32xbf16>, vector<32x96xbf16>, vector<16x96xf32> -> vector<16x96xf32>
    %c0_12 = arith.constant 0 : index
    %c0_13 = arith.constant 0 : index
    %28 = vector.load %arg5[%c0_12, %c0_13] : memref<1x96xf32, #tpu.memory_space<vmem>>, vector<1x96xf32>
    %29 = vector.broadcast %28 : vector<1x96xf32> to vector<16x96xf32>
    %30 = arith.addf %27, %29 : vector<16x96xf32>
    %31 = vector.extract_strided_slice %30 {offsets = [0, 0], sizes = [16, 32], strides = [1, 1]} : vector<16x96xf32> to vector<16x32xf32>
    %32 = arith.truncf %31 : vector<16x32xf32> to vector<16x32xbf16>
    %c0_14 = arith.constant 0 : index
    %c0_15 = arith.constant 0 : index
    %33 = vector.load %arg6[%c0_14, %c0_15] : memref<16x32xbf16, #tpu.memory_space<vmem>>, vector<16x32xbf16>
    tpu.vector_store %arg6[%c0_14, %c0_15], %32 {strides = array<i32>} : memref<16x32xbf16, #tpu.memory_space<vmem>>, vector<16x32xbf16>,
    %34 = vector.extract_strided_slice %30 {offsets = [0, 32], sizes = [16, 32], strides = [1, 1]} : vector<16x96xf32> to vector<16x32xf32>
    %35 = arith.truncf %34 : vector<16x32xf32> to vector<16x32xbf16>
    %c0_16 = arith.constant 0 : index
    %c0_17 = arith.constant 0 : index
    %36 = vector.load %arg7[%c0_16, %c0_17] : memref<16x32xbf16, #tpu.memory_space<vmem>>, vector<16x32xbf16>
    tpu.vector_store %arg7[%c0_16, %c0_17], %35 {strides = array<i32>} : memref<16x32xbf16, #tpu.memory_space<vmem>>, vector<16x32xbf16>,
    %37 = vector.extract_strided_slice %30 {offsets = [0, 64], sizes = [16, 32], strides = [1, 1]} : vector<16x96xf32> to vector<16x32xf32>
    %38 = arith.truncf %37 : vector<16x32xf32> to vector<16x32xbf16>
    %c0_18 = arith.constant 0 : index
    %c0_19 = arith.constant 0 : index
    %39 = vector.load %arg8[%c0_18, %c0_19] : memref<16x32xbf16, #tpu.memory_space<vmem>>, vector<16x32xbf16>
    tpu.vector_store %arg8[%c0_18, %c0_19], %38 {strides = array<i32>} : memref<16x32xbf16, #tpu.memory_space<vmem>>, vector<16x32xbf16>,
    return
  }
  func.func @transform_0(%arg0: i32) -> (i32, i32) {
    %c0_i32 = arith.constant 0 : i32
    %c0_i32_0 = arith.constant 0 : i32
    return %arg0, %c0_i32 : i32, i32
  }
  func.func @transform_1(%arg0: i32) -> (i32, i32) {
    %c0_i32 = arith.constant 0 : i32
    %c0_i32_0 = arith.constant 0 : i32
    %c0_i32_1 = arith.constant 0 : i32
    return %c0_i32, %c0_i32_0 : i32, i32
  }
  func.func @transform_2(%arg0: i32) -> (i32, i32) {
    %c0_i32 = arith.constant 0 : i32
    %c0_i32_0 = arith.constant 0 : i32
    %c0_i32_1 = arith.constant 0 : i32
    return %c0_i32, %c0_i32_0 : i32, i32
  }
  func.func @transform_3(%arg0: i32) -> (i32, i32) {
    %c0_i32 = arith.constant 0 : i32
    %c0_i32_0 = arith.constant 0 : i32
    %c0_i32_1 = arith.constant 0 : i32
    return %c0_i32, %c0_i32_0 : i32, i32
  }
  func.func @transform_4(%arg0: i32) -> (i32, i32) {
    %c0_i32 = arith.constant 0 : i32
    %c0_i32_0 = arith.constant 0 : i32
    %c0_i32_1 = arith.constant 0 : i32
    return %c0_i32, %c0_i32_0 : i32, i32
  }
  func.func @transform_5(%arg0: i32) -> (i32, i32) {
    %c0_i32 = arith.constant 0 : i32
    %c0_i32_0 = arith.constant 0 : i32
    return %arg0, %c0_i32 : i32, i32
  }
  func.func @transform_6(%arg0: i32) -> (i32, i32) {
    %c0_i32 = arith.constant 0 : i32
    %c0_i32_0 = arith.constant 0 : i32
    return %arg0, %c0_i32 : i32, i32
  }
  func.func @transform_7(%arg0: i32) -> (i32, i32) {
    %c0_i32 = arith.constant 0 : i32
    %c0_i32_0 = arith.constant 0 : i32
    return %arg0, %c0_i32 : i32, i32
  }
}

module attributes {stable_mosaic.version = 11 : i64} {
  func.func @_attn_kernel(%arg0: i32, %arg1: memref<1x8x32xbf16, #tpu.memory_space<vmem>>, %arg2: memref<1x8x32xbf16, #tpu.memory_space<vmem>>, %arg3: memref<1x8x32xbf16, #tpu.memory_space<vmem>>, %arg4: memref<1x8x8xi32, #tpu.memory_space<vmem>>, %arg5: memref<1x8x32xbf16, #tpu.memory_space<vmem>>) attributes {dimension_semantics = [#tpu.dimension_semantics<parallel>], iteration_bounds = array<i64: 2>, scalar_prefetch = 0 : i64, scratch_operands = 0 : i64, tpu.core_type = #tpu.core_type<tc>, window_params = [{transform_indices = @transform_0, window_bounds = array<i64: 1, 8, 32>}, {transform_indices = @transform_1, window_bounds = array<i64: 1, 8, 32>}, {transform_indices = @transform_2, window_bounds = array<i64: 1, 8, 32>}, {transform_indices = @transform_3, window_bounds = array<i64: 1, 8, 8>}, {transform_indices = @transform_4, window_bounds = array<i64: 1, 8, 32>}]} {
    %c0 = arith.constant 0 : index
    %c0_0 = arith.constant 0 : index
    %c0_1 = arith.constant 0 : index
    %0 = vector.load %arg1[%c0, %c0_0, %c0_1] : memref<1x8x32xbf16, #tpu.memory_space<vmem>>, vector<1x8x32xbf16>
    %1 = vector.shape_cast %0 : vector<1x8x32xbf16> to vector<8x32xbf16>
    %c0_2 = arith.constant 0 : index
    %c0_3 = arith.constant 0 : index
    %c0_4 = arith.constant 0 : index
    %2 = vector.load %arg2[%c0_2, %c0_3, %c0_4] : memref<1x8x32xbf16, #tpu.memory_space<vmem>>, vector<1x8x32xbf16>
    %3 = vector.shape_cast %2 : vector<1x8x32xbf16> to vector<8x32xbf16>
    %c0_5 = arith.constant 0 : index
    %c0_6 = arith.constant 0 : index
    %c0_7 = arith.constant 0 : index
    %4 = vector.load %arg3[%c0_5, %c0_6, %c0_7] : memref<1x8x32xbf16, #tpu.memory_space<vmem>>, vector<1x8x32xbf16>
    %5 = vector.shape_cast %4 : vector<1x8x32xbf16> to vector<8x32xbf16>
    %c0_8 = arith.constant 0 : index
    %c0_9 = arith.constant 0 : index
    %c0_10 = arith.constant 0 : index
    %6 = vector.load %arg4[%c0_8, %c0_9, %c0_10] : memref<1x8x8xi32, #tpu.memory_space<vmem>>, vector<1x8x8xi32>
    %7 = vector.shape_cast %6 : vector<1x8x8xi32> to vector<8x8xi32>
    %8 = vector.extract_strided_slice %1 {offsets = [0, 0], sizes = [8, 8], strides = [1, 1]} : vector<8x32xbf16> to vector<8x8xbf16>
    %9 = vector.extract_strided_slice %3 {offsets = [0, 0], sizes = [8, 8], strides = [1, 1]} : vector<8x32xbf16> to vector<8x8xbf16>
    %10 = vector.extract_strided_slice %5 {offsets = [0, 0], sizes = [8, 8], strides = [1, 1]} : vector<8x32xbf16> to vector<8x8xbf16>
    %cst = arith.constant dense<0.000000e+00> : vector<8x8xf32>
    %11 = tpu.matmul %8, %9, %cst {dimension_numbers = #tpu.dot_dimension_numbers<[1], [1], [0], [0], [0, 0, 1, 0], [], []>} : vector<8x8xbf16>, vector<8x8xbf16>, vector<8x8xf32> -> vector<8x8xf32>
    %cst_11 = arith.constant 0.353553385 : f32
    %12 = vector.broadcast %cst_11 : f32 to vector<8x8xf32>
    %13 = arith.mulf %11, %12 : vector<8x8xf32>
    %c0_i32 = arith.constant 0 : i32
    %14 = vector.broadcast %c0_i32 : i32 to vector<8x8xi32>
    %15 = arith.cmpi sgt, %7, %14 : vector<8x8xi32>
    %cst_12 = arith.constant -9.99999984E+17 : f32
    %16 = vector.broadcast %cst_12 : f32 to vector<8x8xf32>
    %17 = arith.select %15, %16, %13 : vector<8x8xi1>, vector<8x8xf32>
    %cst_13 = arith.constant dense<0xFF800000> : vector<8xf32>
    %18 = vector.multi_reduction <maximumf>, %17, %cst_13 [1] : vector<8x8xf32> to vector<8xf32>
    %19 = vector.shape_cast %18 : vector<8xf32> to vector<8x1xf32>
    %20 = vector.broadcast %19 : vector<8x1xf32> to vector<8x8xf32>
    %21 = arith.subf %17, %20 : vector<8x8xf32>
    %22 = math.exp %21 : vector<8x8xf32>
    %cst_14 = arith.constant dense<0.000000e+00> : vector<8xf32>
    %23 = vector.multi_reduction <add>, %22, %cst_14 [1] : vector<8x8xf32> to vector<8xf32>
    %24 = vector.shape_cast %23 : vector<8xf32> to vector<8x1xf32>
    %25 = tpu.reciprocal %24 {approx = true} : vector<8x1xf32> -> vector<8x1xf32>
    %26 = vector.broadcast %25 : vector<8x1xf32> to vector<8x8xf32>
    %27 = arith.mulf %22, %26 : vector<8x8xf32>
    %28 = arith.truncf %27 : vector<8x8xf32> to vector<8x8xbf16>
    %cst_15 = arith.constant dense<0.000000e+00> : vector<8x8xf32>
    %29 = tpu.matmul %28, %10, %cst_15 {dimension_numbers = #tpu.dot_dimension_numbers<[1], [0], [0], [1], [0, 0, 1, 1], [], []>} : vector<8x8xbf16>, vector<8x8xbf16>, vector<8x8xf32> -> vector<8x8xf32>
    %30 = vector.extract_strided_slice %1 {offsets = [0, 8], sizes = [8, 8], strides = [1, 1]} : vector<8x32xbf16> to vector<8x8xbf16>
    %31 = vector.extract_strided_slice %3 {offsets = [0, 8], sizes = [8, 8], strides = [1, 1]} : vector<8x32xbf16> to vector<8x8xbf16>
    %32 = vector.extract_strided_slice %5 {offsets = [0, 8], sizes = [8, 8], strides = [1, 1]} : vector<8x32xbf16> to vector<8x8xbf16>
    %cst_16 = arith.constant dense<0.000000e+00> : vector<8x8xf32>
    %33 = tpu.matmul %30, %31, %cst_16 {dimension_numbers = #tpu.dot_dimension_numbers<[1], [1], [0], [0], [0, 0, 1, 0], [], []>} : vector<8x8xbf16>, vector<8x8xbf16>, vector<8x8xf32> -> vector<8x8xf32>
    %cst_17 = arith.constant 0.353553385 : f32
    %34 = vector.broadcast %cst_17 : f32 to vector<8x8xf32>
    %35 = arith.mulf %33, %34 : vector<8x8xf32>
    %c0_i32_18 = arith.constant 0 : i32
    %36 = vector.broadcast %c0_i32_18 : i32 to vector<8x8xi32>
    %37 = arith.cmpi sgt, %7, %36 : vector<8x8xi32>
    %cst_19 = arith.constant -9.99999984E+17 : f32
    %38 = vector.broadcast %cst_19 : f32 to vector<8x8xf32>
    %39 = arith.select %37, %38, %35 : vector<8x8xi1>, vector<8x8xf32>
    %cst_20 = arith.constant dense<0xFF800000> : vector<8xf32>
    %40 = vector.multi_reduction <maximumf>, %39, %cst_20 [1] : vector<8x8xf32> to vector<8xf32>
    %41 = vector.shape_cast %40 : vector<8xf32> to vector<8x1xf32>
    %42 = vector.broadcast %41 : vector<8x1xf32> to vector<8x8xf32>
    %43 = arith.subf %39, %42 : vector<8x8xf32>
    %44 = math.exp %43 : vector<8x8xf32>
    %cst_21 = arith.constant dense<0.000000e+00> : vector<8xf32>
    %45 = vector.multi_reduction <add>, %44, %cst_21 [1] : vector<8x8xf32> to vector<8xf32>
    %46 = vector.shape_cast %45 : vector<8xf32> to vector<8x1xf32>
    %47 = tpu.reciprocal %46 {approx = true} : vector<8x1xf32> -> vector<8x1xf32>
    %48 = vector.broadcast %47 : vector<8x1xf32> to vector<8x8xf32>
    %49 = arith.mulf %44, %48 : vector<8x8xf32>
    %50 = arith.truncf %49 : vector<8x8xf32> to vector<8x8xbf16>
    %cst_22 = arith.constant dense<0.000000e+00> : vector<8x8xf32>
    %51 = tpu.matmul %50, %32, %cst_22 {dimension_numbers = #tpu.dot_dimension_numbers<[1], [0], [0], [1], [0, 0, 1, 1], [], []>} : vector<8x8xbf16>, vector<8x8xbf16>, vector<8x8xf32> -> vector<8x8xf32>
    %52 = vector.extract_strided_slice %1 {offsets = [0, 16], sizes = [8, 8], strides = [1, 1]} : vector<8x32xbf16> to vector<8x8xbf16>
    %53 = vector.extract_strided_slice %3 {offsets = [0, 16], sizes = [8, 8], strides = [1, 1]} : vector<8x32xbf16> to vector<8x8xbf16>
    %54 = vector.extract_strided_slice %5 {offsets = [0, 16], sizes = [8, 8], strides = [1, 1]} : vector<8x32xbf16> to vector<8x8xbf16>
    %cst_23 = arith.constant dense<0.000000e+00> : vector<8x8xf32>
    %55 = tpu.matmul %52, %53, %cst_23 {dimension_numbers = #tpu.dot_dimension_numbers<[1], [1], [0], [0], [0, 0, 1, 0], [], []>} : vector<8x8xbf16>, vector<8x8xbf16>, vector<8x8xf32> -> vector<8x8xf32>
    %cst_24 = arith.constant 0.353553385 : f32
    %56 = vector.broadcast %cst_24 : f32 to vector<8x8xf32>
    %57 = arith.mulf %55, %56 : vector<8x8xf32>
    %c0_i32_25 = arith.constant 0 : i32
    %58 = vector.broadcast %c0_i32_25 : i32 to vector<8x8xi32>
    %59 = arith.cmpi sgt, %7, %58 : vector<8x8xi32>
    %cst_26 = arith.constant -9.99999984E+17 : f32
    %60 = vector.broadcast %cst_26 : f32 to vector<8x8xf32>
    %61 = arith.select %59, %60, %57 : vector<8x8xi1>, vector<8x8xf32>
    %cst_27 = arith.constant dense<0xFF800000> : vector<8xf32>
    %62 = vector.multi_reduction <maximumf>, %61, %cst_27 [1] : vector<8x8xf32> to vector<8xf32>
    %63 = vector.shape_cast %62 : vector<8xf32> to vector<8x1xf32>
    %64 = vector.broadcast %63 : vector<8x1xf32> to vector<8x8xf32>
    %65 = arith.subf %61, %64 : vector<8x8xf32>
    %66 = math.exp %65 : vector<8x8xf32>
    %cst_28 = arith.constant dense<0.000000e+00> : vector<8xf32>
    %67 = vector.multi_reduction <add>, %66, %cst_28 [1] : vector<8x8xf32> to vector<8xf32>
    %68 = vector.shape_cast %67 : vector<8xf32> to vector<8x1xf32>
    %69 = tpu.reciprocal %68 {approx = true} : vector<8x1xf32> -> vector<8x1xf32>
    %70 = vector.broadcast %69 : vector<8x1xf32> to vector<8x8xf32>
    %71 = arith.mulf %66, %70 : vector<8x8xf32>
    %72 = arith.truncf %71 : vector<8x8xf32> to vector<8x8xbf16>
    %cst_29 = arith.constant dense<0.000000e+00> : vector<8x8xf32>
    %73 = tpu.matmul %72, %54, %cst_29 {dimension_numbers = #tpu.dot_dimension_numbers<[1], [0], [0], [1], [0, 0, 1, 1], [], []>} : vector<8x8xbf16>, vector<8x8xbf16>, vector<8x8xf32> -> vector<8x8xf32>
    %74 = vector.extract_strided_slice %1 {offsets = [0, 24], sizes = [8, 8], strides = [1, 1]} : vector<8x32xbf16> to vector<8x8xbf16>
    %75 = vector.extract_strided_slice %3 {offsets = [0, 24], sizes = [8, 8], strides = [1, 1]} : vector<8x32xbf16> to vector<8x8xbf16>
    %76 = vector.extract_strided_slice %5 {offsets = [0, 24], sizes = [8, 8], strides = [1, 1]} : vector<8x32xbf16> to vector<8x8xbf16>
    %cst_30 = arith.constant dense<0.000000e+00> : vector<8x8xf32>
    %77 = tpu.matmul %74, %75, %cst_30 {dimension_numbers = #tpu.dot_dimension_numbers<[1], [1], [0], [0], [0, 0, 1, 0], [], []>} : vector<8x8xbf16>, vector<8x8xbf16>, vector<8x8xf32> -> vector<8x8xf32>
    %cst_31 = arith.constant 0.353553385 : f32
    %78 = vector.broadcast %cst_31 : f32 to vector<8x8xf32>
    %79 = arith.mulf %77, %78 : vector<8x8xf32>
    %c0_i32_32 = arith.constant 0 : i32
    %80 = vector.broadcast %c0_i32_32 : i32 to vector<8x8xi32>
    %81 = arith.cmpi sgt, %7, %80 : vector<8x8xi32>
    %cst_33 = arith.constant -9.99999984E+17 : f32
    %82 = vector.broadcast %cst_33 : f32 to vector<8x8xf32>
    %83 = arith.select %81, %82, %79 : vector<8x8xi1>, vector<8x8xf32>
    %cst_34 = arith.constant dense<0xFF800000> : vector<8xf32>
    %84 = vector.multi_reduction <maximumf>, %83, %cst_34 [1] : vector<8x8xf32> to vector<8xf32>
    %85 = vector.shape_cast %84 : vector<8xf32> to vector<8x1xf32>
    %86 = vector.broadcast %85 : vector<8x1xf32> to vector<8x8xf32>
    %87 = arith.subf %83, %86 : vector<8x8xf32>
    %88 = math.exp %87 : vector<8x8xf32>
    %cst_35 = arith.constant dense<0.000000e+00> : vector<8xf32>
    %89 = vector.multi_reduction <add>, %88, %cst_35 [1] : vector<8x8xf32> to vector<8xf32>
    %90 = vector.shape_cast %89 : vector<8xf32> to vector<8x1xf32>
    %91 = tpu.reciprocal %90 {approx = true} : vector<8x1xf32> -> vector<8x1xf32>
    %92 = vector.broadcast %91 : vector<8x1xf32> to vector<8x8xf32>
    %93 = arith.mulf %88, %92 : vector<8x8xf32>
    %94 = arith.truncf %93 : vector<8x8xf32> to vector<8x8xbf16>
    %cst_36 = arith.constant dense<0.000000e+00> : vector<8x8xf32>
    %95 = tpu.matmul %94, %76, %cst_36 {dimension_numbers = #tpu.dot_dimension_numbers<[1], [0], [0], [1], [0, 0, 1, 1], [], []>} : vector<8x8xbf16>, vector<8x8xbf16>, vector<8x8xf32> -> vector<8x8xf32>
    %96 = tpu.concatenate %29, %51, %73, %95 in 1 : vector<8x8xf32>, vector<8x8xf32>, vector<8x8xf32>, vector<8x8xf32> -> vector<8x32xf32>
    %97 = arith.truncf %96 : vector<8x32xf32> to vector<8x32xbf16>
    %c0_37 = arith.constant 0 : index
    %c0_38 = arith.constant 0 : index
    %c0_39 = arith.constant 0 : index
    %98 = vector.load %arg5[%c0_37, %c0_38, %c0_39] : memref<1x8x32xbf16, #tpu.memory_space<vmem>>, vector<1x8x32xbf16>
    %99 = vector.shape_cast %98 : vector<1x8x32xbf16> to vector<8x32xbf16>
    %100 = vector.shape_cast %97 : vector<8x32xbf16> to vector<1x8x32xbf16>
    tpu.vector_store %arg5[%c0_37, %c0_38, %c0_39], %100 {strides = array<i32>} : memref<1x8x32xbf16, #tpu.memory_space<vmem>>, vector<1x8x32xbf16>,
    return
  }
  func.func @transform_0(%arg0: i32) -> (i32, i32, i32) {
    %c0_i32 = arith.constant 0 : i32
    %c0_i32_0 = arith.constant 0 : i32
    %c0_i32_1 = arith.constant 0 : i32
    return %arg0, %c0_i32, %c0_i32_0 : i32, i32, i32
  }
  func.func @transform_1(%arg0: i32) -> (i32, i32, i32) {
    %c0_i32 = arith.constant 0 : i32
    %c0_i32_0 = arith.constant 0 : i32
    %c0_i32_1 = arith.constant 0 : i32
    return %arg0, %c0_i32, %c0_i32_0 : i32, i32, i32
  }
  func.func @transform_2(%arg0: i32) -> (i32, i32, i32) {
    %c0_i32 = arith.constant 0 : i32
    %c0_i32_0 = arith.constant 0 : i32
    %c0_i32_1 = arith.constant 0 : i32
    return %arg0, %c0_i32, %c0_i32_0 : i32, i32, i32
  }
  func.func @transform_3(%arg0: i32) -> (i32, i32, i32) {
    %c0_i32 = arith.constant 0 : i32
    %c0_i32_0 = arith.constant 0 : i32
    %c0_i32_1 = arith.constant 0 : i32
    return %arg0, %c0_i32, %c0_i32_0 : i32, i32, i32
  }
  func.func @transform_4(%arg0: i32) -> (i32, i32, i32) {
    %c0_i32 = arith.constant 0 : i32
    %c0_i32_0 = arith.constant 0 : i32
    %c0_i32_1 = arith.constant 0 : i32
    return %arg0, %c0_i32, %c0_i32_0 : i32, i32, i32
  }
}

module attributes {stable_mosaic.version = 11 : i64} {
  func.func @_out_res_ln_q_kernel(%arg0: i32, %arg1: memref<16x32xbf16, #tpu.memory_space<vmem>>, %arg2: memref<32x32xbf16, #tpu.memory_space<vmem>>, %arg3: memref<1x32xf32, #tpu.memory_space<vmem>>, %arg4: memref<16x32xf32, #tpu.memory_space<vmem>>, %arg5: memref<1x32xf32, #tpu.memory_space<vmem>>, %arg6: memref<1x32xf32, #tpu.memory_space<vmem>>, %arg7: memref<32x32xbf16, #tpu.memory_space<vmem>>, %arg8: memref<1x32xf32, #tpu.memory_space<vmem>>, %arg9: memref<16x32xf32, #tpu.memory_space<vmem>>, %arg10: memref<16x32xbf16, #tpu.memory_space<vmem>>) attributes {dimension_semantics = [#tpu.dimension_semantics<parallel>], iteration_bounds = array<i64: 1>, scalar_prefetch = 0 : i64, scratch_operands = 0 : i64, tpu.core_type = #tpu.core_type<tc>, window_params = [{transform_indices = @transform_0, window_bounds = array<i64: 16, 32>}, {pipeline_mode = #tpu.pipeline_mode<synchronous>, transform_indices = @transform_1, window_bounds = array<i64: 32, 32>}, {pipeline_mode = #tpu.pipeline_mode<synchronous>, transform_indices = @transform_2, window_bounds = array<i64: 1, 32>}, {transform_indices = @transform_3, window_bounds = array<i64: 16, 32>}, {pipeline_mode = #tpu.pipeline_mode<synchronous>, transform_indices = @transform_4, window_bounds = array<i64: 1, 32>}, {pipeline_mode = #tpu.pipeline_mode<synchronous>, transform_indices = @transform_5, window_bounds = array<i64: 1, 32>}, {pipeline_mode = #tpu.pipeline_mode<synchronous>, transform_indices = @transform_6, window_bounds = array<i64: 32, 32>}, {pipeline_mode = #tpu.pipeline_mode<synchronous>, transform_indices = @transform_7, window_bounds = array<i64: 1, 32>}, {transform_indices = @transform_8, window_bounds = array<i64: 16, 32>}, {transform_indices = @transform_9, window_bounds = array<i64: 16, 32>}]} {
    %c0 = arith.constant 0 : index
    %c0_0 = arith.constant 0 : index
    %0 = vector.load %arg1[%c0, %c0_0] : memref<16x32xbf16, #tpu.memory_space<vmem>>, vector<16x32xbf16>
    %c0_1 = arith.constant 0 : index
    %c0_2 = arith.constant 0 : index
    %1 = vector.load %arg2[%c0_1, %c0_2] : memref<32x32xbf16, #tpu.memory_space<vmem>>, vector<32x32xbf16>
    %cst = arith.constant dense<0.000000e+00> : vector<16x32xf32>
    %2 = tpu.matmul %0, %1, %cst {dimension_numbers = #tpu.dot_dimension_numbers<[1], [0], [0], [1], [0, 0, 1, 1], [], []>} : vector<16x32xbf16>, vector<32x32xbf16>, vector<16x32xf32> -> vector<16x32xf32>
    %c0_3 = arith.constant 0 : index
    %c0_4 = arith.constant 0 : index
    %3 = vector.load %arg3[%c0_3, %c0_4] : memref<1x32xf32, #tpu.memory_space<vmem>>, vector<1x32xf32>
    %4 = vector.broadcast %3 : vector<1x32xf32> to vector<16x32xf32>
    %5 = arith.addf %2, %4 : vector<16x32xf32>
    %c0_5 = arith.constant 0 : index
    %c0_6 = arith.constant 0 : index
    %6 = vector.load %arg4[%c0_5, %c0_6] : memref<16x32xf32, #tpu.memory_space<vmem>>, vector<16x32xf32>
    %7 = arith.addf %5, %6 : vector<16x32xf32>
    %c0_7 = arith.constant 0 : index
    %c0_8 = arith.constant 0 : index
    %8 = vector.load %arg9[%c0_7, %c0_8] : memref<16x32xf32, #tpu.memory_space<vmem>>, vector<16x32xf32>
    tpu.vector_store %arg9[%c0_7, %c0_8], %7 {strides = array<i32>} : memref<16x32xf32, #tpu.memory_space<vmem>>, vector<16x32xf32>,
    %c0_9 = arith.constant 0 : index
    %c0_10 = arith.constant 0 : index
    %9 = vector.load %arg5[%c0_9, %c0_10] : memref<1x32xf32, #tpu.memory_space<vmem>>, vector<1x32xf32>
    %c0_11 = arith.constant 0 : index
    %c0_12 = arith.constant 0 : index
    %10 = vector.load %arg6[%c0_11, %c0_12] : memref<1x32xf32, #tpu.memory_space<vmem>>, vector<1x32xf32>
    %cst_13 = arith.constant dense<0.000000e+00> : vector<16xf32>
    %11 = vector.multi_reduction <add>, %7, %cst_13 [1] : vector<16x32xf32> to vector<16xf32>
    %12 = vector.shape_cast %11 : vector<16xf32> to vector<16x1xf32>
    %cst_14 = arith.constant 3.200000e+01 : f32
    %13 = vector.broadcast %cst_14 : f32 to vector<16x1xf32>
    %14 = arith.divf %12, %13 : vector<16x1xf32>
    %15 = vector.broadcast %14 : vector<16x1xf32> to vector<16x32xf32>
    %16 = arith.subf %7, %15 : vector<16x32xf32>
    %17 = arith.mulf %16, %16 : vector<16x32xf32>
    %cst_15 = arith.constant dense<0.000000e+00> : vector<16xf32>
    %18 = vector.multi_reduction <add>, %17, %cst_15 [1] : vector<16x32xf32> to vector<16xf32>
    %19 = vector.shape_cast %18 : vector<16xf32> to vector<16x1xf32>
    %cst_16 = arith.constant 3.200000e+01 : f32
    %20 = vector.broadcast %cst_16 : f32 to vector<16x1xf32>
    %21 = arith.divf %19, %20 : vector<16x1xf32>
    %22 = vector.broadcast %14 : vector<16x1xf32> to vector<16x32xf32>
    %23 = arith.subf %7, %22 : vector<16x32xf32>
    %cst_17 = arith.constant 9.99999997E-7 : f32
    %24 = vector.broadcast %cst_17 : f32 to vector<16x1xf32>
    %25 = arith.addf %21, %24 : vector<16x1xf32>
    %26 = math.rsqrt %25 : vector<16x1xf32>
    %27 = vector.broadcast %26 : vector<16x1xf32> to vector<16x32xf32>
    %28 = arith.mulf %23, %27 : vector<16x32xf32>
    %29 = vector.broadcast %9 : vector<1x32xf32> to vector<16x32xf32>
    %30 = arith.mulf %28, %29 : vector<16x32xf32>
    %31 = vector.broadcast %10 : vector<1x32xf32> to vector<16x32xf32>
    %32 = arith.addf %30, %31 : vector<16x32xf32>
    %33 = arith.truncf %32 : vector<16x32xf32> to vector<16x32xbf16>
    %c0_18 = arith.constant 0 : index
    %c0_19 = arith.constant 0 : index
    %34 = vector.load %arg7[%c0_18, %c0_19] : memref<32x32xbf16, #tpu.memory_space<vmem>>, vector<32x32xbf16>
    %cst_20 = arith.constant dense<0.000000e+00> : vector<16x32xf32>
    %35 = tpu.matmul %33, %34, %cst_20 {dimension_numbers = #tpu.dot_dimension_numbers<[1], [0], [0], [1], [0, 0, 1, 1], [], []>} : vector<16x32xbf16>, vector<32x32xbf16>, vector<16x32xf32> -> vector<16x32xf32>
    %c0_21 = arith.constant 0 : index
    %c0_22 = arith.constant 0 : index
    %36 = vector.load %arg8[%c0_21, %c0_22] : memref<1x32xf32, #tpu.memory_space<vmem>>, vector<1x32xf32>
    %37 = vector.broadcast %36 : vector<1x32xf32> to vector<16x32xf32>
    %38 = arith.addf %35, %37 : vector<16x32xf32>
    %39 = arith.truncf %38 : vector<16x32xf32> to vector<16x32xbf16>
    %c0_23 = arith.constant 0 : index
    %c0_24 = arith.constant 0 : index
    %40 = vector.load %arg10[%c0_23, %c0_24] : memref<16x32xbf16, #tpu.memory_space<vmem>>, vector<16x32xbf16>
    tpu.vector_store %arg10[%c0_23, %c0_24], %39 {strides = array<i32>} : memref<16x32xbf16, #tpu.memory_space<vmem>>, vector<16x32xbf16>,
    return
  }
  func.func @transform_0(%arg0: i32) -> (i32, i32) {
    %c0_i32 = arith.constant 0 : i32
    %c0_i32_0 = arith.constant 0 : i32
    return %arg0, %c0_i32 : i32, i32
  }
  func.func @transform_1(%arg0: i32) -> (i32, i32) {
    %c0_i32 = arith.constant 0 : i32
    %c0_i32_0 = arith.constant 0 : i32
    %c0_i32_1 = arith.constant 0 : i32
    return %c0_i32, %c0_i32_0 : i32, i32
  }
  func.func @transform_2(%arg0: i32) -> (i32, i32) {
    %c0_i32 = arith.constant 0 : i32
    %c0_i32_0 = arith.constant 0 : i32
    %c0_i32_1 = arith.constant 0 : i32
    return %c0_i32, %c0_i32_0 : i32, i32
  }
  func.func @transform_3(%arg0: i32) -> (i32, i32) {
    %c0_i32 = arith.constant 0 : i32
    %c0_i32_0 = arith.constant 0 : i32
    return %arg0, %c0_i32 : i32, i32
  }
  func.func @transform_4(%arg0: i32) -> (i32, i32) {
    %c0_i32 = arith.constant 0 : i32
    %c0_i32_0 = arith.constant 0 : i32
    %c0_i32_1 = arith.constant 0 : i32
    return %c0_i32, %c0_i32_0 : i32, i32
  }
  func.func @transform_5(%arg0: i32) -> (i32, i32) {
    %c0_i32 = arith.constant 0 : i32
    %c0_i32_0 = arith.constant 0 : i32
    %c0_i32_1 = arith.constant 0 : i32
    return %c0_i32, %c0_i32_0 : i32, i32
  }
  func.func @transform_6(%arg0: i32) -> (i32, i32) {
    %c0_i32 = arith.constant 0 : i32
    %c0_i32_0 = arith.constant 0 : i32
    %c0_i32_1 = arith.constant 0 : i32
    return %c0_i32, %c0_i32_0 : i32, i32
  }
  func.func @transform_7(%arg0: i32) -> (i32, i32) {
    %c0_i32 = arith.constant 0 : i32
    %c0_i32_0 = arith.constant 0 : i32
    %c0_i32_1 = arith.constant 0 : i32
    return %c0_i32, %c0_i32_0 : i32, i32
  }
  func.func @transform_8(%arg0: i32) -> (i32, i32) {
    %c0_i32 = arith.constant 0 : i32
    %c0_i32_0 = arith.constant 0 : i32
    return %arg0, %c0_i32 : i32, i32
  }
  func.func @transform_9(%arg0: i32) -> (i32, i32) {
    %c0_i32 = arith.constant 0 : i32
    %c0_i32_0 = arith.constant 0 : i32
    return %arg0, %c0_i32 : i32, i32
  }
}

module attributes {stable_mosaic.version = 11 : i64} {
  func.func @_attn_kernel(%arg0: i32, %arg1: memref<1x8x32xbf16, #tpu.memory_space<vmem>>, %arg2: memref<1x8x32xbf16, #tpu.memory_space<vmem>>, %arg3: memref<1x8x32xbf16, #tpu.memory_space<vmem>>, %arg4: memref<1x8x8xi32, #tpu.memory_space<vmem>>, %arg5: memref<1x8x32xbf16, #tpu.memory_space<vmem>>, %arg6: memref<1x8x8xf32, #tpu.memory_space<vmem>>) attributes {dimension_semantics = [#tpu.dimension_semantics<parallel>], iteration_bounds = array<i64: 2>, scalar_prefetch = 0 : i64, scratch_operands = 0 : i64, tpu.core_type = #tpu.core_type<tc>, window_params = [{transform_indices = @transform_0, window_bounds = array<i64: 1, 8, 32>}, {transform_indices = @transform_1, window_bounds = array<i64: 1, 8, 32>}, {transform_indices = @transform_2, window_bounds = array<i64: 1, 8, 32>}, {transform_indices = @transform_3, window_bounds = array<i64: 1, 8, 8>}, {transform_indices = @transform_4, window_bounds = array<i64: 1, 8, 32>}, {transform_indices = @transform_5, window_bounds = array<i64: 1, 8, 8>}]} {
    %c0 = arith.constant 0 : index
    %c0_0 = arith.constant 0 : index
    %c0_1 = arith.constant 0 : index
    %0 = vector.load %arg1[%c0, %c0_0, %c0_1] : memref<1x8x32xbf16, #tpu.memory_space<vmem>>, vector<1x8x32xbf16>
    %1 = vector.shape_cast %0 : vector<1x8x32xbf16> to vector<8x32xbf16>
    %c0_2 = arith.constant 0 : index
    %c0_3 = arith.constant 0 : index
    %c0_4 = arith.constant 0 : index
    %2 = vector.load %arg2[%c0_2, %c0_3, %c0_4] : memref<1x8x32xbf16, #tpu.memory_space<vmem>>, vector<1x8x32xbf16>
    %3 = vector.shape_cast %2 : vector<1x8x32xbf16> to vector<8x32xbf16>
    %c0_5 = arith.constant 0 : index
    %c0_6 = arith.constant 0 : index
    %c0_7 = arith.constant 0 : index
    %4 = vector.load %arg3[%c0_5, %c0_6, %c0_7] : memref<1x8x32xbf16, #tpu.memory_space<vmem>>, vector<1x8x32xbf16>
    %5 = vector.shape_cast %4 : vector<1x8x32xbf16> to vector<8x32xbf16>
    %c0_8 = arith.constant 0 : index
    %c0_9 = arith.constant 0 : index
    %c0_10 = arith.constant 0 : index
    %6 = vector.load %arg4[%c0_8, %c0_9, %c0_10] : memref<1x8x8xi32, #tpu.memory_space<vmem>>, vector<1x8x8xi32>
    %7 = vector.shape_cast %6 : vector<1x8x8xi32> to vector<8x8xi32>
    %8 = vector.extract_strided_slice %1 {offsets = [0, 0], sizes = [8, 8], strides = [1, 1]} : vector<8x32xbf16> to vector<8x8xbf16>
    %9 = vector.extract_strided_slice %3 {offsets = [0, 0], sizes = [8, 8], strides = [1, 1]} : vector<8x32xbf16> to vector<8x8xbf16>
    %10 = vector.extract_strided_slice %5 {offsets = [0, 0], sizes = [8, 8], strides = [1, 1]} : vector<8x32xbf16> to vector<8x8xbf16>
    %cst = arith.constant dense<0.000000e+00> : vector<8x8xf32>
    %11 = tpu.matmul %8, %9, %cst {dimension_numbers = #tpu.dot_dimension_numbers<[1], [1], [0], [0], [0, 0, 1, 0], [], []>} : vector<8x8xbf16>, vector<8x8xbf16>, vector<8x8xf32> -> vector<8x8xf32>
    %cst_11 = arith.constant 0.353553385 : f32
    %12 = vector.broadcast %cst_11 : f32 to vector<8x8xf32>
    %13 = arith.mulf %11, %12 : vector<8x8xf32>
    %c0_i32 = arith.constant 0 : i32
    %14 = vector.broadcast %c0_i32 : i32 to vector<8x8xi32>
    %15 = arith.cmpi sgt, %7, %14 : vector<8x8xi32>
    %cst_12 = arith.constant -9.99999984E+17 : f32
    %16 = vector.broadcast %cst_12 : f32 to vector<8x8xf32>
    %17 = arith.select %15, %16, %13 : vector<8x8xi1>, vector<8x8xf32>
    %cst_13 = arith.constant dense<0xFF800000> : vector<8xf32>
    %18 = vector.multi_reduction <maximumf>, %17, %cst_13 [1] : vector<8x8xf32> to vector<8xf32>
    %19 = vector.shape_cast %18 : vector<8xf32> to vector<8x1xf32>
    %20 = vector.broadcast %19 : vector<8x1xf32> to vector<8x8xf32>
    %21 = arith.subf %17, %20 : vector<8x8xf32>
    %22 = math.exp %21 : vector<8x8xf32>
    %cst_14 = arith.constant dense<0.000000e+00> : vector<8xf32>
    %23 = vector.multi_reduction <add>, %22, %cst_14 [1] : vector<8x8xf32> to vector<8xf32>
    %24 = vector.shape_cast %23 : vector<8xf32> to vector<8x1xf32>
    %25 = tpu.reciprocal %24 {approx = true} : vector<8x1xf32> -> vector<8x1xf32>
    %26 = vector.broadcast %25 : vector<8x1xf32> to vector<8x8xf32>
    %27 = arith.mulf %22, %26 : vector<8x8xf32>
    %c0_15 = arith.constant 0 : index
    %c0_16 = arith.constant 0 : index
    %c0_17 = arith.constant 0 : index
    %28 = vector.load %arg6[%c0_15, %c0_16, %c0_17] : memref<1x8x8xf32, #tpu.memory_space<vmem>>, vector<1x8x8xf32>
    %29 = vector.shape_cast %28 : vector<1x8x8xf32> to vector<8x8xf32>
    %30 = vector.shape_cast %27 : vector<8x8xf32> to vector<1x8x8xf32>
    tpu.vector_store %arg6[%c0_15, %c0_16, %c0_17], %30 {strides = array<i32>} : memref<1x8x8xf32, #tpu.memory_space<vmem>>, vector<1x8x8xf32>,
    %31 = arith.truncf %27 : vector<8x8xf32> to vector<8x8xbf16>
    %cst_18 = arith.constant dense<0.000000e+00> : vector<8x8xf32>
    %32 = tpu.matmul %31, %10, %cst_18 {dimension_numbers = #tpu.dot_dimension_numbers<[1], [0], [0], [1], [0, 0, 1, 1], [], []>} : vector<8x8xbf16>, vector<8x8xbf16>, vector<8x8xf32> -> vector<8x8xf32>
    %33 = vector.extract_strided_slice %1 {offsets = [0, 8], sizes = [8, 8], strides = [1, 1]} : vector<8x32xbf16> to vector<8x8xbf16>
    %34 = vector.extract_strided_slice %3 {offsets = [0, 8], sizes = [8, 8], strides = [1, 1]} : vector<8x32xbf16> to vector<8x8xbf16>
    %35 = vector.extract_strided_slice %5 {offsets = [0, 8], sizes = [8, 8], strides = [1, 1]} : vector<8x32xbf16> to vector<8x8xbf16>
    %cst_19 = arith.constant dense<0.000000e+00> : vector<8x8xf32>
    %36 = tpu.matmul %33, %34, %cst_19 {dimension_numbers = #tpu.dot_dimension_numbers<[1], [1], [0], [0], [0, 0, 1, 0], [], []>} : vector<8x8xbf16>, vector<8x8xbf16>, vector<8x8xf32> -> vector<8x8xf32>
    %cst_20 = arith.constant 0.353553385 : f32
    %37 = vector.broadcast %cst_20 : f32 to vector<8x8xf32>
    %38 = arith.mulf %36, %37 : vector<8x8xf32>
    %c0_i32_21 = arith.constant 0 : i32
    %39 = vector.broadcast %c0_i32_21 : i32 to vector<8x8xi32>
    %40 = arith.cmpi sgt, %7, %39 : vector<8x8xi32>
    %cst_22 = arith.constant -9.99999984E+17 : f32
    %41 = vector.broadcast %cst_22 : f32 to vector<8x8xf32>
    %42 = arith.select %40, %41, %38 : vector<8x8xi1>, vector<8x8xf32>
    %cst_23 = arith.constant dense<0xFF800000> : vector<8xf32>
    %43 = vector.multi_reduction <maximumf>, %42, %cst_23 [1] : vector<8x8xf32> to vector<8xf32>
    %44 = vector.shape_cast %43 : vector<8xf32> to vector<8x1xf32>
    %45 = vector.broadcast %44 : vector<8x1xf32> to vector<8x8xf32>
    %46 = arith.subf %42, %45 : vector<8x8xf32>
    %47 = math.exp %46 : vector<8x8xf32>
    %cst_24 = arith.constant dense<0.000000e+00> : vector<8xf32>
    %48 = vector.multi_reduction <add>, %47, %cst_24 [1] : vector<8x8xf32> to vector<8xf32>
    %49 = vector.shape_cast %48 : vector<8xf32> to vector<8x1xf32>
    %50 = tpu.reciprocal %49 {approx = true} : vector<8x1xf32> -> vector<8x1xf32>
    %51 = vector.broadcast %50 : vector<8x1xf32> to vector<8x8xf32>
    %52 = arith.mulf %47, %51 : vector<8x8xf32>
    %53 = arith.truncf %52 : vector<8x8xf32> to vector<8x8xbf16>
    %cst_25 = arith.constant dense<0.000000e+00> : vector<8x8xf32>
    %54 = tpu.matmul %53, %35, %cst_25 {dimension_numbers = #tpu.dot_dimension_numbers<[1], [0], [0], [1], [0, 0, 1, 1], [], []>} : vector<8x8xbf16>, vector<8x8xbf16>, vector<8x8xf32> -> vector<8x8xf32>
    %55 = vector.extract_strided_slice %1 {offsets = [0, 16], sizes = [8, 8], strides = [1, 1]} : vector<8x32xbf16> to vector<8x8xbf16>
    %56 = vector.extract_strided_slice %3 {offsets = [0, 16], sizes = [8, 8], strides = [1, 1]} : vector<8x32xbf16> to vector<8x8xbf16>
    %57 = vector.extract_strided_slice %5 {offsets = [0, 16], sizes = [8, 8], strides = [1, 1]} : vector<8x32xbf16> to vector<8x8xbf16>
    %cst_26 = arith.constant dense<0.000000e+00> : vector<8x8xf32>
    %58 = tpu.matmul %55, %56, %cst_26 {dimension_numbers = #tpu.dot_dimension_numbers<[1], [1], [0], [0], [0, 0, 1, 0], [], []>} : vector<8x8xbf16>, vector<8x8xbf16>, vector<8x8xf32> -> vector<8x8xf32>
    %cst_27 = arith.constant 0.353553385 : f32
    %59 = vector.broadcast %cst_27 : f32 to vector<8x8xf32>
    %60 = arith.mulf %58, %59 : vector<8x8xf32>
    %c0_i32_28 = arith.constant 0 : i32
    %61 = vector.broadcast %c0_i32_28 : i32 to vector<8x8xi32>
    %62 = arith.cmpi sgt, %7, %61 : vector<8x8xi32>
    %cst_29 = arith.constant -9.99999984E+17 : f32
    %63 = vector.broadcast %cst_29 : f32 to vector<8x8xf32>
    %64 = arith.select %62, %63, %60 : vector<8x8xi1>, vector<8x8xf32>
    %cst_30 = arith.constant dense<0xFF800000> : vector<8xf32>
    %65 = vector.multi_reduction <maximumf>, %64, %cst_30 [1] : vector<8x8xf32> to vector<8xf32>
    %66 = vector.shape_cast %65 : vector<8xf32> to vector<8x1xf32>
    %67 = vector.broadcast %66 : vector<8x1xf32> to vector<8x8xf32>
    %68 = arith.subf %64, %67 : vector<8x8xf32>
    %69 = math.exp %68 : vector<8x8xf32>
    %cst_31 = arith.constant dense<0.000000e+00> : vector<8xf32>
    %70 = vector.multi_reduction <add>, %69, %cst_31 [1] : vector<8x8xf32> to vector<8xf32>
    %71 = vector.shape_cast %70 : vector<8xf32> to vector<8x1xf32>
    %72 = tpu.reciprocal %71 {approx = true} : vector<8x1xf32> -> vector<8x1xf32>
    %73 = vector.broadcast %72 : vector<8x1xf32> to vector<8x8xf32>
    %74 = arith.mulf %69, %73 : vector<8x8xf32>
    %75 = arith.truncf %74 : vector<8x8xf32> to vector<8x8xbf16>
    %cst_32 = arith.constant dense<0.000000e+00> : vector<8x8xf32>
    %76 = tpu.matmul %75, %57, %cst_32 {dimension_numbers = #tpu.dot_dimension_numbers<[1], [0], [0], [1], [0, 0, 1, 1], [], []>} : vector<8x8xbf16>, vector<8x8xbf16>, vector<8x8xf32> -> vector<8x8xf32>
    %77 = vector.extract_strided_slice %1 {offsets = [0, 24], sizes = [8, 8], strides = [1, 1]} : vector<8x32xbf16> to vector<8x8xbf16>
    %78 = vector.extract_strided_slice %3 {offsets = [0, 24], sizes = [8, 8], strides = [1, 1]} : vector<8x32xbf16> to vector<8x8xbf16>
    %79 = vector.extract_strided_slice %5 {offsets = [0, 24], sizes = [8, 8], strides = [1, 1]} : vector<8x32xbf16> to vector<8x8xbf16>
    %cst_33 = arith.constant dense<0.000000e+00> : vector<8x8xf32>
    %80 = tpu.matmul %77, %78, %cst_33 {dimension_numbers = #tpu.dot_dimension_numbers<[1], [1], [0], [0], [0, 0, 1, 0], [], []>} : vector<8x8xbf16>, vector<8x8xbf16>, vector<8x8xf32> -> vector<8x8xf32>
    %cst_34 = arith.constant 0.353553385 : f32
    %81 = vector.broadcast %cst_34 : f32 to vector<8x8xf32>
    %82 = arith.mulf %80, %81 : vector<8x8xf32>
    %c0_i32_35 = arith.constant 0 : i32
    %83 = vector.broadcast %c0_i32_35 : i32 to vector<8x8xi32>
    %84 = arith.cmpi sgt, %7, %83 : vector<8x8xi32>
    %cst_36 = arith.constant -9.99999984E+17 : f32
    %85 = vector.broadcast %cst_36 : f32 to vector<8x8xf32>
    %86 = arith.select %84, %85, %82 : vector<8x8xi1>, vector<8x8xf32>
    %cst_37 = arith.constant dense<0xFF800000> : vector<8xf32>
    %87 = vector.multi_reduction <maximumf>, %86, %cst_37 [1] : vector<8x8xf32> to vector<8xf32>
    %88 = vector.shape_cast %87 : vector<8xf32> to vector<8x1xf32>
    %89 = vector.broadcast %88 : vector<8x1xf32> to vector<8x8xf32>
    %90 = arith.subf %86, %89 : vector<8x8xf32>
    %91 = math.exp %90 : vector<8x8xf32>
    %cst_38 = arith.constant dense<0.000000e+00> : vector<8xf32>
    %92 = vector.multi_reduction <add>, %91, %cst_38 [1] : vector<8x8xf32> to vector<8xf32>
    %93 = vector.shape_cast %92 : vector<8xf32> to vector<8x1xf32>
    %94 = tpu.reciprocal %93 {approx = true} : vector<8x1xf32> -> vector<8x1xf32>
    %95 = vector.broadcast %94 : vector<8x1xf32> to vector<8x8xf32>
    %96 = arith.mulf %91, %95 : vector<8x8xf32>
    %97 = arith.truncf %96 : vector<8x8xf32> to vector<8x8xbf16>
    %cst_39 = arith.constant dense<0.000000e+00> : vector<8x8xf32>
    %98 = tpu.matmul %97, %79, %cst_39 {dimension_numbers = #tpu.dot_dimension_numbers<[1], [0], [0], [1], [0, 0, 1, 1], [], []>} : vector<8x8xbf16>, vector<8x8xbf16>, vector<8x8xf32> -> vector<8x8xf32>
    %99 = tpu.concatenate %32, %54, %76, %98 in 1 : vector<8x8xf32>, vector<8x8xf32>, vector<8x8xf32>, vector<8x8xf32> -> vector<8x32xf32>
    %100 = arith.truncf %99 : vector<8x32xf32> to vector<8x32xbf16>
    %c0_40 = arith.constant 0 : index
    %c0_41 = arith.constant 0 : index
    %c0_42 = arith.constant 0 : index
    %101 = vector.load %arg5[%c0_40, %c0_41, %c0_42] : memref<1x8x32xbf16, #tpu.memory_space<vmem>>, vector<1x8x32xbf16>
    %102 = vector.shape_cast %101 : vector<1x8x32xbf16> to vector<8x32xbf16>
    %103 = vector.shape_cast %100 : vector<8x32xbf16> to vector<1x8x32xbf16>
    tpu.vector_store %arg5[%c0_40, %c0_41, %c0_42], %103 {strides = array<i32>} : memref<1x8x32xbf16, #tpu.memory_space<vmem>>, vector<1x8x32xbf16>,
    return
  }
  func.func @transform_0(%arg0: i32) -> (i32, i32, i32) {
    %c0_i32 = arith.constant 0 : i32
    %c0_i32_0 = arith.constant 0 : i32
    %c0_i32_1 = arith.constant 0 : i32
    return %arg0, %c0_i32, %c0_i32_0 : i32, i32, i32
  }
  func.func @transform_1(%arg0: i32) -> (i32, i32, i32) {
    %c0_i32 = arith.constant 0 : i32
    %c0_i32_0 = arith.constant 0 : i32
    %c0_i32_1 = arith.constant 0 : i32
    return %arg0, %c0_i32, %c0_i32_0 : i32, i32, i32
  }
  func.func @transform_2(%arg0: i32) -> (i32, i32, i32) {
    %c0_i32 = arith.constant 0 : i32
    %c0_i32_0 = arith.constant 0 : i32
    %c0_i32_1 = arith.constant 0 : i32
    return %arg0, %c0_i32, %c0_i32_0 : i32, i32, i32
  }
  func.func @transform_3(%arg0: i32) -> (i32, i32, i32) {
    %c0_i32 = arith.constant 0 : i32
    %c0_i32_0 = arith.constant 0 : i32
    %c0_i32_1 = arith.constant 0 : i32
    return %arg0, %c0_i32, %c0_i32_0 : i32, i32, i32
  }
  func.func @transform_4(%arg0: i32) -> (i32, i32, i32) {
    %c0_i32 = arith.constant 0 : i32
    %c0_i32_0 = arith.constant 0 : i32
    %c0_i32_1 = arith.constant 0 : i32
    return %arg0, %c0_i32, %c0_i32_0 : i32, i32, i32
  }
  func.func @transform_5(%arg0: i32) -> (i32, i32, i32) {
    %c0_i32 = arith.constant 0 : i32
    %c0_i32_0 = arith.constant 0 : i32
    %c0_i32_1 = arith.constant 0 : i32
    return %arg0, %c0_i32, %c0_i32_0 : i32, i32, i32
  }
}

module attributes {stable_mosaic.version = 11 : i64} {
  func.func @_out_res_ffn_kernel(%arg0: i32, %arg1: memref<16x32xbf16, #tpu.memory_space<vmem>>, %arg2: memref<32x32xbf16, #tpu.memory_space<vmem>>, %arg3: memref<1x32xf32, #tpu.memory_space<vmem>>, %arg4: memref<16x32xf32, #tpu.memory_space<vmem>>, %arg5: memref<1x32xf32, #tpu.memory_space<vmem>>, %arg6: memref<1x32xf32, #tpu.memory_space<vmem>>, %arg7: memref<32x64xbf16, #tpu.memory_space<vmem>>, %arg8: memref<1x64xf32, #tpu.memory_space<vmem>>, %arg9: memref<64x32xbf16, #tpu.memory_space<vmem>>, %arg10: memref<1x32xf32, #tpu.memory_space<vmem>>, %arg11: memref<16x32xf32, #tpu.memory_space<vmem>>) attributes {dimension_semantics = [#tpu.dimension_semantics<parallel>], iteration_bounds = array<i64: 1>, scalar_prefetch = 0 : i64, scratch_operands = 0 : i64, tpu.core_type = #tpu.core_type<tc>, window_params = [{transform_indices = @transform_0, window_bounds = array<i64: 16, 32>}, {pipeline_mode = #tpu.pipeline_mode<synchronous>, transform_indices = @transform_1, window_bounds = array<i64: 32, 32>}, {pipeline_mode = #tpu.pipeline_mode<synchronous>, transform_indices = @transform_2, window_bounds = array<i64: 1, 32>}, {transform_indices = @transform_3, window_bounds = array<i64: 16, 32>}, {pipeline_mode = #tpu.pipeline_mode<synchronous>, transform_indices = @transform_4, window_bounds = array<i64: 1, 32>}, {pipeline_mode = #tpu.pipeline_mode<synchronous>, transform_indices = @transform_5, window_bounds = array<i64: 1, 32>}, {pipeline_mode = #tpu.pipeline_mode<synchronous>, transform_indices = @transform_6, window_bounds = array<i64: 32, 64>}, {pipeline_mode = #tpu.pipeline_mode<synchronous>, transform_indices = @transform_7, window_bounds = array<i64: 1, 64>}, {pipeline_mode = #tpu.pipeline_mode<synchronous>, transform_indices = @transform_8, window_bounds = array<i64: 64, 32>}, {pipeline_mode = #tpu.pipeline_mode<synchronous>, transform_indices = @transform_9, window_bounds = array<i64: 1, 32>}, {transform_indices = @transform_10, window_bounds = array<i64: 16, 32>}]} {
    %c0 = arith.constant 0 : index
    %c0_0 = arith.constant 0 : index
    %0 = vector.load %arg1[%c0, %c0_0] : memref<16x32xbf16, #tpu.memory_space<vmem>>, vector<16x32xbf16>
    %c0_1 = arith.constant 0 : index
    %c0_2 = arith.constant 0 : index
    %1 = vector.load %arg2[%c0_1, %c0_2] : memref<32x32xbf16, #tpu.memory_space<vmem>>, vector<32x32xbf16>
    %cst = arith.constant dense<0.000000e+00> : vector<16x32xf32>
    %2 = tpu.matmul %0, %1, %cst {dimension_numbers = #tpu.dot_dimension_numbers<[1], [0], [0], [1], [0, 0, 1, 1], [], []>} : vector<16x32xbf16>, vector<32x32xbf16>, vector<16x32xf32> -> vector<16x32xf32>
    %c0_3 = arith.constant 0 : index
    %c0_4 = arith.constant 0 : index
    %3 = vector.load %arg3[%c0_3, %c0_4] : memref<1x32xf32, #tpu.memory_space<vmem>>, vector<1x32xf32>
    %4 = vector.broadcast %3 : vector<1x32xf32> to vector<16x32xf32>
    %5 = arith.addf %2, %4 : vector<16x32xf32>
    %c0_5 = arith.constant 0 : index
    %c0_6 = arith.constant 0 : index
    %6 = vector.load %arg4[%c0_5, %c0_6] : memref<16x32xf32, #tpu.memory_space<vmem>>, vector<16x32xf32>
    %7 = arith.addf %5, %6 : vector<16x32xf32>
    %c0_7 = arith.constant 0 : index
    %c0_8 = arith.constant 0 : index
    %8 = vector.load %arg5[%c0_7, %c0_8] : memref<1x32xf32, #tpu.memory_space<vmem>>, vector<1x32xf32>
    %c0_9 = arith.constant 0 : index
    %c0_10 = arith.constant 0 : index
    %9 = vector.load %arg6[%c0_9, %c0_10] : memref<1x32xf32, #tpu.memory_space<vmem>>, vector<1x32xf32>
    %cst_11 = arith.constant dense<0.000000e+00> : vector<16xf32>
    %10 = vector.multi_reduction <add>, %7, %cst_11 [1] : vector<16x32xf32> to vector<16xf32>
    %11 = vector.shape_cast %10 : vector<16xf32> to vector<16x1xf32>
    %cst_12 = arith.constant 3.200000e+01 : f32
    %12 = vector.broadcast %cst_12 : f32 to vector<16x1xf32>
    %13 = arith.divf %11, %12 : vector<16x1xf32>
    %14 = vector.broadcast %13 : vector<16x1xf32> to vector<16x32xf32>
    %15 = arith.subf %7, %14 : vector<16x32xf32>
    %16 = arith.mulf %15, %15 : vector<16x32xf32>
    %cst_13 = arith.constant dense<0.000000e+00> : vector<16xf32>
    %17 = vector.multi_reduction <add>, %16, %cst_13 [1] : vector<16x32xf32> to vector<16xf32>
    %18 = vector.shape_cast %17 : vector<16xf32> to vector<16x1xf32>
    %cst_14 = arith.constant 3.200000e+01 : f32
    %19 = vector.broadcast %cst_14 : f32 to vector<16x1xf32>
    %20 = arith.divf %18, %19 : vector<16x1xf32>
    %21 = vector.broadcast %13 : vector<16x1xf32> to vector<16x32xf32>
    %22 = arith.subf %7, %21 : vector<16x32xf32>
    %cst_15 = arith.constant 9.99999997E-7 : f32
    %23 = vector.broadcast %cst_15 : f32 to vector<16x1xf32>
    %24 = arith.addf %20, %23 : vector<16x1xf32>
    %25 = math.rsqrt %24 : vector<16x1xf32>
    %26 = vector.broadcast %25 : vector<16x1xf32> to vector<16x32xf32>
    %27 = arith.mulf %22, %26 : vector<16x32xf32>
    %28 = vector.broadcast %8 : vector<1x32xf32> to vector<16x32xf32>
    %29 = arith.mulf %27, %28 : vector<16x32xf32>
    %30 = vector.broadcast %9 : vector<1x32xf32> to vector<16x32xf32>
    %31 = arith.addf %29, %30 : vector<16x32xf32>
    %32 = arith.truncf %31 : vector<16x32xf32> to vector<16x32xbf16>
    %c0_16 = arith.constant 0 : index
    %c0_17 = arith.constant 0 : index
    %33 = vector.load %arg7[%c0_16, %c0_17] : memref<32x64xbf16, #tpu.memory_space<vmem>>, vector<32x64xbf16>
    %cst_18 = arith.constant dense<0.000000e+00> : vector<16x64xf32>
    %34 = tpu.matmul %32, %33, %cst_18 {dimension_numbers = #tpu.dot_dimension_numbers<[1], [0], [0], [1], [0, 0, 1, 1], [], []>} : vector<16x32xbf16>, vector<32x64xbf16>, vector<16x64xf32> -> vector<16x64xf32>
    %c0_19 = arith.constant 0 : index
    %c0_20 = arith.constant 0 : index
    %35 = vector.load %arg8[%c0_19, %c0_20] : memref<1x64xf32, #tpu.memory_space<vmem>>, vector<1x64xf32>
    %36 = vector.broadcast %35 : vector<1x64xf32> to vector<16x64xf32>
    %37 = arith.addf %34, %36 : vector<16x64xf32>
    %cst_21 = arith.constant 0.000000e+00 : f32
    %38 = vector.broadcast %cst_21 : f32 to vector<16x64xf32>
    %39 = arith.maximumf %37, %38 : vector<16x64xf32>
    %40 = arith.truncf %39 : vector<16x64xf32> to vector<16x64xbf16>
    %c0_22 = arith.constant 0 : index
    %c0_23 = arith.constant 0 : index
    %41 = vector.load %arg9[%c0_22, %c0_23] : memref<64x32xbf16, #tpu.memory_space<vmem>>, vector<64x32xbf16>
    %cst_24 = arith.constant dense<0.000000e+00> : vector<16x32xf32>
    %42 = tpu.matmul %40, %41, %cst_24 {dimension_numbers = #tpu.dot_dimension_numbers<[1], [0], [0], [1], [0, 0, 1, 1], [], []>} : vector<16x64xbf16>, vector<64x32xbf16>, vector<16x32xf32> -> vector<16x32xf32>
    %c0_25 = arith.constant 0 : index
    %c0_26 = arith.constant 0 : index
    %43 = vector.load %arg10[%c0_25, %c0_26] : memref<1x32xf32, #tpu.memory_space<vmem>>, vector<1x32xf32>
    %44 = vector.broadcast %43 : vector<1x32xf32> to vector<16x32xf32>
    %45 = arith.addf %42, %44 : vector<16x32xf32>
    %46 = arith.addf %45, %7 : vector<16x32xf32>
    %c0_27 = arith.constant 0 : index
    %c0_28 = arith.constant 0 : index
    %47 = vector.load %arg11[%c0_27, %c0_28] : memref<16x32xf32, #tpu.memory_space<vmem>>, vector<16x32xf32>
    tpu.vector_store %arg11[%c0_27, %c0_28], %46 {strides = array<i32>} : memref<16x32xf32, #tpu.memory_space<vmem>>, vector<16x32xf32>,
    return
  }
  func.func @transform_0(%arg0: i32) -> (i32, i32) {
    %c0_i32 = arith.constant 0 : i32
    %c0_i32_0 = arith.constant 0 : i32
    return %arg0, %c0_i32 : i32, i32
  }
  func.func @transform_1(%arg0: i32) -> (i32, i32) {
    %c0_i32 = arith.constant 0 : i32
    %c0_i32_0 = arith.constant 0 : i32
    %c0_i32_1 = arith.constant 0 : i32
    return %c0_i32, %c0_i32_0 : i32, i32
  }
  func.func @transform_2(%arg0: i32) -> (i32, i32) {
    %c0_i32 = arith.constant 0 : i32
    %c0_i32_0 = arith.constant 0 : i32
    %c0_i32_1 = arith.constant 0 : i32
    return %c0_i32, %c0_i32_0 : i32, i32
  }
  func.func @transform_3(%arg0: i32) -> (i32, i32) {
    %c0_i32 = arith.constant 0 : i32
    %c0_i32_0 = arith.constant 0 : i32
    return %arg0, %c0_i32 : i32, i32
  }
  func.func @transform_4(%arg0: i32) -> (i32, i32) {
    %c0_i32 = arith.constant 0 : i32
    %c0_i32_0 = arith.constant 0 : i32
    %c0_i32_1 = arith.constant 0 : i32
    return %c0_i32, %c0_i32_0 : i32, i32
  }
  func.func @transform_5(%arg0: i32) -> (i32, i32) {
    %c0_i32 = arith.constant 0 : i32
    %c0_i32_0 = arith.constant 0 : i32
    %c0_i32_1 = arith.constant 0 : i32
    return %c0_i32, %c0_i32_0 : i32, i32
  }
  func.func @transform_6(%arg0: i32) -> (i32, i32) {
    %c0_i32 = arith.constant 0 : i32
    %c0_i32_0 = arith.constant 0 : i32
    %c0_i32_1 = arith.constant 0 : i32
    return %c0_i32, %c0_i32_0 : i32, i32
  }
  func.func @transform_7(%arg0: i32) -> (i32, i32) {
    %c0_i32 = arith.constant 0 : i32
    %c0_i32_0 = arith.constant 0 : i32
    %c0_i32_1 = arith.constant 0 : i32
    return %c0_i32, %c0_i32_0 : i32, i32
  }
  func.func @transform_8(%arg0: i32) -> (i32, i32) {
    %c0_i32 = arith.constant 0 : i32
    %c0_i32_0 = arith.constant 0 : i32
    %c0_i32_1 = arith.constant 0 : i32
    return %c0_i32, %c0_i32_0 : i32, i32
  }
  func.func @transform_9(%arg0: i32) -> (i32, i32) {
    %c0_i32 = arith.constant 0 : i32
    %c0_i32_0 = arith.constant 0 : i32
    %c0_i32_1 = arith.constant 0 : i32
    return %c0_i32, %c0_i32_0 : i32, i32
  }
  func.func @transform_10(%arg0: i32) -> (i32, i32) {
    %c0_i32 = arith.constant 0 : i32
    %c0_i32_0 = arith.constant 0 : i32
    return %arg0, %c0_i32 : i32, i32
  }
}

</mosaic_0001>

<llo_original>
// kernel: transformer_decoder_layer.12
$region0: #{transformer_decoder_layer.12}
  #allocation0 [shape = 'u32[]', space=smem, size = 0x4, offset = 0x4, fixed_abs, tag = 'smem constant byte address 0x4 - core index']
  #allocation1 [shape = 'u32[144,128]{1,0:T(1,128)}', space=vmem, size = 0x12000, scoped, tag = 'internal scratch']
  %s0 = inlined_call_operand.vmem [shape: f32[16,32], index: 0, kind: input, shape index: {}]
  %s1 = inlined_call_operand.vmem [shape: bf16[32,64], index: 1, kind: input, shape index: {}]
  %s2 = inlined_call_operand.vmem [shape: f32[1,64], index: 2, kind: input, shape index: {}]
  %s3 = inlined_call_operand.vmem [shape: bf16[16,32], index: 3, kind: output, shape index: {0}]
  %s4 = inlined_call_operand.vmem [shape: bf16[16,32], index: 4, kind: output, shape index: {1}]
  %5 = xla_tuple %s3, %s4
  %s6 = sld [smem:[#allocation0]]
  $region30: #{transformer_decoder_layer.12} parent=0
    _
  %s8 = ssub.s32 1, %s6
  %s9 = scalar_select 0, %s8, %s6
  // Predicated region
  $region2: #{transformer_decoder_layer.12} parent=0 // pred_check
    _
  $region3: #{transformer_decoder_layer.12} parent=0 // pred_check_branch
    %11 = sbr.rel (0) target = $region5
  $region4: #{transformer_decoder_layer.12} parent=0 // pred_region
    _
  $region5: #{transformer_decoder_layer.12} parent=0 // pred_fallthru
    _
  // Predicated region
  $region6: #{transformer_decoder_layer.12} parent=0 // pred_check
    _
  $region7: #{transformer_decoder_layer.12} parent=0 // pred_check_branch
    %13 = sbr.rel (0) target = $region9
  $region8: #{transformer_decoder_layer.12} parent=0 // pred_region
    _
  $region9: #{transformer_decoder_layer.12} parent=0 // pred_fallthru
    _
  // Predicated region
  $region10: #{transformer_decoder_layer.12} parent=0 // pred_check
    _
  $region11: #{transformer_decoder_layer.12} parent=0 // pred_check_branch
    %15 = sbr.rel (0) target = $region13
  $region12: #{transformer_decoder_layer.12} parent=0 // pred_region
    _
  $region13: #{transformer_decoder_layer.12} parent=0 // pred_fallthru
    _
  %v17 = vld [vmem:[%s0] sm:$0xff]
  %v18 = vld [vmem:[%s0 + $0x8] sm:$0xff]
  %v19 = vpack.c.bf16 %v18, %v17
  %v20 = vld [vmem:[%s1] sm:$0xf]
  %v21 = vld [vmem:[%s1 + $0x4] sm:$0xf]
  %v22 = vld [vmem:[%s1 + $0x8] sm:$0xf]
  %v23 = vld [vmem:[%s1 + $0xc] sm:$0xf]
  %v24 = vld [vmem:[%s2] sm:$0x1]
  %v26 = vlaneseq
  %v27 = vshrl.u32 %v26, 7
  %v28 = vsub.s32 0, %v27
  %v29 = vrot.slane %v24, %v28
  %v35 = vunpack.c.l.b16 %v20
  %v36 = vunpack.c.l.b16 %v21
  %v37 = vunpack.c.l.b16 %v22
  %v38 = vunpack.c.l.b16 %v23
  %v39 = vpack.c.b16 %v36, %v35
  %v40 = vpack.c.b16 %v38, %v37
  %vm43 = vcmask 261120
  %v45 = vsel %vm43, %v19, 0
  %47 = vmatprep.subr.bf16.mxu0 0
  %48 = vmatpush1.bf16.msra.mxu0 0
  %49 = vmatprep.subr.bf16.mxu0 0
  %50 = vmatpush1.bf16.msra.mxu0 0
  %51 = vmatprep.subr.bf16.mxu0 0
  %52 = vmatpush1.bf16.msra.mxu0 0
  %53 = vmatprep.subr.bf16.mxu0 0
  %54 = vmatpush1.bf16.msra.mxu0 0
  %55 = vmatprep.subr.bf16.mxu0 0
  %56 = vmatpush1.bf16.msra.mxu0 0
  %57 = vmatprep.subr.bf16.mxu0 0
  %58 = vmatpush1.bf16.msra.mxu0 0
  %59 = vmatprep.subr.bf16.mxu0 0
  %60 = vmatpush1.bf16.msra.mxu0 %v40
  %61 = vmatprep.subr.bf16.mxu0 0
  %62 = vmatpush1.bf16.msra.mxu0 %v39
  %63 = vmatprep.subr.bf16.mxu0 0
  %64 = vmatpush2.bf16.msra.mxu0 0
  %65 = vmatprep.subr.bf16.mxu0 0
  %66 = vmatpush2.bf16.msra.mxu0 0
  %67 = vmatprep.subr.bf16.mxu0 0
  %68 = vmatpush2.bf16.msra.mxu0 0
  %69 = vmatprep.subr.bf16.mxu0 0
  %70 = vmatpush2.bf16.msra.mxu0 0
  %71 = vmatprep.subr.bf16.mxu0 0
  %72 = vmatpush2.bf16.msra.mxu0 0
  %73 = vmatprep.subr.bf16.mxu0 0
  %74 = vmatpush2.bf16.msra.mxu0 0
  %75 = vmatprep.subr.bf16.mxu0 0
  %76 = vmatpush2.bf16.msra.mxu0 0
  %77 = vmatprep.subr.bf16.mxu0 0
  %78 = vmatpush2.bf16.msra.mxu0 0
  %79 = vmatprep.mubr.bf16.mxu0 0
  %80 = vmatmul.mubr.bf16.gmra.mxu0 %v45
  %v81 = vpop.f32.mrf.mxu0
  %v82 = vadd.f32 %v29, %v81
  %v83 = vpop.f32.mrf.mxu0
  %v84 = vpop.f32.mrf.mxu0
  %v85 = vadd.f32 %v29, %v84
  %v86 = vpop.f32.mrf.mxu0
  %87 = vdwg.mxu0
  %v88 = vpack.c.bf16 %v85, %v82
  %v90 = vunpack.c.l.b16 %v88
  %v91 = vunpack.c.h.b16 %v88
  %v92 = vpack.c.b16 %v90, %v90
  %v93 = vpack.c.b16 %v91, %v91
  %vm96 = vcmask 257024
  %97 = vst.msk [vmem:[%s3] sm:$0xf] %vm96, %v92
  %98 = vst.msk [vmem:[%s3 + $0x4] sm:$0xf] %vm96, %v93
  %99 = vrot.lane.b32.xlu0 %v92, 96
  %v100 = vpop.permute.xlu0 %99
  %101 = vrot.lane.b32.xlu0 %v93, 96
  %v102 = vpop.permute.xlu0 %101
  %105 = vst.msk [vmem:[%s4] sm:$0xf] %vm96, %v100
  %106 = vst.msk [vmem:[%s4 + $0x4] sm:$0xf] %vm96, %v102
  // Predicated region
  $region14: #{transformer_decoder_layer.12} parent=0 // pred_check
    _
  $region15: #{transformer_decoder_layer.12} parent=0 // pred_check_branch
    %108 = sbr.rel (0) target = $region17
  $region16: #{transformer_decoder_layer.12} parent=0 // pred_region
    _
  $region17: #{transformer_decoder_layer.12} parent=0 // pred_fallthru
    _
  // Predicated region
  $region18: #{transformer_decoder_layer.12} parent=0 // pred_check
    _
  $region19: #{transformer_decoder_layer.12} parent=0 // pred_check_branch
    %110 = sbr.rel (0) target = $region21
  $region20: #{transformer_decoder_layer.12} parent=0 // pred_region
    _
  $region21: #{transformer_decoder_layer.12} parent=0 // pred_fallthru
    _
  // Predicated region
  $region22: #{transformer_decoder_layer.12} parent=0 // pred_check
    _
  $region23: #{transformer_decoder_layer.12} parent=0 // pred_check_branch
    %112 = sbr.rel (0) target = $region25
  $region24: #{transformer_decoder_layer.12} parent=0 // pred_region
    _
  $region25: #{transformer_decoder_layer.12} parent=0 // pred_fallthru
    _
  // Predicated region
  $region26: #{transformer_decoder_layer.12} parent=0 // pred_check
    _
  $region27: #{transformer_decoder_layer.12} parent=0 // pred_check_branch
    %114 = sbr.rel (0) target = $region29
  $region28: #{transformer_decoder_layer.12} parent=0 // pred_region
    _
  $region29: #{transformer_decoder_layer.12} parent=0 // pred_fallthru
    _

// kernel: transformer_decoder_layer.9
$region0: #{transformer_decoder_layer.9}
  #allocation0 [shape = 'u32[]', space=smem, size = 0x4, offset = 0x4, fixed_abs, tag = 'smem constant byte address 0x4 - core index']
  #allocation1 [shape = 'u32[144,128]{1,0:T(1,128)}', space=vmem, size = 0x12000, scoped, tag = 'internal scratch']
  %s0 = inlined_call_operand.vmem [shape: f32[16,32], index: 0, kind: input, shape index: {}]
  %s1 = inlined_call_operand.vmem [shape: f32[1,32], index: 1, kind: input, shape index: {}]
  %s2 = inlined_call_operand.vmem [shape: f32[1,32], index: 2, kind: input, shape index: {}]
  %s3 = inlined_call_operand.vmem [shape: bf16[32,96], index: 3, kind: input, shape index: {}]
  %s4 = inlined_call_operand.vmem [shape: f32[1,96], index: 4, kind: input, shape index: {}]
  %s5 = inlined_call_operand.vmem [shape: bf16[16,32], index: 5, kind: output, shape index: {0}]
  %s6 = inlined_call_operand.vmem [shape: bf16[16,32], index: 6, kind: output, shape index: {1}]
  %s7 = inlined_call_operand.vmem [shape: bf16[16,32], index: 7, kind: output, shape index: {2}]
  %8 = xla_tuple %s5, %s6, %s7
  %s9 = sld [smem:[#allocation0]]
  $region46: #{transformer_decoder_layer.9} parent=0
    _
  %s11 = ssub.s32 1, %s9
  %s12 = scalar_select 0, %s11, %s9
  // Predicated region
  $region2: #{transformer_decoder_layer.9} parent=0 // pred_check
    _
  $region3: #{transformer_decoder_layer.9} parent=0 // pred_check_branch
    %14 = sbr.rel (0) target = $region5
  $region4: #{transformer_decoder_layer.9} parent=0 // pred_region
    _
  $region5: #{transformer_decoder_layer.9} parent=0 // pred_fallthru
    _
  // Predicated region
  $region6: #{transformer_decoder_layer.9} parent=0 // pred_check
    _
  $region7: #{transformer_decoder_layer.9} parent=0 // pred_check_branch
    %16 = sbr.rel (0) target = $region9
  $region8: #{transformer_decoder_layer.9} parent=0 // pred_region
    _
  $region9: #{transformer_decoder_layer.9} parent=0 // pred_fallthru
    _
  // Predicated region
  $region10: #{transformer_decoder_layer.9} parent=0 // pred_check
    _
  $region11: #{transformer_decoder_layer.9} parent=0 // pred_check_branch
    %18 = sbr.rel (0) target = $region13
  $region12: #{transformer_decoder_layer.9} parent=0 // pred_region
    _
  $region13: #{transformer_decoder_layer.9} parent=0 // pred_fallthru
    _
  // Predicated region
  $region14: #{transformer_decoder_layer.9} parent=0 // pred_check
    _
  $region15: #{transformer_decoder_layer.9} parent=0 // pred_check_branch
    %20 = sbr.rel (0) target = $region17
  $region16: #{transformer_decoder_layer.9} parent=0 // pred_region
    _
  $region17: #{transformer_decoder_layer.9} parent=0 // pred_fallthru
    _
  // Predicated region
  $region18: #{transformer_decoder_layer.9} parent=0 // pred_check
    _
  $region19: #{transformer_decoder_layer.9} parent=0 // pred_check_branch
    %22 = sbr.rel (0) target = $region21
  $region20: #{transformer_decoder_layer.9} parent=0 // pred_region
    _
  $region21: #{transformer_decoder_layer.9} parent=0 // pred_fallthru
    _
  %v24 = vld [vmem:[%s0] sm:$0xff]
  %v25 = vld [vmem:[%s0 + $0x8] sm:$0xff]
  %v26 = vld [vmem:[%s1] sm:$0x1]
  %v27 = vld [vmem:[%s2] sm:$0x1]
  %vm28 = vcmask 261120
  %v29 = vsel %vm28, %v24, 0.0
  %30 = vadd.xlane.f32.xlu0 %v29
  %v31 = vpop.xlane.xlu0 %30
  %v32 = vsel %vm28, %v25, 0.0
  %33 = vadd.xlane.f32.xlu0 %v32
  %v34 = vpop.xlane.xlu0 %33
  %v35 = vrcp.pop 32.0
  %v36 = vmul.f32 %v31, %v35
  %v37 = vmul.f32 %v34, %v35
  %v38 = vsub.f32 %v24, %v36
  %v39 = vsub.f32 %v25, %v37
  %v40 = vmul.f32 %v38, %v38
  %v41 = vmul.f32 %v39, %v39
  %v42 = vsel %vm28, %v40, 0.0
  %43 = vadd.xlane.f32.xlu0 %v42
  %v44 = vpop.xlane.xlu0 %43
  %v45 = vsel %vm28, %v41, 0.0
  %46 = vadd.xlane.f32.xlu0 %v45
  %v47 = vpop.xlane.xlu0 %46
  %v48 = vmul.f32 %v44, %v35
  %v49 = vmul.f32 %v47, %v35
  %v50 = vadd.f32 %v48, 1e-06
  %v51 = vadd.f32 %v49, 1e-06
  %v52 = vrsqrt.pop %v50
  %v53 = vrsqrt.pop %v51
  %v54 = vmul.f32 %v38, %v52
  %v55 = vmul.f32 %v39, %v53
  %v57 = vlaneseq
  %v58 = vshrl.u32 %v57, 7
  %v59 = vsub.s32 0, %v58
  %v60 = vrot.slane %v26, %v59
  %v62 = vmul.f32 %v54, %v60
  %v63 = vmul.f32 %v55, %v60
  %v65 = vlaneseq
  %v66 = vshrl.u32 %v65, 7
  %v67 = vsub.s32 0, %v66
  %v68 = vrot.slane %v27, %v67
  %v70 = vadd.f32 %v62, %v68
  %v71 = vadd.f32 %v63, %v68
  %v72 = vpack.c.bf16 %v71, %v70
  %v73 = vld [vmem:[%s3] sm:$0xf]
  %v74 = vld [vmem:[%s3 + $0x4] sm:$0xf]
  %v75 = vld [vmem:[%s3 + $0x8] sm:$0xf]
  %v76 = vld [vmem:[%s3 + $0xc] sm:$0xf]
  %v77 = vld [vmem:[%s4] sm:$0x1]
  %v79 = vlaneseq
  %v80 = vshrl.u32 %v79, 7
  %v81 = vsub.s32 0, %v80
  %v82 = vrot.slane %v77, %v81
  %v88 = vunpack.c.l.b16 %v73
  %v89 = vunpack.c.l.b16 %v74
  %v90 = vunpack.c.l.b16 %v75
  %v91 = vunpack.c.l.b16 %v76
  %v92 = vpack.c.b16 %v89, %v88
  %v93 = vpack.c.b16 %v91, %v90
  %v97 = vsel %vm28, %v72, 0
  %99 = vmatprep.subr.bf16.mxu0 0
  %100 = vmatpush1.bf16.msra.mxu0 0
  %101 = vmatprep.subr.bf16.mxu0 0
  %102 = vmatpush1.bf16.msra.mxu0 0
  %103 = vmatprep.subr.bf16.mxu0 0
  %104 = vmatpush1.bf16.msra.mxu0 0
  %105 = vmatprep.subr.bf16.mxu0 0
  %106 = vmatpush1.bf16.msra.mxu0 0
  %107 = vmatprep.subr.bf16.mxu0 0
  %108 = vmatpush1.bf16.msra.mxu0 0
  %109 = vmatprep.subr.bf16.mxu0 0
  %110 = vmatpush1.bf16.msra.mxu0 0
  %111 = vmatprep.subr.bf16.mxu0 0
  %112 = vmatpush1.bf16.msra.mxu0 %v93
  %113 = vmatprep.subr.bf16.mxu0 0
  %114 = vmatpush1.bf16.msra.mxu0 %v92
  %115 = vmatprep.subr.bf16.mxu0 0
  %116 = vmatpush2.bf16.msra.mxu0 0
  %117 = vmatprep.subr.bf16.mxu0 0
  %118 = vmatpush2.bf16.msra.mxu0 0
  %119 = vmatprep.subr.bf16.mxu0 0
  %120 = vmatpush2.bf16.msra.mxu0 0
  %121 = vmatprep.subr.bf16.mxu0 0
  %122 = vmatpush2.bf16.msra.mxu0 0
  %123 = vmatprep.subr.bf16.mxu0 0
  %124 = vmatpush2.bf16.msra.mxu0 0
  %125 = vmatprep.subr.bf16.mxu0 0
  %126 = vmatpush2.bf16.msra.mxu0 0
  %127 = vmatprep.subr.bf16.mxu0 0
  %128 = vmatpush2.bf16.msra.mxu0 0
  %129 = vmatprep.subr.bf16.mxu0 0
  %130 = vmatpush2.bf16.msra.mxu0 0
  %131 = vmatprep.mubr.bf16.mxu0 0
  %132 = vmatmul.mubr.bf16.gmra.mxu0 %v97
  %v133 = vpop.f32.mrf.mxu0
  %v134 = vadd.f32 %v82, %v133
  %v135 = vpop.f32.mrf.mxu0
  %v136 = vpop.f32.mrf.mxu0
  %v137 = vadd.f32 %v82, %v136
  %v138 = vpop.f32.mrf.mxu0
  %139 = vdwg.mxu0
  %v140 = vpack.c.bf16 %v137, %v134
  %v142 = vunpack.c.l.b16 %v140
  %v143 = vunpack.c.h.b16 %v140
  %v144 = vpack.c.b16 %v142, %v142
  %v145 = vpack.c.b16 %v143, %v143
  %vm148 = vcmask 257024
  %149 = vst.msk [vmem:[%s5] sm:$0xf] %vm148, %v144
  %150 = vst.msk [vmem:[%s5 + $0x4] sm:$0xf] %vm148, %v145
  %151 = vrot.lane.b32.xlu0 %v144, 96
  %v152 = vpop.permute.xlu0 %151
  %153 = vrot.lane.b32.xlu0 %v145, 96
  %v154 = vpop.permute.xlu0 %153
  %157 = vst.msk [vmem:[%s6] sm:$0xf] %vm148, %v152
  %158 = vst.msk [vmem:[%s6 + $0x4] sm:$0xf] %vm148, %v154
  %159 = vrot.lane.b32.xlu0 %v144, 64
  %v160 = vpop.permute.xlu0 %159
  %161 = vrot.lane.b32.xlu0 %v145, 64
  %v162 = vpop.permute.xlu0 %161
  %165 = vst.msk [vmem:[%s7] sm:$0xf] %vm148, %v160
  %166 = vst.msk [vmem:[%s7 + $0x4] sm:$0xf] %vm148, %v162
  // Predicated region
  $region22: #{transformer_decoder_layer.9} parent=0 // pred_check
    _
  $region23: #{transformer_decoder_layer.9} parent=0 // pred_check_branch
    %168 = sbr.rel (0) target = $region25
  $region24: #{transformer_decoder_layer.9} parent=0 // pred_region
    _
  $region25: #{transformer_decoder_layer.9} parent=0 // pred_fallthru
    _
  // Predicated region
  $region26: #{transformer_decoder_layer.9} parent=0 // pred_check
    _
  $region27: #{transformer_decoder_layer.9} parent=0 // pred_check_branch
    %170 = sbr.rel (0) target = $region29
  $region28: #{transformer_decoder_layer.9} parent=0 // pred_region
    _
  $region29: #{transformer_decoder_layer.9} parent=0 // pred_fallthru
    _
  // Predicated region
  $region30: #{transformer_decoder_layer.9} parent=0 // pred_check
    _
  $region31: #{transformer_decoder_layer.9} parent=0 // pred_check_branch
    %172 = sbr.rel (0) target = $region33
  $region32: #{transformer_decoder_layer.9} parent=0 // pred_region
    _
  $region33: #{transformer_decoder_layer.9} parent=0 // pred_fallthru
    _
  // Predicated region
  $region34: #{transformer_decoder_layer.9} parent=0 // pred_check
    _
  $region35: #{transformer_decoder_layer.9} parent=0 // pred_check_branch
    %174 = sbr.rel (0) target = $region37
  $region36: #{transformer_decoder_layer.9} parent=0 // pred_region
    _
  $region37: #{transformer_decoder_layer.9} parent=0 // pred_fallthru
    _
  // Predicated region
  $region38: #{transformer_decoder_layer.9} parent=0 // pred_check
    _
  $region39: #{transformer_decoder_layer.9} parent=0 // pred_check_branch
    %176 = sbr.rel (0) target = $region41
  $region40: #{transformer_decoder_layer.9} parent=0 // pred_region
    _
  $region41: #{transformer_decoder_layer.9} parent=0 // pred_fallthru
    _
  // Predicated region
  $region42: #{transformer_decoder_layer.9} parent=0 // pred_check
    _
  $region43: #{transformer_decoder_layer.9} parent=0 // pred_check_branch
    %178 = sbr.rel (0) target = $region45
  $region44: #{transformer_decoder_layer.9} parent=0 // pred_region
    _
  $region45: #{transformer_decoder_layer.9} parent=0 // pred_fallthru
    _

// kernel: transformer_decoder_layer.11
$region0: #{transformer_decoder_layer.11}
  #allocation0 [shape = 'u32[]', space=smem, size = 0x4, offset = 0x4, fixed_abs, tag = 'smem constant byte address 0x4 - core index']
  #allocation1 [shape = 'u32[144,128]{1,0:T(1,128)}', space=vmem, size = 0x12000, scoped, tag = 'internal scratch']
  %s0 = inlined_call_operand.vmem [shape: bf16[16,32], index: 0, kind: input, shape index: {}]
  %s1 = inlined_call_operand.vmem [shape: bf16[32,32], index: 1, kind: input, shape index: {}]
  %s2 = inlined_call_operand.vmem [shape: f32[1,32], index: 2, kind: input, shape index: {}]
  %s3 = inlined_call_operand.vmem [shape: f32[16,32], index: 3, kind: input, shape index: {}]
  %s4 = inlined_call_operand.vmem [shape: f32[1,32], index: 4, kind: input, shape index: {}]
  %s5 = inlined_call_operand.vmem [shape: f32[1,32], index: 5, kind: input, shape index: {}]
  %s6 = inlined_call_operand.vmem [shape: bf16[32,32], index: 6, kind: input, shape index: {}]
  %s7 = inlined_call_operand.vmem [shape: f32[1,32], index: 7, kind: input, shape index: {}]
  %s8 = inlined_call_operand.vmem [shape: f32[16,32], index: 8, kind: output, shape index: {0}]
  %s9 = inlined_call_operand.vmem [shape: bf16[16,32], index: 9, kind: output, shape index: {1}]
  %10 = xla_tuple %s8, %s9
  %s11 = sld [smem:[#allocation0]]
  $region50: #{transformer_decoder_layer.11} parent=0
    _
  %s13 = ssub.s32 1, %s11
  %s14 = scalar_select 0, %s13, %s11
  // Predicated region
  $region2: #{transformer_decoder_layer.11} parent=0 // pred_check
    _
  $region3: #{transformer_decoder_layer.11} parent=0 // pred_check_branch
    %16 = sbr.rel (0) target = $region5
  $region4: #{transformer_decoder_layer.11} parent=0 // pred_region
    _
  $region5: #{transformer_decoder_layer.11} parent=0 // pred_fallthru
    _
  // Predicated region
  $region6: #{transformer_decoder_layer.11} parent=0 // pred_check
    _
  $region7: #{transformer_decoder_layer.11} parent=0 // pred_check_branch
    %18 = sbr.rel (0) target = $region9
  $region8: #{transformer_decoder_layer.11} parent=0 // pred_region
    _
  $region9: #{transformer_decoder_layer.11} parent=0 // pred_fallthru
    _
  // Predicated region
  $region10: #{transformer_decoder_layer.11} parent=0 // pred_check
    _
  $region11: #{transformer_decoder_layer.11} parent=0 // pred_check_branch
    %20 = sbr.rel (0) target = $region13
  $region12: #{transformer_decoder_layer.11} parent=0 // pred_region
    _
  $region13: #{transformer_decoder_layer.11} parent=0 // pred_fallthru
    _
  // Predicated region
  $region14: #{transformer_decoder_layer.11} parent=0 // pred_check
    _
  $region15: #{transformer_decoder_layer.11} parent=0 // pred_check_branch
    %22 = sbr.rel (0) target = $region17
  $region16: #{transformer_decoder_layer.11} parent=0 // pred_region
    _
  $region17: #{transformer_decoder_layer.11} parent=0 // pred_fallthru
    _
  // Predicated region
  $region18: #{transformer_decoder_layer.11} parent=0 // pred_check
    _
  $region19: #{transformer_decoder_layer.11} parent=0 // pred_check_branch
    %24 = sbr.rel (0) target = $region21
  $region20: #{transformer_decoder_layer.11} parent=0 // pred_region
    _
  $region21: #{transformer_decoder_layer.11} parent=0 // pred_fallthru
    _
  // Predicated region
  $region22: #{transformer_decoder_layer.11} parent=0 // pred_check
    _
  $region23: #{transformer_decoder_layer.11} parent=0 // pred_check_branch
    %26 = sbr.rel (0) target = $region25
  $region24: #{transformer_decoder_layer.11} parent=0 // pred_region
    _
  $region25: #{transformer_decoder_layer.11} parent=0 // pred_fallthru
    _
  // Predicated region
  $region26: #{transformer_decoder_layer.11} parent=0 // pred_check
    _
  $region27: #{transformer_decoder_layer.11} parent=0 // pred_check_branch
    %28 = sbr.rel (0) target = $region29
  $region28: #{transformer_decoder_layer.11} parent=0 // pred_region
    _
  $region29: #{transformer_decoder_layer.11} parent=0 // pred_fallthru
    _
  // Predicated region
  $region30: #{transformer_decoder_layer.11} parent=0 // pred_check
    _
  $region31: #{transformer_decoder_layer.11} parent=0 // pred_check_branch
    %30 = sbr.rel (0) target = $region33
  $region32: #{transformer_decoder_layer.11} parent=0 // pred_region
    _
  $region33: #{transformer_decoder_layer.11} parent=0 // pred_fallthru
    _
  %v32 = vld [vmem:[%s0] sm:$0xf]
  %v33 = vld [vmem:[%s0 + $0x4] sm:$0xf]
  %v34 = vld [vmem:[%s1] sm:$0xf]
  %v35 = vld [vmem:[%s1 + $0x4] sm:$0xf]
  %v36 = vld [vmem:[%s1 + $0x8] sm:$0xf]
  %v37 = vld [vmem:[%s1 + $0xc] sm:$0xf]
  %v38 = vld [vmem:[%s2] sm:$0x1]
  %v40 = vlaneseq
  %v41 = vshrl.u32 %v40, 7
  %v42 = vsub.s32 0, %v41
  %v43 = vrot.slane %v38, %v42
  %v47 = vunpack.c.l.b16 %v32
  %v48 = vunpack.c.l.b16 %v33
  %v49 = vpack.c.b16 %v48, %v47
  %v54 = vunpack.c.l.b16 %v34
  %v55 = vunpack.c.l.b16 %v35
  %v56 = vunpack.c.l.b16 %v36
  %v57 = vunpack.c.l.b16 %v37
  %v58 = vpack.c.b16 %v55, %v54
  %v59 = vpack.c.b16 %v57, %v56
  %vm62 = vcmask 261120
  %v64 = vsel %vm62, %v49, 0
  %66 = vmatprep.subr.bf16.mxu0 0
  %67 = vmatpush1.bf16.msra.mxu0 0
  %68 = vmatprep.subr.bf16.mxu0 0
  %69 = vmatpush1.bf16.msra.mxu0 0
  %70 = vmatprep.subr.bf16.mxu0 0
  %71 = vmatpush1.bf16.msra.mxu0 0
  %72 = vmatprep.subr.bf16.mxu0 0
  %73 = vmatpush1.bf16.msra.mxu0 0
  %74 = vmatprep.subr.bf16.mxu0 0
  %75 = vmatpush1.bf16.msra.mxu0 0
  %76 = vmatprep.subr.bf16.mxu0 0
  %77 = vmatpush1.bf16.msra.mxu0 0
  %78 = vmatprep.subr.bf16.mxu0 0
  %79 = vmatpush1.bf16.msra.mxu0 %v59
  %80 = vmatprep.subr.bf16.mxu0 0
  %81 = vmatpush1.bf16.msra.mxu0 %v58
  %82 = vmatprep.subr.bf16.mxu0 0
  %83 = vmatpush2.bf16.msra.mxu0 0
  %84 = vmatprep.subr.bf16.mxu0 0
  %85 = vmatpush2.bf16.msra.mxu0 0
  %86 = vmatprep.subr.bf16.mxu0 0
  %87 = vmatpush2.bf16.msra.mxu0 0
  %88 = vmatprep.subr.bf16.mxu0 0
  %89 = vmatpush2.bf16.msra.mxu0 0
  %90 = vmatprep.subr.bf16.mxu0 0
  %91 = vmatpush2.bf16.msra.mxu0 0
  %92 = vmatprep.subr.bf16.mxu0 0
  %93 = vmatpush2.bf16.msra.mxu0 0
  %94 = vmatprep.subr.bf16.mxu0 0
  %95 = vmatpush2.bf16.msra.mxu0 0
  %96 = vmatprep.subr.bf16.mxu0 0
  %97 = vmatpush2.bf16.msra.mxu0 0
  %98 = vmatprep.mubr.bf16.mxu0 0
  %99 = vmatmul.mubr.bf16.gmra.mxu0 %v64
  %v100 = vpop.f32.mrf.mxu0
  %v101 = vadd.f32 %v43, %v100
  %v102 = vpop.f32.mrf.mxu0
  %v103 = vpop.f32.mrf.mxu0
  %v104 = vadd.f32 %v43, %v103
  %v105 = vpop.f32.mrf.mxu0
  %106 = vdwg.mxu0
  %v107 = vld [vmem:[%s3] sm:$0xff]
  %v108 = vld [vmem:[%s3 + $0x8] sm:$0xff]
  %v109 = vadd.f32 %v101, %v107
  %v110 = vadd.f32 %v104, %v108
  %111 = vst.msk [vmem:[%s8] sm:$0xff] %vm62, %v109
  %112 = vst.msk [vmem:[%s8 + $0x8] sm:$0xff] %vm62, %v110
  %v113 = vld [vmem:[%s4] sm:$0x1]
  %v114 = vld [vmem:[%s5] sm:$0x1]
  %v115 = vsel %vm62, %v109, 0.0
  %116 = vadd.xlane.f32.xlu0 %v115
  %v117 = vpop.xlane.xlu0 %116
  %v118 = vsel %vm62, %v110, 0.0
  %119 = vadd.xlane.f32.xlu0 %v118
  %v120 = vpop.xlane.xlu0 %119
  %v121 = vrcp.pop 32.0
  %v122 = vmul.f32 %v117, %v121
  %v123 = vmul.f32 %v120, %v121
  %v124 = vsub.f32 %v109, %v122
  %v125 = vsub.f32 %v110, %v123
  %v126 = vmul.f32 %v124, %v124
  %v127 = vmul.f32 %v125, %v125
  %v128 = vsel %vm62, %v126, 0.0
  %129 = vadd.xlane.f32.xlu0 %v128
  %v130 = vpop.xlane.xlu0 %129
  %v131 = vsel %vm62, %v127, 0.0
  %132 = vadd.xlane.f32.xlu0 %v131
  %v133 = vpop.xlane.xlu0 %132
  %v134 = vmul.f32 %v130, %v121
  %v135 = vmul.f32 %v133, %v121
  %v136 = vadd.f32 %v134, 1e-06
  %v137 = vadd.f32 %v135, 1e-06
  %v138 = vrsqrt.pop %v136
  %v139 = vrsqrt.pop %v137
  %v140 = vmul.f32 %v124, %v138
  %v141 = vmul.f32 %v125, %v139
  %v143 = vlaneseq
  %v144 = vshrl.u32 %v143, 7
  %v145 = vsub.s32 0, %v144
  %v146 = vrot.slane %v113, %v145
  %v148 = vmul.f32 %v140, %v146
  %v149 = vmul.f32 %v141, %v146
  %v151 = vlaneseq
  %v152 = vshrl.u32 %v151, 7
  %v153 = vsub.s32 0, %v152
  %v154 = vrot.slane %v114, %v153
  %v156 = vadd.f32 %v148, %v154
  %v157 = vadd.f32 %v149, %v154
  %v158 = vpack.c.bf16 %v157, %v156
  %v159 = vld [vmem:[%s6] sm:$0xf]
  %v160 = vld [vmem:[%s6 + $0x4] sm:$0xf]
  %v161 = vld [vmem:[%s6 + $0x8] sm:$0xf]
  %v162 = vld [vmem:[%s6 + $0xc] sm:$0xf]
  %v163 = vld [vmem:[%s7] sm:$0x1]
  %v165 = vlaneseq
  %v166 = vshrl.u32 %v165, 7
  %v167 = vsub.s32 0, %v166
  %v168 = vrot.slane %v163, %v167
  %v174 = vunpack.c.l.b16 %v159
  %v175 = vunpack.c.l.b16 %v160
  %v176 = vunpack.c.l.b16 %v161
  %v177 = vunpack.c.l.b16 %v162
  %v178 = vpack.c.b16 %v175, %v174
  %v179 = vpack.c.b16 %v177, %v176
  %v183 = vsel %vm62, %v158, 0
  %185 = vmatprep.subr.bf16.mxu0 0
  %186 = vmatpush1.bf16.msra.mxu0 0
  %187 = vmatprep.subr.bf16.mxu0 0
  %188 = vmatpush1.bf16.msra.mxu0 0
  %189 = vmatprep.subr.bf16.mxu0 0
  %190 = vmatpush1.bf16.msra.mxu0 0
  %191 = vmatprep.subr.bf16.mxu0 0
  %192 = vmatpush1.bf16.msra.mxu0 0
  %193 = vmatprep.subr.bf16.mxu0 0
  %194 = vmatpush1.bf16.msra.mxu0 0
  %195 = vmatprep.subr.bf16.mxu0 0
  %196 = vmatpush1.bf16.msra.mxu0 0
  %197 = vmatprep.subr.bf16.mxu0 0
  %198 = vmatpush1.bf16.msra.mxu0 %v179
  %199 = vmatprep.subr.bf16.mxu0 0
  %200 = vmatpush1.bf16.msra.mxu0 %v178
  %201 = vmatprep.subr.bf16.mxu0 0
  %202 = vmatpush2.bf16.msra.mxu0 0
  %203 = vmatprep.subr.bf16.mxu0 0
  %204 = vmatpush2.bf16.msra.mxu0 0
  %205 = vmatprep.subr.bf16.mxu0 0
  %206 = vmatpush2.bf16.msra.mxu0 0
  %207 = vmatprep.subr.bf16.mxu0 0
  %208 = vmatpush2.bf16.msra.mxu0 0
  %209 = vmatprep.subr.bf16.mxu0 0
  %210 = vmatpush2.bf16.msra.mxu0 0
  %211 = vmatprep.subr.bf16.mxu0 0
  %212 = vmatpush2.bf16.msra.mxu0 0
  %213 = vmatprep.subr.bf16.mxu0 0
  %214 = vmatpush2.bf16.msra.mxu0 0
  %215 = vmatprep.subr.bf16.mxu0 0
  %216 = vmatpush2.bf16.msra.mxu0 0
  %217 = vmatprep.mubr.bf16.mxu0 0
  %218 = vmatmul.mubr.bf16.gmra.mxu0 %v183
  %v219 = vpop.f32.mrf.mxu0
  %v220 = vadd.f32 %v168, %v219
  %v221 = vpop.f32.mrf.mxu0
  %v222 = vpop.f32.mrf.mxu0
  %v223 = vadd.f32 %v168, %v222
  %v224 = vpop.f32.mrf.mxu0
  %225 = vdwg.mxu0
  %v226 = vpack.c.bf16 %v223, %v220
  %v228 = vunpack.c.l.b16 %v226
  %v229 = vunpack.c.h.b16 %v226
  %v230 = vpack.c.b16 %v228, %v228
  %v231 = vpack.c.b16 %v229, %v229
  %vm234 = vcmask 257024
  %235 = vst.msk [vmem:[%s9] sm:$0xf] %vm234, %v230
  %236 = vst.msk [vmem:[%s9 + $0x4] sm:$0xf] %vm234, %v231
  // Predicated region
  $region34: #{transformer_decoder_layer.11} parent=0 // pred_check
    _
  $region35: #{transformer_decoder_layer.11} parent=0 // pred_check_branch
    %238 = sbr.rel (0) target = $region37
  $region36: #{transformer_decoder_layer.11} parent=0 // pred_region
    _
  $region37: #{transformer_decoder_layer.11} parent=0 // pred_fallthru
    _
  // Predicated region
  $region38: #{transformer_decoder_layer.11} parent=0 // pred_check
    _
  $region39: #{transformer_decoder_layer.11} parent=0 // pred_check_branch
    %240 = sbr.rel (0) target = $region41
  $region40: #{transformer_decoder_layer.11} parent=0 // pred_region
    _
  $region41: #{transformer_decoder_layer.11} parent=0 // pred_fallthru
    _
  // Predicated region
  $region42: #{transformer_decoder_layer.11} parent=0 // pred_check
    _
  $region43: #{transformer_decoder_layer.11} parent=0 // pred_check_branch
    %242 = sbr.rel (0) target = $region45
  $region44: #{transformer_decoder_layer.11} parent=0 // pred_region
    _
  $region45: #{transformer_decoder_layer.11} parent=0 // pred_fallthru
    _
  // Predicated region
  $region46: #{transformer_decoder_layer.11} parent=0 // pred_check
    _
  $region47: #{transformer_decoder_layer.11} parent=0 // pred_check_branch
    %244 = sbr.rel (0) target = $region49
  $region48: #{transformer_decoder_layer.11} parent=0 // pred_region
    _
  $region49: #{transformer_decoder_layer.11} parent=0 // pred_fallthru
    _

// kernel: transformer_decoder_layer.10
$region0: #{transformer_decoder_layer.10}
  #allocation0 [shape = 'u32[]', space=smem, size = 0x4, offset = 0x4, fixed_abs, tag = 'smem constant byte address 0x4 - core index']
  #allocation1 [shape = 'u32[144,128]{1,0:T(1,128)}', space=vmem, size = 0x12000, scoped, tag = 'internal scratch']
  %s0 = inlined_call_operand.vmem [shape: bf16[2,8,32], index: 0, kind: input, shape index: {}]
  %s1 = inlined_call_operand.vmem [shape: bf16[2,8,32], index: 1, kind: input, shape index: {}]
  %s2 = inlined_call_operand.vmem [shape: bf16[2,8,32], index: 2, kind: input, shape index: {}]
  %s3 = inlined_call_operand.vmem [shape: s32[2,8,8], index: 3, kind: input, shape index: {}]
  %s4 = inlined_call_operand.vmem [shape: bf16[2,8,32], index: 4, kind: output, shape index: {}]
  %s5 = sld [smem:[#allocation0]]
  $region49: #{transformer_decoder_layer.10} parent=0
    _
  %s7 = ssub.s32 1, %s5
  %s8 = scalar_select 0, %s7, %s5
  loop: start=0, step=1, limit=4
  $region2: #{transformer_decoder_layer.10} parent=0 // loop_pre_header
    _
  $region3: #{transformer_decoder_layer.10} parent=0 // loop_header
    %s10 = sphi 0, %s14
    %p11 = scmp.ge.s32.totalorder %s10, 4
    %s20 = sphi 0, %s22
    %s23 = sphi 0, %s20
    %s24 = sphi 0, %s23
    %s40 = sphi 0, %s24
    %s46 = sphi 0, %s48
    %s49 = sphi 0, %s46
    %s50 = sphi 0, %s49
    %s66 = sphi 0, %s50
    %s72 = sphi 0, %s74
    %s75 = sphi 0, %s72
    %s76 = sphi 0, %s75
    %s92 = sphi 0, %s76
    %s98 = sphi 0, %s100
    %s101 = sphi 0, %s98
    %s102 = sphi 0, %s101
    %s118 = sphi 0, %s102
    %s124 = sphi 0, %s126
    %s127 = sphi 0, %s124
    %s128 = sphi 0, %s127
    %s144 = sphi 0, %s128
  $region4: #{transformer_decoder_layer.10} parent=0 // loop_header_branch
    %13 = sbr.rel (%p11) target = $region8
  $region5: #{transformer_decoder_layer.10} parent=0 // loop_body
    %s15 = ssub.s32 %s10, 1
    %s16 = ssub.s32 %s10, 2
    %s17 = sadd.s32 %s10, 1
    %s18 = ssub.s32 %s10, %s17
    %p19 = scmp.eq.s32.totalorder %s18, 0
    %s21 = sadd.s32 %s20, 1
    %s22 = scalar_select %p19, %s20, %s21
    %p25 = pneg %p19
    %p26 = scmp.eq.s32.totalorder %s10, 1
    %p27 = por %p25, %p26
    %p28 = scmp.ne.s32.totalorder %s20, %s23
    %p29 = scmp.eq.s32.totalorder %s10, 0
    %p30 = por %p28, %p29
    %p31 = scmp.ne.s32.totalorder %s20, %s23
    %p32 = scmp.eq.s32.totalorder %s15, 1
    %p33 = por %p31, %p32
    %p34 = scmp.ne.s32.totalorder %s23, %s24
    %p35 = scmp.eq.s32.totalorder %s15, 0
    %p36 = por %p34, %p35
    %p37 = scmp.ne.s32.totalorder %s23, %s24
    %p38 = scmp.eq.s32.totalorder %s16, 1
    %p39 = por %p37, %p38
    %p41 = scmp.ne.s32.totalorder %s24, %s40
    %p42 = scmp.eq.s32.totalorder %s16, 0
    %p43 = por %p41, %p42
    %s44 = ssub.s32 %s10, %s17
    %p45 = scmp.eq.s32.totalorder %s44, 0
    %s47 = sadd.s32 %s46, 1
    %s48 = scalar_select %p45, %s46, %s47
    %p51 = pneg %p45
    %p52 = scmp.eq.s32.totalorder %s10, 1
    %p53 = por %p51, %p52
    %p54 = scmp.ne.s32.totalorder %s46, %s49
    %p55 = scmp.eq.s32.totalorder %s10, 0
    %p56 = por %p54, %p55
    %p57 = scmp.ne.s32.totalorder %s46, %s49
    %p58 = scmp.eq.s32.totalorder %s15, 1
    %p59 = por %p57, %p58
    %p60 = scmp.ne.s32.totalorder %s49, %s50
    %p61 = scmp.eq.s32.totalorder %s15, 0
    %p62 = por %p60, %p61
    %p63 = scmp.ne.s32.totalorder %s49, %s50
    %p64 = scmp.eq.s32.totalorder %s16, 1
    %p65 = por %p63, %p64
    %p67 = scmp.ne.s32.totalorder %s50, %s66
    %p68 = scmp.eq.s32.totalorder %s16, 0
    %p69 = por %p67, %p68
    %s70 = ssub.s32 %s10, %s17
    %p71 = scmp.eq.s32.totalorder %s70, 0
    %s73 = sadd.s32 %s72, 1
    %s74 = scalar_select %p71, %s72, %s73
    %p77 = pneg %p71
    %p78 = scmp.eq.s32.totalorder %s10, 1
    %p79 = por %p77, %p78
    %p80 = scmp.ne.s32.totalorder %s72, %s75
    %p81 = scmp.eq.s32.totalorder %s10, 0
    %p82 = por %p80, %p81
    %p83 = scmp.ne.s32.totalorder %s72, %s75
    %p84 = scmp.eq.s32.totalorder %s15, 1
    %p85 = por %p83, %p84
    %p86 = scmp.ne.s32.totalorder %s75, %s76
    %p87 = scmp.eq.s32.totalorder %s15, 0
    %p88 = por %p86, %p87
    %p89 = scmp.ne.s32.totalorder %s75, %s76
    %p90 = scmp.eq.s32.totalorder %s16, 1
    %p91 = por %p89, %p90
    %p93 = scmp.ne.s32.totalorder %s76, %s92
    %p94 = scmp.eq.s32.totalorder %s16, 0
    %p95 = por %p93, %p94
    %s96 = ssub.s32 %s10, %s17
    %p97 = scmp.eq.s32.totalorder %s96, 0
    %s99 = sadd.s32 %s98, 1
    %s100 = scalar_select %p97, %s98, %s99
    %p103 = pneg %p97
    %p104 = scmp.eq.s32.totalorder %s10, 1
    %p105 = por %p103, %p104
    %p106 = scmp.ne.s32.totalorder %s98, %s101
    %p107 = scmp.eq.s32.totalorder %s10, 0
    %p108 = por %p106, %p107
    %p109 = scmp.ne.s32.totalorder %s98, %s101
    %p110 = scmp.eq.s32.totalorder %s15, 1
    %p111 = por %p109, %p110
    %p112 = scmp.ne.s32.totalorder %s101, %s102
    %p113 = scmp.eq.s32.totalorder %s15, 0
    %p114 = por %p112, %p113
    %p115 = scmp.ne.s32.totalorder %s101, %s102
    %p116 = scmp.eq.s32.totalorder %s16, 1
    %p117 = por %p115, %p116
    %p119 = scmp.ne.s32.totalorder %s102, %s118
    %p120 = scmp.eq.s32.totalorder %s16, 0
    %p121 = por %p119, %p120
    %s122 = ssub.s32 %s10, %s17
    %p123 = scmp.eq.s32.totalorder %s122, 0
    %s125 = sadd.s32 %s124, 1
    %s126 = scalar_select %p123, %s124, %s125
    %p129 = pneg %p123
    %p130 = scmp.eq.s32.totalorder %s10, 1
    %p131 = por %p129, %p130
    %p132 = scmp.ne.s32.totalorder %s124, %s127
    %p133 = scmp.eq.s32.totalorder %s10, 0
    %p134 = por %p132, %p133
    %p135 = scmp.ne.s32.totalorder %s124, %s127
    %p136 = scmp.eq.s32.totalorder %s15, 1
    %p137 = por %p135, %p136
    %p138 = scmp.ne.s32.totalorder %s127, %s128
    %p139 = scmp.eq.s32.totalorder %s15, 0
    %p140 = por %p138, %p139
    %p141 = scmp.ne.s32.totalorder %s127, %s128
    %p142 = scmp.eq.s32.totalorder %s16, 1
    %p143 = por %p141, %p142
    %p145 = scmp.ne.s32.totalorder %s128, %s144
    %p146 = scmp.eq.s32.totalorder %s16, 0
    %p147 = por %p145, %p146
    %p148 = scmp.le.s32.totalorder 1, %s10
    %p149 = scmp.lt.s32.totalorder %s10, 3
    %p150 = pnand %p148, %p149
    %p151 = pneg %p150
    // Predicated region
    $region9: #{transformer_decoder_layer.10} parent=5 // pred_check
      _
    $region10: #{transformer_decoder_layer.10} parent=5 // pred_check_branch
      %153 = sbr.rel (%p150) target = $region12
    $region11: #{transformer_decoder_layer.10} parent=5 // pred_region
      %s154 = ssub.s32 %s10, 1
    $region12: #{transformer_decoder_layer.10} parent=5 // pred_fallthru
      _
    %p155 = scmp.lt.s32.totalorder %s10, 2
    // Predicated region
    $region13: #{transformer_decoder_layer.10} parent=5 // pred_check
      %p156 = pneg %p155
    $region14: #{transformer_decoder_layer.10} parent=5 // pred_check_branch
      %158 = sbr.rel (%p156) target = $region16
    $region15: #{transformer_decoder_layer.10} parent=5 // pred_region
      // Predicated region
      $region17: #{transformer_decoder_layer.10} parent=15 // pred_check
        %p159 = pneg %p30
      $region18: #{transformer_decoder_layer.10} parent=15 // pred_check_branch
        %161 = sbr.rel (%p159) target = $region20
      $region19: #{transformer_decoder_layer.10} parent=15 // pred_region
        %p162 = scmp.lt.s32.totalorder %s10, 1
        %s163 = scalar_select %p162, %s10, 1
        %s164 = smul.addr %s163, 4
        %s165 = scalar_lea.vmem %s0, %s164
      $region20: #{transformer_decoder_layer.10} parent=15 // pred_fallthru
        _
      // Predicated region
      $region21: #{transformer_decoder_layer.10} parent=15 // pred_check
        %p166 = pneg %p56
      $region22: #{transformer_decoder_layer.10} parent=15 // pred_check_branch
        %168 = sbr.rel (%p166) target = $region24
      $region23: #{transformer_decoder_layer.10} parent=15 // pred_region
        %p169 = scmp.lt.s32.totalorder %s10, 1
        %s170 = scalar_select %p169, %s10, 1
        %s171 = smul.addr %s170, 4
        %s172 = scalar_lea.vmem %s1, %s171
      $region24: #{transformer_decoder_layer.10} parent=15 // pred_fallthru
        _
      // Predicated region
      $region25: #{transformer_decoder_layer.10} parent=15 // pred_check
        %p173 = pneg %p82
      $region26: #{transformer_decoder_layer.10} parent=15 // pred_check_branch
        %175 = sbr.rel (%p173) target = $region28
      $region27: #{transformer_decoder_layer.10} parent=15 // pred_region
        %p176 = scmp.lt.s32.totalorder %s10, 1
        %s177 = scalar_select %p176, %s10, 1
        %s178 = smul.addr %s177, 4
        %s179 = scalar_lea.vmem %s2, %s178
      $region28: #{transformer_decoder_layer.10} parent=15 // pred_fallthru
        _
      // Predicated region
      $region29: #{transformer_decoder_layer.10} parent=15 // pred_check
        %p180 = pneg %p108
      $region30: #{transformer_decoder_layer.10} parent=15 // pred_check_branch
        %182 = sbr.rel (%p180) target = $region32
      $region31: #{transformer_decoder_layer.10} parent=15 // pred_region
        %p183 = scmp.lt.s32.totalorder %s10, 1
        %s184 = scalar_select %p183, %s10, 1
        %s185 = smul.addr %s184, 8
        %s186 = scalar_lea.vmem %s3, %s185
      $region32: #{transformer_decoder_layer.10} parent=15 // pred_fallthru
        _
    $region16: #{transformer_decoder_layer.10} parent=5 // pred_fallthru
      _
    %p187 = scmp.le.s32.totalorder 1, %s10
    %p188 = scmp.lt.s32.totalorder %s10, 3
    %p189 = pnand %p187, %p188
    %p190 = pneg %p189
    // Predicated region
    $region33: #{transformer_decoder_layer.10} parent=5 // pred_check
      _
    $region34: #{transformer_decoder_layer.10} parent=5 // pred_check_branch
      %192 = sbr.rel (%p189) target = $region36
    $region35: #{transformer_decoder_layer.10} parent=5 // pred_region
      %s193 = ssub.s32 %s10, 1
      %p194 = scmp.lt.s32.totalorder %s15, 1
      %s195 = scalar_select %p194, %s15, 1
      %s196 = smul.addr %s195, 4
      %s197 = scalar_lea.vmem %s0, %s196
      %p198 = pneg %p36
      %p199 = pneg %p33
      %p200 = scmp.lt.s32.totalorder %s15, 1
      %s201 = scalar_select %p200, %s15, 1
      %s202 = smul.addr %s201, 4
      %s203 = scalar_lea.vmem %s1, %s202
      %p204 = pneg %p62
      %p205 = pneg %p59
      %p206 = scmp.lt.s32.totalorder %s15, 1
      %s207 = scalar_select %p206, %s15, 1
      %s208 = smul.addr %s207, 4
      %s209 = scalar_lea.vmem %s2, %s208
      %p210 = pneg %p88
      %p211 = pneg %p85
      %p212 = scmp.lt.s32.totalorder %s15, 1
      %s213 = scalar_select %p212, %s15, 1
      %s214 = smul.addr %s213, 8
      %s215 = scalar_lea.vmem %s3, %s214
      %p216 = pneg %p114
      %p217 = pneg %p111
      %p218 = pneg %p140
      %p219 = pneg %p137
      %p220 = scmp.lt.s32.totalorder %s15, 1
      %s221 = scalar_select %p220, %s15, 1
      %s222 = smul.addr %s221, 4
      %s223 = scalar_lea.vmem %s4, %s222
      %p224 = scmp.lt.s32.totalorder %s15, 1
      %s225 = scalar_select %p224, %s15, 1
      %s226 = smul.addr %s225, 4
      %s227 = scalar_lea.vmem %s0, %s226
      %p228 = scmp.lt.s32.totalorder %s15, 1
      %s229 = scalar_select %p228, %s15, 1
      %s230 = smul.addr %s229, 4
      %s231 = scalar_lea.vmem %s1, %s230
      %p232 = scmp.lt.s32.totalorder %s15, 1
      %s233 = scalar_select %p232, %s15, 1
      %s234 = smul.addr %s233, 4
      %s235 = scalar_lea.vmem %s2, %s234
      %p236 = scmp.lt.s32.totalorder %s15, 1
      %s237 = scalar_select %p236, %s15, 1
      %s238 = smul.addr %s237, 8
      %s239 = scalar_lea.vmem %s3, %s238
      %p240 = scmp.lt.s32.totalorder %s15, 1
      %s241 = scalar_select %p240, %s15, 1
      %s242 = smul.addr %s241, 4
      %s243 = scalar_lea.vmem %s4, %s242
      %v245 = vld [vmem:[%s227] sm:$0xf]
      %v246 = vld [vmem:[%s231] sm:$0xf]
      %v247 = vld [vmem:[%s235] sm:$0xf]
      %v248 = vld [vmem:[%s239] sm:$0xff]
      %vm249 = vcmask 64512
      %v251 = vsel %vm249, %v245, 0
      %v254 = vsel %vm249, %v246, 0
      %256 = vmatprep.subr.bf16.mxu0 0
      %257 = vmatpush1.bf16.xpose.msra.mxu0 0
      %258 = vmatprep.subr.bf16.mxu0 0
      %259 = vmatpush1.bf16.xpose.msra.mxu0 0
      %260 = vmatprep.subr.bf16.mxu0 0
      %261 = vmatpush1.bf16.xpose.msra.mxu0 0
      %262 = vmatprep.subr.bf16.mxu0 0
      %263 = vmatpush1.bf16.xpose.msra.mxu0 0
      %264 = vmatprep.subr.bf16.mxu0 0
      %265 = vmatpush1.bf16.xpose.msra.mxu0 0
      %266 = vmatprep.subr.bf16.mxu0 0
      %267 = vmatpush1.bf16.xpose.msra.mxu0 0
      %268 = vmatprep.subr.bf16.mxu0 0
      %269 = vmatpush1.bf16.xpose.msra.mxu0 0
      %270 = vmatprep.subr.bf16.mxu0 0
      %271 = vmatpush1.bf16.xpose.msra.mxu0 %v254
      %272 = vmatprep.subr.bf16.mxu0 0
      %273 = vmatpush2.bf16.xpose.msra.mxu0 0
      %274 = vmatprep.subr.bf16.mxu0 0
      %275 = vmatpush2.bf16.xpose.msra.mxu0 0
      %276 = vmatprep.subr.bf16.mxu0 0
      %277 = vmatpush2.bf16.xpose.msra.mxu0 0
      %278 = vmatprep.subr.bf16.mxu0 0
      %279 = vmatpush2.bf16.xpose.msra.mxu0 0
      %280 = vmatprep.subr.bf16.mxu0 0
      %281 = vmatpush2.bf16.xpose.msra.mxu0 0
      %282 = vmatprep.subr.bf16.mxu0 0
      %283 = vmatpush2.bf16.xpose.msra.mxu0 0
      %284 = vmatprep.subr.bf16.mxu0 0
      %285 = vmatpush2.bf16.xpose.msra.mxu0 0
      %286 = vmatprep.subr.bf16.mxu0 0
      %287 = vmatpush2.bf16.xpose.msra.mxu0 0
      %288 = vmatprep.mubr.bf16.mxu0 0
      %289 = vmatmul.mubr.bf16.gmra.mxu0 %v251
      %v290 = vpop.f32.mrf.mxu0
      %v291 = vadd.f32 0.0, %v290
      %v292 = vpop.f32.mrf.mxu0
      %v293 = vpop.f32.mrf.mxu0
      %v294 = vpop.f32.mrf.mxu0
      %295 = vdwg.mxu0
      %v296 = vmul.f32 %v291, 0.35355338
      %vm297 = vcmp.gt.s32.totalorder %v248, 0
      %v298 = vsel %vm297, -1e+18, %v296
      %v299 = vsel %vm249, %v298, -inf
      %300 = vmax.xlane.f32.xlu0 %v299
      %v301 = vpop.xlane.xlu0 %300
      %v302 = vsub.f32 %v298, %v301
      %v303 = vmul.f32 %v302, 1.442695
      %v304 = vpow.pop %v303
      %v305 = vsel %vm249, %v304, 0.0
      %306 = vadd.xlane.f32.xlu0 %v305
      %v307 = vpop.xlane.xlu0 %306
      %v308 = vrcp.pop %v307
      %v309 = vmul.f32 %v304, %v308
      %v310 = vpack.c.bf16 %v309, %v309
      %v312 = vsel %vm249, %v310, 0
      %vm314 = vcmask 1043456
      %v316 = vsel %vm314, %v247, 0
      %318 = vmatprep.subr.bf16.mxu0 0
      %319 = vmatpush1.bf16.msra.mxu0 0
      %320 = vmatprep.subr.bf16.mxu0 0
      %321 = vmatpush1.bf16.msra.mxu0 0
      %322 = vmatprep.subr.bf16.mxu0 0
      %323 = vmatpush1.bf16.msra.mxu0 0
      %324 = vmatprep.subr.bf16.mxu0 0
      %325 = vmatpush1.bf16.msra.mxu0 0
      %326 = vmatprep.subr.bf16.mxu0 0
      %327 = vmatpush1.bf16.msra.mxu0 0
      %328 = vmatprep.subr.bf16.mxu0 0
      %329 = vmatpush1.bf16.msra.mxu0 0
      %330 = vmatprep.subr.bf16.mxu0 0
      %331 = vmatpush1.bf16.msra.mxu0 0
      %332 = vmatprep.subr.bf16.mxu0 0
      %333 = vmatpush1.bf16.msra.mxu0 %v316
      %334 = vmatprep.subr.bf16.mxu0 0
      %335 = vmatpush2.bf16.msra.mxu0 0
      %336 = vmatprep.subr.bf16.mxu0 0
      %337 = vmatpush2.bf16.msra.mxu0 0
      %338 = vmatprep.subr.bf16.mxu0 0
      %339 = vmatpush2.bf16.msra.mxu0 0
      %340 = vmatprep.subr.bf16.mxu0 0
      %341 = vmatpush2.bf16.msra.mxu0 0
      %342 = vmatprep.subr.bf16.mxu0 0
      %343 = vmatpush2.bf16.msra.mxu0 0
      %344 = vmatprep.subr.bf16.mxu0 0
      %345 = vmatpush2.bf16.msra.mxu0 0
      %346 = vmatprep.subr.bf16.mxu0 0
      %347 = vmatpush2.bf16.msra.mxu0 0
      %348 = vmatprep.subr.bf16.mxu0 0
      %349 = vmatpush2.bf16.msra.mxu0 0
      %350 = vmatprep.mubr.bf16.mxu0 0
      %351 = vmatmul.mubr.bf16.gmra.mxu0 %v312
      %v352 = vpop.f32.mrf.mxu0
      %v353 = vadd.f32 0.0, %v352
      %v354 = vpop.f32.mrf.mxu0
      %v355 = vpop.f32.mrf.mxu0
      %v356 = vpop.f32.mrf.mxu0
      %357 = vdwg.mxu0
      %v359 = vunpack.c.l.b16 %v245
      %v360 = vpack.c.b16 %v359, %v359
      %361 = vrot.lane.b32.xlu0 %v360, 120
      %v362 = vpop.permute.xlu0 %361
      %v364 = vunpack.c.l.b16 %v246
      %v365 = vpack.c.b16 %v364, %v364
      %366 = vrot.lane.b32.xlu0 %v365, 120
      %v367 = vpop.permute.xlu0 %366
      %v369 = vsel %vm249, %v362, 0
      %v372 = vsel %vm249, %v367, 0
      %374 = vmatprep.subr.bf16.mxu0 0
      %375 = vmatpush1.bf16.xpose.msra.mxu0 0
      %376 = vmatprep.subr.bf16.mxu0 0
      %377 = vmatpush1.bf16.xpose.msra.mxu0 0
      %378 = vmatprep.subr.bf16.mxu0 0
      %379 = vmatpush1.bf16.xpose.msra.mxu0 0
      %380 = vmatprep.subr.bf16.mxu0 0
      %381 = vmatpush1.bf16.xpose.msra.mxu0 0
      %382 = vmatprep.subr.bf16.mxu0 0
      %383 = vmatpush1.bf16.xpose.msra.mxu0 0
      %384 = vmatprep.subr.bf16.mxu0 0
      %385 = vmatpush1.bf16.xpose.msra.mxu0 0
      %386 = vmatprep.subr.bf16.mxu0 0
      %387 = vmatpush1.bf16.xpose.msra.mxu0 0
      %388 = vmatprep.subr.bf16.mxu0 0
      %389 = vmatpush1.bf16.xpose.msra.mxu0 %v372
      %390 = vmatprep.subr.bf16.mxu0 0
      %391 = vmatpush2.bf16.xpose.msra.mxu0 0
      %392 = vmatprep.subr.bf16.mxu0 0
      %393 = vmatpush2.bf16.xpose.msra.mxu0 0
      %394 = vmatprep.subr.bf16.mxu0 0
      %395 = vmatpush2.bf16.xpose.msra.mxu0 0
      %396 = vmatprep.subr.bf16.mxu0 0
      %397 = vmatpush2.bf16.xpose.msra.mxu0 0
      %398 = vmatprep.subr.bf16.mxu0 0
      %399 = vmatpush2.bf16.xpose.msra.mxu0 0
      %400 = vmatprep.subr.bf16.mxu0 0
      %401 = vmatpush2.bf16.xpose.msra.mxu0 0
      %402 = vmatprep.subr.bf16.mxu0 0
      %403 = vmatpush2.bf16.xpose.msra.mxu0 0
      %404 = vmatprep.subr.bf16.mxu0 0
      %405 = vmatpush2.bf16.xpose.msra.mxu0 0
      %406 = vmatprep.mubr.bf16.mxu0 0
      %407 = vmatmul.mubr.bf16.gmra.mxu0 %v369
      %v408 = vpop.f32.mrf.mxu0
      %v409 = vadd.f32 0.0, %v408
      %v410 = vpop.f32.mrf.mxu0
      %v411 = vpop.f32.mrf.mxu0
      %v412 = vpop.f32.mrf.mxu0
      %413 = vdwg.mxu0
      %v414 = vmul.f32 %v409, 0.35355338
      %v415 = vsel %vm297, -1e+18, %v414
      %v416 = vsel %vm249, %v415, -inf
      %417 = vmax.xlane.f32.xlu0 %v416
      %v418 = vpop.xlane.xlu0 %417
      %v419 = vsub.f32 %v415, %v418
      %v420 = vmul.f32 %v419, 1.442695
      %v421 = vpow.pop %v420
      %v422 = vsel %vm249, %v421, 0.0
      %423 = vadd.xlane.f32.xlu0 %v422
      %v424 = vpop.xlane.xlu0 %423
      %v425 = vrcp.pop %v424
      %v426 = vmul.f32 %v421, %v425
      %v427 = vpack.c.bf16 %v426, %v426
      %v429 = vunpack.c.l.b16 %v247
      %v430 = vpack.c.b16 %v429, %v429
      %431 = vrot.lane.b32.xlu0 %v430, 120
      %v432 = vpop.permute.xlu0 %431
      %v434 = vsel %vm249, %v427, 0
      %v437 = vsel %vm314, %v432, 0
      %439 = vmatprep.subr.bf16.mxu0 0
      %440 = vmatpush1.bf16.msra.mxu0 0
      %441 = vmatprep.subr.bf16.mxu0 0
      %442 = vmatpush1.bf16.msra.mxu0 0
      %443 = vmatprep.subr.bf16.mxu0 0
      %444 = vmatpush1.bf16.msra.mxu0 0
      %445 = vmatprep.subr.bf16.mxu0 0
      %446 = vmatpush1.bf16.msra.mxu0 0
      %447 = vmatprep.subr.bf16.mxu0 0
      %448 = vmatpush1.bf16.msra.mxu0 0
      %449 = vmatprep.subr.bf16.mxu0 0
      %450 = vmatpush1.bf16.msra.mxu0 0
      %451 = vmatprep.subr.bf16.mxu0 0
      %452 = vmatpush1.bf16.msra.mxu0 0
      %453 = vmatprep.subr.bf16.mxu0 0
      %454 = vmatpush1.bf16.msra.mxu0 %v437
      %455 = vmatprep.subr.bf16.mxu0 0
      %456 = vmatpush2.bf16.msra.mxu0 0
      %457 = vmatprep.subr.bf16.mxu0 0
      %458 = vmatpush2.bf16.msra.mxu0 0
      %459 = vmatprep.subr.bf16.mxu0 0
      %460 = vmatpush2.bf16.msra.mxu0 0
      %461 = vmatprep.subr.bf16.mxu0 0
      %462 = vmatpush2.bf16.msra.mxu0 0
      %463 = vmatprep.subr.bf16.mxu0 0
      %464 = vmatpush2.bf16.msra.mxu0 0
      %465 = vmatprep.subr.bf16.mxu0 0
      %466 = vmatpush2.bf16.msra.mxu0 0
      %467 = vmatprep.subr.bf16.mxu0 0
      %468 = vmatpush2.bf16.msra.mxu0 0
      %469 = vmatprep.subr.bf16.mxu0 0
      %470 = vmatpush2.bf16.msra.mxu0 0
      %471 = vmatprep.mubr.bf16.mxu0 0
      %472 = vmatmul.mubr.bf16.gmra.mxu0 %v434
      %v473 = vpop.f32.mrf.mxu0
      %v474 = vadd.f32 0.0, %v473
      %v475 = vpop.f32.mrf.mxu0
      %v476 = vpop.f32.mrf.mxu0
      %v477 = vpop.f32.mrf.mxu0
      %478 = vdwg.mxu0
      %479 = vrot.lane.b32.xlu0 %v360, 112
      %v480 = vpop.permute.xlu0 %479
      %481 = vrot.lane.b32.xlu0 %v365, 112
      %v482 = vpop.permute.xlu0 %481
      %v484 = vsel %vm249, %v480, 0
      %v487 = vsel %vm249, %v482, 0
      %489 = vmatprep.subr.bf16.mxu0 0
      %490 = vmatpush1.bf16.xpose.msra.mxu0 0
      %491 = vmatprep.subr.bf16.mxu0 0
      %492 = vmatpush1.bf16.xpose.msra.mxu0 0
      %493 = vmatprep.subr.bf16.mxu0 0
      %494 = vmatpush1.bf16.xpose.msra.mxu0 0
      %495 = vmatprep.subr.bf16.mxu0 0
      %496 = vmatpush1.bf16.xpose.msra.mxu0 0
      %497 = vmatprep.subr.bf16.mxu0 0
      %498 = vmatpush1.bf16.xpose.msra.mxu0 0
      %499 = vmatprep.subr.bf16.mxu0 0
      %500 = vmatpush1.bf16.xpose.msra.mxu0 0
      %501 = vmatprep.subr.bf16.mxu0 0
      %502 = vmatpush1.bf16.xpose.msra.mxu0 0
      %503 = vmatprep.subr.bf16.mxu0 0
      %504 = vmatpush1.bf16.xpose.msra.mxu0 %v487
      %505 = vmatprep.subr.bf16.mxu0 0
      %506 = vmatpush2.bf16.xpose.msra.mxu0 0
      %507 = vmatprep.subr.bf16.mxu0 0
      %508 = vmatpush2.bf16.xpose.msra.mxu0 0
      %509 = vmatprep.subr.bf16.mxu0 0
      %510 = vmatpush2.bf16.xpose.msra.mxu0 0
      %511 = vmatprep.subr.bf16.mxu0 0
      %512 = vmatpush2.bf16.xpose.msra.mxu0 0
      %513 = vmatprep.subr.bf16.mxu0 0
      %514 = vmatpush2.bf16.xpose.msra.mxu0 0
      %515 = vmatprep.subr.bf16.mxu0 0
      %516 = vmatpush2.bf16.xpose.msra.mxu0 0
      %517 = vmatprep.subr.bf16.mxu0 0
      %518 = vmatpush2.bf16.xpose.msra.mxu0 0
      %519 = vmatprep.subr.bf16.mxu0 0
      %520 = vmatpush2.bf16.xpose.msra.mxu0 0
      %521 = vmatprep.mubr.bf16.mxu0 0
      %522 = vmatmul.mubr.bf16.gmra.mxu0 %v484
      %v523 = vpop.f32.mrf.mxu0
      %v524 = vadd.f32 0.0, %v523
      %v525 = vpop.f32.mrf.mxu0
      %v526 = vpop.f32.mrf.mxu0
      %v527 = vpop.f32.mrf.mxu0
      %528 = vdwg.mxu0
      %v529 = vmul.f32 %v524, 0.35355338
      %v530 = vsel %vm297, -1e+18, %v529
      %v531 = vsel %vm249, %v530, -inf
      %532 = vmax.xlane.f32.xlu0 %v531
      %v533 = vpop.xlane.xlu0 %532
      %v534 = vsub.f32 %v530, %v533
      %v535 = vmul.f32 %v534, 1.442695
      %v536 = vpow.pop %v535
      %v537 = vsel %vm249, %v536, 0.0
      %538 = vadd.xlane.f32.xlu0 %v537
      %v539 = vpop.xlane.xlu0 %538
      %v540 = vrcp.pop %v539
      %v541 = vmul.f32 %v536, %v540
      %v542 = vpack.c.bf16 %v541, %v541
      %543 = vrot.lane.b32.xlu0 %v430, 112
      %v544 = vpop.permute.xlu0 %543
      %v546 = vsel %vm249, %v542, 0
      %v549 = vsel %vm314, %v544, 0
      %551 = vmatprep.subr.bf16.mxu0 0
      %552 = vmatpush1.bf16.msra.mxu0 0
      %553 = vmatprep.subr.bf16.mxu0 0
      %554 = vmatpush1.bf16.msra.mxu0 0
      %555 = vmatprep.subr.bf16.mxu0 0
      %556 = vmatpush1.bf16.msra.mxu0 0
      %557 = vmatprep.subr.bf16.mxu0 0
      %558 = vmatpush1.bf16.msra.mxu0 0
      %559 = vmatprep.subr.bf16.mxu0 0
      %560 = vmatpush1.bf16.msra.mxu0 0
      %561 = vmatprep.subr.bf16.mxu0 0
      %562 = vmatpush1.bf16.msra.mxu0 0
      %563 = vmatprep.subr.bf16.mxu0 0
      %564 = vmatpush1.bf16.msra.mxu0 0
      %565 = vmatprep.subr.bf16.mxu0 0
      %566 = vmatpush1.bf16.msra.mxu0 %v549
      %567 = vmatprep.subr.bf16.mxu0 0
      %568 = vmatpush2.bf16.msra.mxu0 0
      %569 = vmatprep.subr.bf16.mxu0 0
      %570 = vmatpush2.bf16.msra.mxu0 0
      %571 = vmatprep.subr.bf16.mxu0 0
      %572 = vmatpush2.bf16.msra.mxu0 0
      %573 = vmatprep.subr.bf16.mxu0 0
      %574 = vmatpush2.bf16.msra.mxu0 0
      %575 = vmatprep.subr.bf16.mxu0 0
      %576 = vmatpush2.bf16.msra.mxu0 0
      %577 = vmatprep.subr.bf16.mxu0 0
      %578 = vmatpush2.bf16.msra.mxu0 0
      %579 = vmatprep.subr.bf16.mxu0 0
      %580 = vmatpush2.bf16.msra.mxu0 0
      %581 = vmatprep.subr.bf16.mxu0 0
      %582 = vmatpush2.bf16.msra.mxu0 0
      %583 = vmatprep.mubr.bf16.mxu0 0
      %584 = vmatmul.mubr.bf16.gmra.mxu0 %v546
      %v585 = vpop.f32.mrf.mxu0
      %v586 = vadd.f32 0.0, %v585
      %v587 = vpop.f32.mrf.mxu0
      %v588 = vpop.f32.mrf.mxu0
      %v589 = vpop.f32.mrf.mxu0
      %590 = vdwg.mxu0
      %591 = vrot.lane.b32.xlu0 %v360, 104
      %v592 = vpop.permute.xlu0 %591
      %593 = vrot.lane.b32.xlu0 %v365, 104
      %v594 = vpop.permute.xlu0 %593
      %v596 = vsel %vm249, %v592, 0
      %v599 = vsel %vm249, %v594, 0
      %601 = vmatprep.subr.bf16.mxu0 0
      %602 = vmatpush1.bf16.xpose.msra.mxu0 0
      %603 = vmatprep.subr.bf16.mxu0 0
      %604 = vmatpush1.bf16.xpose.msra.mxu0 0
      %605 = vmatprep.subr.bf16.mxu0 0
      %606 = vmatpush1.bf16.xpose.msra.mxu0 0
      %607 = vmatprep.subr.bf16.mxu0 0
      %608 = vmatpush1.bf16.xpose.msra.mxu0 0
      %609 = vmatprep.subr.bf16.mxu0 0
      %610 = vmatpush1.bf16.xpose.msra.mxu0 0
      %611 = vmatprep.subr.bf16.mxu0 0
      %612 = vmatpush1.bf16.xpose.msra.mxu0 0
      %613 = vmatprep.subr.bf16.mxu0 0
      %614 = vmatpush1.bf16.xpose.msra.mxu0 0
      %615 = vmatprep.subr.bf16.mxu0 0
      %616 = vmatpush1.bf16.xpose.msra.mxu0 %v599
      %617 = vmatprep.subr.bf16.mxu0 0
      %618 = vmatpush2.bf16.xpose.msra.mxu0 0
      %619 = vmatprep.subr.bf16.mxu0 0
      %620 = vmatpush2.bf16.xpose.msra.mxu0 0
      %621 = vmatprep.subr.bf16.mxu0 0
      %622 = vmatpush2.bf16.xpose.msra.mxu0 0
      %623 = vmatprep.subr.bf16.mxu0 0
      %624 = vmatpush2.bf16.xpose.msra.mxu0 0
      %625 = vmatprep.subr.bf16.mxu0 0
      %626 = vmatpush2.bf16.xpose.msra.mxu0 0
      %627 = vmatprep.subr.bf16.mxu0 0
      %628 = vmatpush2.bf16.xpose.msra.mxu0 0
      %629 = vmatprep.subr.bf16.mxu0 0
      %630 = vmatpush2.bf16.xpose.msra.mxu0 0
      %631 = vmatprep.subr.bf16.mxu0 0
      %632 = vmatpush2.bf16.xpose.msra.mxu0 0
      %633 = vmatprep.mubr.bf16.mxu0 0
      %634 = vmatmul.mubr.bf16.gmra.mxu0 %v596
      %v635 = vpop.f32.mrf.mxu0
      %v636 = vadd.f32 0.0, %v635
      %v637 = vpop.f32.mrf.mxu0
      %v638 = vpop.f32.mrf.mxu0
      %v639 = vpop.f32.mrf.mxu0
      %640 = vdwg.mxu0
      %v641 = vmul.f32 %v636, 0.35355338
      %v642 = vsel %vm297, -1e+18, %v641
      %v643 = vsel %vm249, %v642, -inf
      %644 = vmax.xlane.f32.xlu0 %v643
      %v645 = vpop.xlane.xlu0 %644
      %v646 = vsub.f32 %v642, %v645
      %v647 = vmul.f32 %v646, 1.442695
      %v648 = vpow.pop %v647
      %v649 = vsel %vm249, %v648, 0.0
      %650 = vadd.xlane.f32.xlu0 %v649
      %v651 = vpop.xlane.xlu0 %650
      %v652 = vrcp.pop %v651
      %v653 = vmul.f32 %v648, %v652
      %v654 = vpack.c.bf16 %v653, %v653
      %655 = vrot.lane.b32.xlu0 %v430, 104
      %v656 = vpop.permute.xlu0 %655
      %v658 = vsel %vm249, %v654, 0
      %v661 = vsel %vm314, %v656, 0
      %663 = vmatprep.subr.bf16.mxu0 0
      %664 = vmatpush1.bf16.msra.mxu0 0
      %665 = vmatprep.subr.bf16.mxu0 0
      %666 = vmatpush1.bf16.msra.mxu0 0
      %667 = vmatprep.subr.bf16.mxu0 0
      %668 = vmatpush1.bf16.msra.mxu0 0
      %669 = vmatprep.subr.bf16.mxu0 0
      %670 = vmatpush1.bf16.msra.mxu0 0
      %671 = vmatprep.subr.bf16.mxu0 0
      %672 = vmatpush1.bf16.msra.mxu0 0
      %673 = vmatprep.subr.bf16.mxu0 0
      %674 = vmatpush1.bf16.msra.mxu0 0
      %675 = vmatprep.subr.bf16.mxu0 0
      %676 = vmatpush1.bf16.msra.mxu0 0
      %677 = vmatprep.subr.bf16.mxu0 0
      %678 = vmatpush1.bf16.msra.mxu0 %v661
      %679 = vmatprep.subr.bf16.mxu0 0
      %680 = vmatpush2.bf16.msra.mxu0 0
      %681 = vmatprep.subr.bf16.mxu0 0
      %682 = vmatpush2.bf16.msra.mxu0 0
      %683 = vmatprep.subr.bf16.mxu0 0
      %684 = vmatpush2.bf16.msra.mxu0 0
      %685 = vmatprep.subr.bf16.mxu0 0
      %686 = vmatpush2.bf16.msra.mxu0 0
      %687 = vmatprep.subr.bf16.mxu0 0
      %688 = vmatpush2.bf16.msra.mxu0 0
      %689 = vmatprep.subr.bf16.mxu0 0
      %690 = vmatpush2.bf16.msra.mxu0 0
      %691 = vmatprep.subr.bf16.mxu0 0
      %692 = vmatpush2.bf16.msra.mxu0 0
      %693 = vmatprep.subr.bf16.mxu0 0
      %694 = vmatpush2.bf16.msra.mxu0 0
      %695 = vmatprep.mubr.bf16.mxu0 0
      %696 = vmatmul.mubr.bf16.gmra.mxu0 %v658
      %v697 = vpop.f32.mrf.mxu0
      %v698 = vadd.f32 0.0, %v697
      %v699 = vpop.f32.mrf.mxu0
      %v700 = vpop.f32.mrf.mxu0
      %v701 = vpop.f32.mrf.mxu0
      %702 = vdwg.mxu0
      %704 = vrot.lane.b32.xlu0 %v474, 8
      %v705 = vpop.permute.xlu0 %704
      %708 = vrot.lane.b32.xlu0 %v586, 16
      %v709 = vpop.permute.xlu0 %708
      %712 = vrot.lane.b32.xlu0 %v698, 24
      %v713 = vpop.permute.xlu0 %712
      %v715 = vsel %vm249, %v353, %v705
      %vm716 = vcmask 130048
      %v717 = vsel %vm716, %v715, %v709
      %vm718 = vcmask 195584
      %v719 = vsel %vm718, %v717, %v713
      %v720 = vpack.c.bf16 %v719, %v719
      %vm721 = vcmask 257024
      %722 = vst.msk [vmem:[%s243] sm:$0xf] %vm721, %v720
      %p723 = scmp.lt.s32.totalorder %s15, 1
      %s724 = scalar_select %p723, %s15, 1
      %s725 = smul.addr %s724, 4
      %s726 = scalar_lea.vmem %s4, %s725
      // Predicated region
      $region37: #{transformer_decoder_layer.10} parent=35 // pred_check
        %p727 = pneg %p137
      $region38: #{transformer_decoder_layer.10} parent=35 // pred_check_branch
        %729 = sbr.rel (%p727) target = $region40
      $region39: #{transformer_decoder_layer.10} parent=35 // pred_region
        _
      $region40: #{transformer_decoder_layer.10} parent=35 // pred_fallthru
        _
    $region36: #{transformer_decoder_layer.10} parent=5 // pred_fallthru
      _
    %p730 = scmp.le.s32.totalorder 2, %s10
    // Predicated region
    $region41: #{transformer_decoder_layer.10} parent=5 // pred_check
      %p731 = pneg %p730
    $region42: #{transformer_decoder_layer.10} parent=5 // pred_check_branch
      %733 = sbr.rel (%p731) target = $region44
    $region43: #{transformer_decoder_layer.10} parent=5 // pred_region
      %s734 = ssub.s32 %s10, 2
      // Predicated region
      $region45: #{transformer_decoder_layer.10} parent=43 // pred_check
        %p735 = pneg %p143
      $region46: #{transformer_decoder_layer.10} parent=43 // pred_check_branch
        %737 = sbr.rel (%p735) target = $region48
      $region47: #{transformer_decoder_layer.10} parent=43 // pred_region
        %p738 = scmp.lt.s32.totalorder %s16, 1
        %s739 = scalar_select %p738, %s16, 1
        %s740 = smul.addr %s739, 4
        %s741 = scalar_lea.vmem %s4, %s740
      $region48: #{transformer_decoder_layer.10} parent=43 // pred_fallthru
        _
    $region44: #{transformer_decoder_layer.10} parent=5 // pred_fallthru
      _
  $region6: #{transformer_decoder_layer.10} parent=0 // loop_footer
    %s14 = sadd.s32 1, %s10
  $region7: #{transformer_decoder_layer.10} parent=0 // loop_footer_branch
    %9 = sbr.rel target = $region3
  $region8: #{transformer_decoder_layer.10} parent=0 // loop_exit
    _

// kernel: transformer_decoder_layer.13
$region0: #{transformer_decoder_layer.13}
  #allocation0 [shape = 'u32[]', space=smem, size = 0x4, offset = 0x4, fixed_abs, tag = 'smem constant byte address 0x4 - core index']
  #allocation1 [shape = 'u32[144,128]{1,0:T(1,128)}', space=vmem, size = 0x12000, scoped, tag = 'internal scratch']
  %s0 = inlined_call_operand.vmem [shape: bf16[2,8,32], index: 0, kind: input, shape index: {}]
  %s1 = inlined_call_operand.vmem [shape: bf16[2,8,32], index: 1, kind: input, shape index: {}]
  %s2 = inlined_call_operand.vmem [shape: bf16[2,8,32], index: 2, kind: input, shape index: {}]
  %s3 = inlined_call_operand.vmem [shape: s32[2,8,8], index: 3, kind: input, shape index: {}]
  %s4 = inlined_call_operand.vmem [shape: bf16[2,8,32], index: 4, kind: output, shape index: {0}]
  %s5 = inlined_call_operand.hbm [shape: f32[2,8,8], index: 5, kind: output, shape index: {1}]
  %6 = xla_tuple %s4, %s5
  %s7 = sld [smem:[#allocation0]]
  $region57: #{transformer_decoder_layer.13} parent=0
    _
  %s9 = ssub.s32 1, %s7
  %s10 = scalar_select 0, %s9, %s7
  $region1: #{transformer_decoder_layer.13} parent=0
    #allocation2 [shape = 'u8[8192]{0}', space=vmem, size = 0x2000, scoped, tag = 'output window, operand 1']
    #allocation3 [shape = 's32[2]{0}', space=sflag, size = 0x8, scoped, tag = 'scoped memory for transformer_decoder_layer.13']
    %11 = vsyncpa [#allocation3], 0
    %s12 = scalar_lea.sflag [#allocation3], 1
    %13 = vsyncpa %s12, 0
    loop: start=0, step=1, limit=4
    $region2: #{transformer_decoder_layer.13} parent=1 // loop_pre_header
      _
    $region3: #{transformer_decoder_layer.13} parent=1 // loop_header
      %s15 = sphi 0, %s19
      %p16 = scmp.ge.s32.totalorder %s15, 4
      %s25 = sphi 0, %s27
      %s28 = sphi 0, %s25
      %s29 = sphi 0, %s28
      %s45 = sphi 0, %s29
      %s51 = sphi 0, %s53
      %s54 = sphi 0, %s51
      %s55 = sphi 0, %s54
      %s71 = sphi 0, %s55
      %s77 = sphi 0, %s79
      %s80 = sphi 0, %s77
      %s81 = sphi 0, %s80
      %s97 = sphi 0, %s81
      %s103 = sphi 0, %s105
      %s106 = sphi 0, %s103
      %s107 = sphi 0, %s106
      %s123 = sphi 0, %s107
      %s129 = sphi 0, %s131
      %s132 = sphi 0, %s129
      %s133 = sphi 0, %s132
      %s149 = sphi 0, %s133
      %s155 = sphi 0, %s157
      %s158 = sphi 0, %s155
      %s159 = sphi 0, %s158
      %s175 = sphi 0, %s159
    $region4: #{transformer_decoder_layer.13} parent=1 // loop_header_branch
      %18 = sbr.rel (%p16) target = $region8
    $region5: #{transformer_decoder_layer.13} parent=1 // loop_body
      %s20 = ssub.s32 %s15, 1
      %s21 = ssub.s32 %s15, 2
      %s22 = sadd.s32 %s15, 1
      %s23 = ssub.s32 %s15, %s22
      %p24 = scmp.eq.s32.totalorder %s23, 0
      %s26 = sadd.s32 %s25, 1
      %s27 = scalar_select %p24, %s25, %s26
      %p30 = pneg %p24
      %p31 = scmp.eq.s32.totalorder %s15, 1
      %p32 = por %p30, %p31
      %p33 = scmp.ne.s32.totalorder %s25, %s28
      %p34 = scmp.eq.s32.totalorder %s15, 0
      %p35 = por %p33, %p34
      %p36 = scmp.ne.s32.totalorder %s25, %s28
      %p37 = scmp.eq.s32.totalorder %s20, 1
      %p38 = por %p36, %p37
      %p39 = scmp.ne.s32.totalorder %s28, %s29
      %p40 = scmp.eq.s32.totalorder %s20, 0
      %p41 = por %p39, %p40
      %p42 = scmp.ne.s32.totalorder %s28, %s29
      %p43 = scmp.eq.s32.totalorder %s21, 1
      %p44 = por %p42, %p43
      %p46 = scmp.ne.s32.totalorder %s29, %s45
      %p47 = scmp.eq.s32.totalorder %s21, 0
      %p48 = por %p46, %p47
      %s49 = ssub.s32 %s15, %s22
      %p50 = scmp.eq.s32.totalorder %s49, 0
      %s52 = sadd.s32 %s51, 1
      %s53 = scalar_select %p50, %s51, %s52
      %p56 = pneg %p50
      %p57 = scmp.eq.s32.totalorder %s15, 1
      %p58 = por %p56, %p57
      %p59 = scmp.ne.s32.totalorder %s51, %s54
      %p60 = scmp.eq.s32.totalorder %s15, 0
      %p61 = por %p59, %p60
      %p62 = scmp.ne.s32.totalorder %s51, %s54
      %p63 = scmp.eq.s32.totalorder %s20, 1
      %p64 = por %p62, %p63
      %p65 = scmp.ne.s32.totalorder %s54, %s55
      %p66 = scmp.eq.s32.totalorder %s20, 0
      %p67 = por %p65, %p66
      %p68 = scmp.ne.s32.totalorder %s54, %s55
      %p69 = scmp.eq.s32.totalorder %s21, 1
      %p70 = por %p68, %p69
      %p72 = scmp.ne.s32.totalorder %s55, %s71
      %p73 = scmp.eq.s32.totalorder %s21, 0
      %p74 = por %p72, %p73
      %s75 = ssub.s32 %s15, %s22
      %p76 = scmp.eq.s32.totalorder %s75, 0
      %s78 = sadd.s32 %s77, 1
      %s79 = scalar_select %p76, %s77, %s78
      %p82 = pneg %p76
      %p83 = scmp.eq.s32.totalorder %s15, 1
      %p84 = por %p82, %p83
      %p85 = scmp.ne.s32.totalorder %s77, %s80
      %p86 = scmp.eq.s32.totalorder %s15, 0
      %p87 = por %p85, %p86
      %p88 = scmp.ne.s32.totalorder %s77, %s80
      %p89 = scmp.eq.s32.totalorder %s20, 1
      %p90 = por %p88, %p89
      %p91 = scmp.ne.s32.totalorder %s80, %s81
      %p92 = scmp.eq.s32.totalorder %s20, 0
      %p93 = por %p91, %p92
      %p94 = scmp.ne.s32.totalorder %s80, %s81
      %p95 = scmp.eq.s32.totalorder %s21, 1
      %p96 = por %p94, %p95
      %p98 = scmp.ne.s32.totalorder %s81, %s97
      %p99 = scmp.eq.s32.totalorder %s21, 0
      %p100 = por %p98, %p99
      %s101 = ssub.s32 %s15, %s22
      %p102 = scmp.eq.s32.totalorder %s101, 0
      %s104 = sadd.s32 %s103, 1
      %s105 = scalar_select %p102, %s103, %s104
      %p108 = pneg %p102
      %p109 = scmp.eq.s32.totalorder %s15, 1
      %p110 = por %p108, %p109
      %p111 = scmp.ne.s32.totalorder %s103, %s106
      %p112 = scmp.eq.s32.totalorder %s15, 0
      %p113 = por %p111, %p112
      %p114 = scmp.ne.s32.totalorder %s103, %s106
      %p115 = scmp.eq.s32.totalorder %s20, 1
      %p116 = por %p114, %p115
      %p117 = scmp.ne.s32.totalorder %s106, %s107
      %p118 = scmp.eq.s32.totalorder %s20, 0
      %p119 = por %p117, %p118
      %p120 = scmp.ne.s32.totalorder %s106, %s107
      %p121 = scmp.eq.s32.totalorder %s21, 1
      %p122 = por %p120, %p121
      %p124 = scmp.ne.s32.totalorder %s107, %s123
      %p125 = scmp.eq.s32.totalorder %s21, 0
      %p126 = por %p124, %p125
      %s127 = ssub.s32 %s15, %s22
      %p128 = scmp.eq.s32.totalorder %s127, 0
      %s130 = sadd.s32 %s129, 1
      %s131 = scalar_select %p128, %s129, %s130
      %p134 = pneg %p128
      %p135 = scmp.eq.s32.totalorder %s15, 1
      %p136 = por %p134, %p135
      %p137 = scmp.ne.s32.totalorder %s129, %s132
      %p138 = scmp.eq.s32.totalorder %s15, 0
      %p139 = por %p137, %p138
      %p140 = scmp.ne.s32.totalorder %s129, %s132
      %p141 = scmp.eq.s32.totalorder %s20, 1
      %p142 = por %p140, %p141
      %p143 = scmp.ne.s32.totalorder %s132, %s133
      %p144 = scmp.eq.s32.totalorder %s20, 0
      %p145 = por %p143, %p144
      %p146 = scmp.ne.s32.totalorder %s132, %s133
      %p147 = scmp.eq.s32.totalorder %s21, 1
      %p148 = por %p146, %p147
      %p150 = scmp.ne.s32.totalorder %s133, %s149
      %p151 = scmp.eq.s32.totalorder %s21, 0
      %p152 = por %p150, %p151
      %s153 = ssub.s32 %s15, %s22
      %p154 = scmp.eq.s32.totalorder %s153, 0
      %s156 = sadd.s32 %s155, 1
      %s157 = scalar_select %p154, %s155, %s156
      %p160 = pneg %p154
      %p161 = scmp.eq.s32.totalorder %s15, 1
      %p162 = por %p160, %p161
      %p163 = scmp.ne.s32.totalorder %s155, %s158
      %p164 = scmp.eq.s32.totalorder %s15, 0
      %p165 = por %p163, %p164
      %p166 = scmp.ne.s32.totalorder %s155, %s158
      %p167 = scmp.eq.s32.totalorder %s20, 1
      %p168 = por %p166, %p167
      %p169 = scmp.ne.s32.totalorder %s158, %s159
      %p170 = scmp.eq.s32.totalorder %s20, 0
      %p171 = por %p169, %p170
      %p172 = scmp.ne.s32.totalorder %s158, %s159
      %p173 = scmp.eq.s32.totalorder %s21, 1
      %p174 = por %p172, %p173
      %p176 = scmp.ne.s32.totalorder %s159, %s175
      %p177 = scmp.eq.s32.totalorder %s21, 0
      %p178 = por %p176, %p177
      %p179 = scmp.le.s32.totalorder 1, %s15
      %p180 = scmp.lt.s32.totalorder %s15, 3
      %p181 = pnand %p179, %p180
      %p182 = pneg %p181
      // Predicated region
      $region9: #{transformer_decoder_layer.13} parent=5 // pred_check
        _
      $region10: #{transformer_decoder_layer.13} parent=5 // pred_check_branch
        %184 = sbr.rel (%p181) target = $region12
      $region11: #{transformer_decoder_layer.13} parent=5 // pred_region
        %s185 = ssub.s32 %s15, 1
      $region12: #{transformer_decoder_layer.13} parent=5 // pred_fallthru
        _
      %p186 = scmp.lt.s32.totalorder %s15, 2
      // Predicated region
      $region13: #{transformer_decoder_layer.13} parent=5 // pred_check
        %p187 = pneg %p186
      $region14: #{transformer_decoder_layer.13} parent=5 // pred_check_branch
        %189 = sbr.rel (%p187) target = $region16
      $region15: #{transformer_decoder_layer.13} parent=5 // pred_region
        // Predicated region
        $region17: #{transformer_decoder_layer.13} parent=15 // pred_check
          %p190 = pneg %p35
        $region18: #{transformer_decoder_layer.13} parent=15 // pred_check_branch
          %192 = sbr.rel (%p190) target = $region20
        $region19: #{transformer_decoder_layer.13} parent=15 // pred_region
          %p193 = scmp.lt.s32.totalorder %s15, 1
          %s194 = scalar_select %p193, %s15, 1
          %s195 = smul.addr %s194, 4
          %s196 = scalar_lea.vmem %s0, %s195
        $region20: #{transformer_decoder_layer.13} parent=15 // pred_fallthru
          _
        // Predicated region
        $region21: #{transformer_decoder_layer.13} parent=15 // pred_check
          %p197 = pneg %p61
        $region22: #{transformer_decoder_layer.13} parent=15 // pred_check_branch
          %199 = sbr.rel (%p197) target = $region24
        $region23: #{transformer_decoder_layer.13} parent=15 // pred_region
          %p200 = scmp.lt.s32.totalorder %s15, 1
          %s201 = scalar_select %p200, %s15, 1
          %s202 = smul.addr %s201, 4
          %s203 = scalar_lea.vmem %s1, %s202
        $region24: #{transformer_decoder_layer.13} parent=15 // pred_fallthru
          _
        // Predicated region
        $region25: #{transformer_decoder_layer.13} parent=15 // pred_check
          %p204 = pneg %p87
        $region26: #{transformer_decoder_layer.13} parent=15 // pred_check_branch
          %206 = sbr.rel (%p204) target = $region28
        $region27: #{transformer_decoder_layer.13} parent=15 // pred_region
          %p207 = scmp.lt.s32.totalorder %s15, 1
          %s208 = scalar_select %p207, %s15, 1
          %s209 = smul.addr %s208, 4
          %s210 = scalar_lea.vmem %s2, %s209
        $region28: #{transformer_decoder_layer.13} parent=15 // pred_fallthru
          _
        // Predicated region
        $region29: #{transformer_decoder_layer.13} parent=15 // pred_check
          %p211 = pneg %p113
        $region30: #{transformer_decoder_layer.13} parent=15 // pred_check_branch
          %213 = sbr.rel (%p211) target = $region32
        $region31: #{transformer_decoder_layer.13} parent=15 // pred_region
          %p214 = scmp.lt.s32.totalorder %s15, 1
          %s215 = scalar_select %p214, %s15, 1
          %s216 = smul.addr %s215, 8
          %s217 = scalar_lea.vmem %s3, %s216
        $region32: #{transformer_decoder_layer.13} parent=15 // pred_fallthru
          _
      $region16: #{transformer_decoder_layer.13} parent=5 // pred_fallthru
        _
      %p218 = scmp.le.s32.totalorder 1, %s15
      %p219 = scmp.lt.s32.totalorder %s15, 3
      %p220 = pnand %p218, %p219
      %p221 = pneg %p220
      // Predicated region
      $region33: #{transformer_decoder_layer.13} parent=5 // pred_check
        _
      $region34: #{transformer_decoder_layer.13} parent=5 // pred_check_branch
        %223 = sbr.rel (%p220) target = $region36
      $region35: #{transformer_decoder_layer.13} parent=5 // pred_region
        %s224 = ssub.s32 %s15, 1
        %p225 = scmp.lt.s32.totalorder %s20, 1
        %s226 = scalar_select %p225, %s20, 1
        %s227 = smul.addr %s226, 4
        %s228 = scalar_lea.vmem %s0, %s227
        %p229 = pneg %p41
        %p230 = pneg %p38
        %p231 = scmp.lt.s32.totalorder %s20, 1
        %s232 = scalar_select %p231, %s20, 1
        %s233 = smul.addr %s232, 4
        %s234 = scalar_lea.vmem %s1, %s233
        %p235 = pneg %p67
        %p236 = pneg %p64
        %p237 = scmp.lt.s32.totalorder %s20, 1
        %s238 = scalar_select %p237, %s20, 1
        %s239 = smul.addr %s238, 4
        %s240 = scalar_lea.vmem %s2, %s239
        %p241 = pneg %p93
        %p242 = pneg %p90
        %p243 = scmp.lt.s32.totalorder %s20, 1
        %s244 = scalar_select %p243, %s20, 1
        %s245 = smul.addr %s244, 8
        %s246 = scalar_lea.vmem %s3, %s245
        %p247 = pneg %p119
        %p248 = pneg %p116
        %p249 = pneg %p145
        %p250 = pneg %p142
        %p251 = scmp.lt.s32.totalorder %s20, 1
        %s252 = scalar_select %p251, %s20, 1
        %s253 = smul.addr %s252, 4
        %s254 = scalar_lea.vmem %s4, %s253
        %p255 = pneg %p171
        %p256 = pneg %p168
        %s257 = sand.u32 %s158, 1
        %s258 = scalar_lea.sflag [#allocation3], %s257
        %s259 = sand.u32 %s158, 1
        %s260 = smul.addr %s259, 8
        %s261 = scalar_lea.vmem [#allocation2], %s260
        %p262 = scmp.lt.s32.totalorder %s20, 1
        %s263 = scalar_select %p262, %s20, 1
        %s264 = smul.addr %s263, 4
        %s265 = scalar_lea.vmem %s0, %s264
        %p266 = scmp.lt.s32.totalorder %s20, 1
        %s267 = scalar_select %p266, %s20, 1
        %s268 = smul.addr %s267, 4
        %s269 = scalar_lea.vmem %s1, %s268
        %p270 = scmp.lt.s32.totalorder %s20, 1
        %s271 = scalar_select %p270, %s20, 1
        %s272 = smul.addr %s271, 4
        %s273 = scalar_lea.vmem %s2, %s272
        %p274 = scmp.lt.s32.totalorder %s20, 1
        %s275 = scalar_select %p274, %s20, 1
        %s276 = smul.addr %s275, 8
        %s277 = scalar_lea.vmem %s3, %s276
        %p278 = scmp.lt.s32.totalorder %s20, 1
        %s279 = scalar_select %p278, %s20, 1
        %s280 = smul.addr %s279, 4
        %s281 = scalar_lea.vmem %s4, %s280
        %v283 = vld [vmem:[%s265] sm:$0xf]
        %v284 = vld [vmem:[%s269] sm:$0xf]
        %v285 = vld [vmem:[%s273] sm:$0xf]
        %v286 = vld [vmem:[%s277] sm:$0xff]
        %vm287 = vcmask 64512
        %v289 = vsel %vm287, %v283, 0
        %v292 = vsel %vm287, %v284, 0
        %294 = vmatprep.subr.bf16.mxu0 0
        %295 = vmatpush1.bf16.xpose.msra.mxu0 0
        %296 = vmatprep.subr.bf16.mxu0 0
        %297 = vmatpush1.bf16.xpose.msra.mxu0 0
        %298 = vmatprep.subr.bf16.mxu0 0
        %299 = vmatpush1.bf16.xpose.msra.mxu0 0
        %300 = vmatprep.subr.bf16.mxu0 0
        %301 = vmatpush1.bf16.xpose.msra.mxu0 0
        %302 = vmatprep.subr.bf16.mxu0 0
        %303 = vmatpush1.bf16.xpose.msra.mxu0 0
        %304 = vmatprep.subr.bf16.mxu0 0
        %305 = vmatpush1.bf16.xpose.msra.mxu0 0
        %306 = vmatprep.subr.bf16.mxu0 0
        %307 = vmatpush1.bf16.xpose.msra.mxu0 0
        %308 = vmatprep.subr.bf16.mxu0 0
        %309 = vmatpush1.bf16.xpose.msra.mxu0 %v292
        %310 = vmatprep.subr.bf16.mxu0 0
        %311 = vmatpush2.bf16.xpose.msra.mxu0 0
        %312 = vmatprep.subr.bf16.mxu0 0
        %313 = vmatpush2.bf16.xpose.msra.mxu0 0
        %314 = vmatprep.subr.bf16.mxu0 0
        %315 = vmatpush2.bf16.xpose.msra.mxu0 0
        %316 = vmatprep.subr.bf16.mxu0 0
        %317 = vmatpush2.bf16.xpose.msra.mxu0 0
        %318 = vmatprep.subr.bf16.mxu0 0
        %319 = vmatpush2.bf16.xpose.msra.mxu0 0
        %320 = vmatprep.subr.bf16.mxu0 0
        %321 = vmatpush2.bf16.xpose.msra.mxu0 0
        %322 = vmatprep.subr.bf16.mxu0 0
        %323 = vmatpush2.bf16.xpose.msra.mxu0 0
        %324 = vmatprep.subr.bf16.mxu0 0
        %325 = vmatpush2.bf16.xpose.msra.mxu0 0
        %326 = vmatprep.mubr.bf16.mxu0 0
        %327 = vmatmul.mubr.bf16.gmra.mxu0 %v289
        %v328 = vpop.f32.mrf.mxu0
        %v329 = vadd.f32 0.0, %v328
        %v330 = vpop.f32.mrf.mxu0
        %v331 = vpop.f32.mrf.mxu0
        %v332 = vpop.f32.mrf.mxu0
        %333 = vdwg.mxu0
        %v334 = vmul.f32 %v329, 0.35355338
        %vm335 = vcmp.gt.s32.totalorder %v286, 0
        %v336 = vsel %vm335, -1e+18, %v334
        %v337 = vsel %vm287, %v336, -inf
        %338 = vmax.xlane.f32.xlu0 %v337
        %v339 = vpop.xlane.xlu0 %338
        %v340 = vsub.f32 %v336, %v339
        %v341 = vmul.f32 %v340, 1.442695
        %v342 = vpow.pop %v341
        %v343 = vsel %vm287, %v342, 0.0
        %344 = vadd.xlane.f32.xlu0 %v343
        %v345 = vpop.xlane.xlu0 %344
        %v346 = vrcp.pop %v345
        %v347 = vmul.f32 %v342, %v346
        %348 = vst.msk [vmem:[%s261] sm:$0xff] %vm287, %v347
        %v349 = vpack.c.bf16 %v347, %v347
        %v351 = vsel %vm287, %v349, 0
        %vm353 = vcmask 1043456
        %v355 = vsel %vm353, %v285, 0
        %357 = vmatprep.subr.bf16.mxu0 0
        %358 = vmatpush1.bf16.msra.mxu0 0
        %359 = vmatprep.subr.bf16.mxu0 0
        %360 = vmatpush1.bf16.msra.mxu0 0
        %361 = vmatprep.subr.bf16.mxu0 0
        %362 = vmatpush1.bf16.msra.mxu0 0
        %363 = vmatprep.subr.bf16.mxu0 0
        %364 = vmatpush1.bf16.msra.mxu0 0
        %365 = vmatprep.subr.bf16.mxu0 0
        %366 = vmatpush1.bf16.msra.mxu0 0
        %367 = vmatprep.subr.bf16.mxu0 0
        %368 = vmatpush1.bf16.msra.mxu0 0
        %369 = vmatprep.subr.bf16.mxu0 0
        %370 = vmatpush1.bf16.msra.mxu0 0
        %371 = vmatprep.subr.bf16.mxu0 0
        %372 = vmatpush1.bf16.msra.mxu0 %v355
        %373 = vmatprep.subr.bf16.mxu0 0
        %374 = vmatpush2.bf16.msra.mxu0 0
        %375 = vmatprep.subr.bf16.mxu0 0
        %376 = vmatpush2.bf16.msra.mxu0 0
        %377 = vmatprep.subr.bf16.mxu0 0
        %378 = vmatpush2.bf16.msra.mxu0 0
        %379 = vmatprep.subr.bf16.mxu0 0
        %380 = vmatpush2.bf16.msra.mxu0 0
        %381 = vmatprep.subr.bf16.mxu0 0
        %382 = vmatpush2.bf16.msra.mxu0 0
        %383 = vmatprep.subr.bf16.mxu0 0
        %384 = vmatpush2.bf16.msra.mxu0 0
        %385 = vmatprep.subr.bf16.mxu0 0
        %386 = vmatpush2.bf16.msra.mxu0 0
        %387 = vmatprep.subr.bf16.mxu0 0
        %388 = vmatpush2.bf16.msra.mxu0 0
        %389 = vmatprep.mubr.bf16.mxu0 0
        %390 = vmatmul.mubr.bf16.gmra.mxu0 %v351
        %v391 = vpop.f32.mrf.mxu0
        %v392 = vadd.f32 0.0, %v391
        %v393 = vpop.f32.mrf.mxu0
        %v394 = vpop.f32.mrf.mxu0
        %v395 = vpop.f32.mrf.mxu0
        %396 = vdwg.mxu0
        %v398 = vunpack.c.l.b16 %v283
        %v399 = vpack.c.b16 %v398, %v398
        %400 = vrot.lane.b32.xlu0 %v399, 120
        %v401 = vpop.permute.xlu0 %400
        %v403 = vunpack.c.l.b16 %v284
        %v404 = vpack.c.b16 %v403, %v403
        %405 = vrot.lane.b32.xlu0 %v404, 120
        %v406 = vpop.permute.xlu0 %405
        %v408 = vsel %vm287, %v401, 0
        %v411 = vsel %vm287, %v406, 0
        %413 = vmatprep.subr.bf16.mxu0 0
        %414 = vmatpush1.bf16.xpose.msra.mxu0 0
        %415 = vmatprep.subr.bf16.mxu0 0
        %416 = vmatpush1.bf16.xpose.msra.mxu0 0
        %417 = vmatprep.subr.bf16.mxu0 0
        %418 = vmatpush1.bf16.xpose.msra.mxu0 0
        %419 = vmatprep.subr.bf16.mxu0 0
        %420 = vmatpush1.bf16.xpose.msra.mxu0 0
        %421 = vmatprep.subr.bf16.mxu0 0
        %422 = vmatpush1.bf16.xpose.msra.mxu0 0
        %423 = vmatprep.subr.bf16.mxu0 0
        %424 = vmatpush1.bf16.xpose.msra.mxu0 0
        %425 = vmatprep.subr.bf16.mxu0 0
        %426 = vmatpush1.bf16.xpose.msra.mxu0 0
        %427 = vmatprep.subr.bf16.mxu0 0
        %428 = vmatpush1.bf16.xpose.msra.mxu0 %v411
        %429 = vmatprep.subr.bf16.mxu0 0
        %430 = vmatpush2.bf16.xpose.msra.mxu0 0
        %431 = vmatprep.subr.bf16.mxu0 0
        %432 = vmatpush2.bf16.xpose.msra.mxu0 0
        %433 = vmatprep.subr.bf16.mxu0 0
        %434 = vmatpush2.bf16.xpose.msra.mxu0 0
        %435 = vmatprep.subr.bf16.mxu0 0
        %436 = vmatpush2.bf16.xpose.msra.mxu0 0
        %437 = vmatprep.subr.bf16.mxu0 0
        %438 = vmatpush2.bf16.xpose.msra.mxu0 0
        %439 = vmatprep.subr.bf16.mxu0 0
        %440 = vmatpush2.bf16.xpose.msra.mxu0 0
        %441 = vmatprep.subr.bf16.mxu0 0
        %442 = vmatpush2.bf16.xpose.msra.mxu0 0
        %443 = vmatprep.subr.bf16.mxu0 0
        %444 = vmatpush2.bf16.xpose.msra.mxu0 0
        %445 = vmatprep.mubr.bf16.mxu0 0
        %446 = vmatmul.mubr.bf16.gmra.mxu0 %v408
        %v447 = vpop.f32.mrf.mxu0
        %v448 = vadd.f32 0.0, %v447
        %v449 = vpop.f32.mrf.mxu0
        %v450 = vpop.f32.mrf.mxu0
        %v451 = vpop.f32.mrf.mxu0
        %452 = vdwg.mxu0
        %v453 = vmul.f32 %v448, 0.35355338
        %v454 = vsel %vm335, -1e+18, %v453
        %v455 = vsel %vm287, %v454, -inf
        %456 = vmax.xlane.f32.xlu0 %v455
        %v457 = vpop.xlane.xlu0 %456
        %v458 = vsub.f32 %v454, %v457
        %v459 = vmul.f32 %v458, 1.442695
        %v460 = vpow.pop %v459
        %v461 = vsel %vm287, %v460, 0.0
        %462 = vadd.xlane.f32.xlu0 %v461
        %v463 = vpop.xlane.xlu0 %462
        %v464 = vrcp.pop %v463
        %v465 = vmul.f32 %v460, %v464
        %v466 = vpack.c.bf16 %v465, %v465
        %v468 = vunpack.c.l.b16 %v285
        %v469 = vpack.c.b16 %v468, %v468
        %470 = vrot.lane.b32.xlu0 %v469, 120
        %v471 = vpop.permute.xlu0 %470
        %v473 = vsel %vm287, %v466, 0
        %v476 = vsel %vm353, %v471, 0
        %478 = vmatprep.subr.bf16.mxu0 0
        %479 = vmatpush1.bf16.msra.mxu0 0
        %480 = vmatprep.subr.bf16.mxu0 0
        %481 = vmatpush1.bf16.msra.mxu0 0
        %482 = vmatprep.subr.bf16.mxu0 0
        %483 = vmatpush1.bf16.msra.mxu0 0
        %484 = vmatprep.subr.bf16.mxu0 0
        %485 = vmatpush1.bf16.msra.mxu0 0
        %486 = vmatprep.subr.bf16.mxu0 0
        %487 = vmatpush1.bf16.msra.mxu0 0
        %488 = vmatprep.subr.bf16.mxu0 0
        %489 = vmatpush1.bf16.msra.mxu0 0
        %490 = vmatprep.subr.bf16.mxu0 0
        %491 = vmatpush1.bf16.msra.mxu0 0
        %492 = vmatprep.subr.bf16.mxu0 0
        %493 = vmatpush1.bf16.msra.mxu0 %v476
        %494 = vmatprep.subr.bf16.mxu0 0
        %495 = vmatpush2.bf16.msra.mxu0 0
        %496 = vmatprep.subr.bf16.mxu0 0
        %497 = vmatpush2.bf16.msra.mxu0 0
        %498 = vmatprep.subr.bf16.mxu0 0
        %499 = vmatpush2.bf16.msra.mxu0 0
        %500 = vmatprep.subr.bf16.mxu0 0
        %501 = vmatpush2.bf16.msra.mxu0 0
        %502 = vmatprep.subr.bf16.mxu0 0
        %503 = vmatpush2.bf16.msra.mxu0 0
        %504 = vmatprep.subr.bf16.mxu0 0
        %505 = vmatpush2.bf16.msra.mxu0 0
        %506 = vmatprep.subr.bf16.mxu0 0
        %507 = vmatpush2.bf16.msra.mxu0 0
        %508 = vmatprep.subr.bf16.mxu0 0
        %509 = vmatpush2.bf16.msra.mxu0 0
        %510 = vmatprep.mubr.bf16.mxu0 0
        %511 = vmatmul.mubr.bf16.gmra.mxu0 %v473
        %v512 = vpop.f32.mrf.mxu0
        %v513 = vadd.f32 0.0, %v512
        %v514 = vpop.f32.mrf.mxu0
        %v515 = vpop.f32.mrf.mxu0
        %v516 = vpop.f32.mrf.mxu0
        %517 = vdwg.mxu0
        %518 = vrot.lane.b32.xlu0 %v399, 112
        %v519 = vpop.permute.xlu0 %518
        %520 = vrot.lane.b32.xlu0 %v404, 112
        %v521 = vpop.permute.xlu0 %520
        %v523 = vsel %vm287, %v519, 0
        %v526 = vsel %vm287, %v521, 0
        %528 = vmatprep.subr.bf16.mxu0 0
        %529 = vmatpush1.bf16.xpose.msra.mxu0 0
        %530 = vmatprep.subr.bf16.mxu0 0
        %531 = vmatpush1.bf16.xpose.msra.mxu0 0
        %532 = vmatprep.subr.bf16.mxu0 0
        %533 = vmatpush1.bf16.xpose.msra.mxu0 0
        %534 = vmatprep.subr.bf16.mxu0 0
        %535 = vmatpush1.bf16.xpose.msra.mxu0 0
        %536 = vmatprep.subr.bf16.mxu0 0
        %537 = vmatpush1.bf16.xpose.msra.mxu0 0
        %538 = vmatprep.subr.bf16.mxu0 0
        %539 = vmatpush1.bf16.xpose.msra.mxu0 0
        %540 = vmatprep.subr.bf16.mxu0 0
        %541 = vmatpush1.bf16.xpose.msra.mxu0 0
        %542 = vmatprep.subr.bf16.mxu0 0
        %543 = vmatpush1.bf16.xpose.msra.mxu0 %v526
        %544 = vmatprep.subr.bf16.mxu0 0
        %545 = vmatpush2.bf16.xpose.msra.mxu0 0
        %546 = vmatprep.subr.bf16.mxu0 0
        %547 = vmatpush2.bf16.xpose.msra.mxu0 0
        %548 = vmatprep.subr.bf16.mxu0 0
        %549 = vmatpush2.bf16.xpose.msra.mxu0 0
        %550 = vmatprep.subr.bf16.mxu0 0
        %551 = vmatpush2.bf16.xpose.msra.mxu0 0
        %552 = vmatprep.subr.bf16.mxu0 0
        %553 = vmatpush2.bf16.xpose.msra.mxu0 0
        %554 = vmatprep.subr.bf16.mxu0 0
        %555 = vmatpush2.bf16.xpose.msra.mxu0 0
        %556 = vmatprep.subr.bf16.mxu0 0
        %557 = vmatpush2.bf16.xpose.msra.mxu0 0
        %558 = vmatprep.subr.bf16.mxu0 0
        %559 = vmatpush2.bf16.xpose.msra.mxu0 0
        %560 = vmatprep.mubr.bf16.mxu0 0
        %561 = vmatmul.mubr.bf16.gmra.mxu0 %v523
        %v562 = vpop.f32.mrf.mxu0
        %v563 = vadd.f32 0.0, %v562
        %v564 = vpop.f32.mrf.mxu0
        %v565 = vpop.f32.mrf.mxu0
        %v566 = vpop.f32.mrf.mxu0
        %567 = vdwg.mxu0
        %v568 = vmul.f32 %v563, 0.35355338
        %v569 = vsel %vm335, -1e+18, %v568
        %v570 = vsel %vm287, %v569, -inf
        %571 = vmax.xlane.f32.xlu0 %v570
        %v572 = vpop.xlane.xlu0 %571
        %v573 = vsub.f32 %v569, %v572
        %v574 = vmul.f32 %v573, 1.442695
        %v575 = vpow.pop %v574
        %v576 = vsel %vm287, %v575, 0.0
        %577 = vadd.xlane.f32.xlu0 %v576
        %v578 = vpop.xlane.xlu0 %577
        %v579 = vrcp.pop %v578
        %v580 = vmul.f32 %v575, %v579
        %v581 = vpack.c.bf16 %v580, %v580
        %582 = vrot.lane.b32.xlu0 %v469, 112
        %v583 = vpop.permute.xlu0 %582
        %v585 = vsel %vm287, %v581, 0
        %v588 = vsel %vm353, %v583, 0
        %590 = vmatprep.subr.bf16.mxu0 0
        %591 = vmatpush1.bf16.msra.mxu0 0
        %592 = vmatprep.subr.bf16.mxu0 0
        %593 = vmatpush1.bf16.msra.mxu0 0
        %594 = vmatprep.subr.bf16.mxu0 0
        %595 = vmatpush1.bf16.msra.mxu0 0
        %596 = vmatprep.subr.bf16.mxu0 0
        %597 = vmatpush1.bf16.msra.mxu0 0
        %598 = vmatprep.subr.bf16.mxu0 0
        %599 = vmatpush1.bf16.msra.mxu0 0
        %600 = vmatprep.subr.bf16.mxu0 0
        %601 = vmatpush1.bf16.msra.mxu0 0
        %602 = vmatprep.subr.bf16.mxu0 0
        %603 = vmatpush1.bf16.msra.mxu0 0
        %604 = vmatprep.subr.bf16.mxu0 0
        %605 = vmatpush1.bf16.msra.mxu0 %v588
        %606 = vmatprep.subr.bf16.mxu0 0
        %607 = vmatpush2.bf16.msra.mxu0 0
        %608 = vmatprep.subr.bf16.mxu0 0
        %609 = vmatpush2.bf16.msra.mxu0 0
        %610 = vmatprep.subr.bf16.mxu0 0
        %611 = vmatpush2.bf16.msra.mxu0 0
        %612 = vmatprep.subr.bf16.mxu0 0
        %613 = vmatpush2.bf16.msra.mxu0 0
        %614 = vmatprep.subr.bf16.mxu0 0
        %615 = vmatpush2.bf16.msra.mxu0 0
        %616 = vmatprep.subr.bf16.mxu0 0
        %617 = vmatpush2.bf16.msra.mxu0 0
        %618 = vmatprep.subr.bf16.mxu0 0
        %619 = vmatpush2.bf16.msra.mxu0 0
        %620 = vmatprep.subr.bf16.mxu0 0
        %621 = vmatpush2.bf16.msra.mxu0 0
        %622 = vmatprep.mubr.bf16.mxu0 0
        %623 = vmatmul.mubr.bf16.gmra.mxu0 %v585
        %v624 = vpop.f32.mrf.mxu0
        %v625 = vadd.f32 0.0, %v624
        %v626 = vpop.f32.mrf.mxu0
        %v627 = vpop.f32.mrf.mxu0
        %v628 = vpop.f32.mrf.mxu0
        %629 = vdwg.mxu0
        %630 = vrot.lane.b32.xlu0 %v399, 104
        %v631 = vpop.permute.xlu0 %630
        %632 = vrot.lane.b32.xlu0 %v404, 104
        %v633 = vpop.permute.xlu0 %632
        %v635 = vsel %vm287, %v631, 0
        %v638 = vsel %vm287, %v633, 0
        %640 = vmatprep.subr.bf16.mxu0 0
        %641 = vmatpush1.bf16.xpose.msra.mxu0 0
        %642 = vmatprep.subr.bf16.mxu0 0
        %643 = vmatpush1.bf16.xpose.msra.mxu0 0
        %644 = vmatprep.subr.bf16.mxu0 0
        %645 = vmatpush1.bf16.xpose.msra.mxu0 0
        %646 = vmatprep.subr.bf16.mxu0 0
        %647 = vmatpush1.bf16.xpose.msra.mxu0 0
        %648 = vmatprep.subr.bf16.mxu0 0
        %649 = vmatpush1.bf16.xpose.msra.mxu0 0
        %650 = vmatprep.subr.bf16.mxu0 0
        %651 = vmatpush1.bf16.xpose.msra.mxu0 0
        %652 = vmatprep.subr.bf16.mxu0 0
        %653 = vmatpush1.bf16.xpose.msra.mxu0 0
        %654 = vmatprep.subr.bf16.mxu0 0
        %655 = vmatpush1.bf16.xpose.msra.mxu0 %v638
        %656 = vmatprep.subr.bf16.mxu0 0
        %657 = vmatpush2.bf16.xpose.msra.mxu0 0
        %658 = vmatprep.subr.bf16.mxu0 0
        %659 = vmatpush2.bf16.xpose.msra.mxu0 0
        %660 = vmatprep.subr.bf16.mxu0 0
        %661 = vmatpush2.bf16.xpose.msra.mxu0 0
        %662 = vmatprep.subr.bf16.mxu0 0
        %663 = vmatpush2.bf16.xpose.msra.mxu0 0
        %664 = vmatprep.subr.bf16.mxu0 0
        %665 = vmatpush2.bf16.xpose.msra.mxu0 0
        %666 = vmatprep.subr.bf16.mxu0 0
        %667 = vmatpush2.bf16.xpose.msra.mxu0 0
        %668 = vmatprep.subr.bf16.mxu0 0
        %669 = vmatpush2.bf16.xpose.msra.mxu0 0
        %670 = vmatprep.subr.bf16.mxu0 0
        %671 = vmatpush2.bf16.xpose.msra.mxu0 0
        %672 = vmatprep.mubr.bf16.mxu0 0
        %673 = vmatmul.mubr.bf16.gmra.mxu0 %v635
        %v674 = vpop.f32.mrf.mxu0
        %v675 = vadd.f32 0.0, %v674
        %v676 = vpop.f32.mrf.mxu0
        %v677 = vpop.f32.mrf.mxu0
        %v678 = vpop.f32.mrf.mxu0
        %679 = vdwg.mxu0
        %v680 = vmul.f32 %v675, 0.35355338
        %v681 = vsel %vm335, -1e+18, %v680
        %v682 = vsel %vm287, %v681, -inf
        %683 = vmax.xlane.f32.xlu0 %v682
        %v684 = vpop.xlane.xlu0 %683
        %v685 = vsub.f32 %v681, %v684
        %v686 = vmul.f32 %v685, 1.442695
        %v687 = vpow.pop %v686
        %v688 = vsel %vm287, %v687, 0.0
        %689 = vadd.xlane.f32.xlu0 %v688
        %v690 = vpop.xlane.xlu0 %689
        %v691 = vrcp.pop %v690
        %v692 = vmul.f32 %v687, %v691
        %v693 = vpack.c.bf16 %v692, %v692
        %694 = vrot.lane.b32.xlu0 %v469, 104
        %v695 = vpop.permute.xlu0 %694
        %v697 = vsel %vm287, %v693, 0
        %v700 = vsel %vm353, %v695, 0
        %702 = vmatprep.subr.bf16.mxu0 0
        %703 = vmatpush1.bf16.msra.mxu0 0
        %704 = vmatprep.subr.bf16.mxu0 0
        %705 = vmatpush1.bf16.msra.mxu0 0
        %706 = vmatprep.subr.bf16.mxu0 0
        %707 = vmatpush1.bf16.msra.mxu0 0
        %708 = vmatprep.subr.bf16.mxu0 0
        %709 = vmatpush1.bf16.msra.mxu0 0
        %710 = vmatprep.subr.bf16.mxu0 0
        %711 = vmatpush1.bf16.msra.mxu0 0
        %712 = vmatprep.subr.bf16.mxu0 0
        %713 = vmatpush1.bf16.msra.mxu0 0
        %714 = vmatprep.subr.bf16.mxu0 0
        %715 = vmatpush1.bf16.msra.mxu0 0
        %716 = vmatprep.subr.bf16.mxu0 0
        %717 = vmatpush1.bf16.msra.mxu0 %v700
        %718 = vmatprep.subr.bf16.mxu0 0
        %719 = vmatpush2.bf16.msra.mxu0 0
        %720 = vmatprep.subr.bf16.mxu0 0
        %721 = vmatpush2.bf16.msra.mxu0 0
        %722 = vmatprep.subr.bf16.mxu0 0
        %723 = vmatpush2.bf16.msra.mxu0 0
        %724 = vmatprep.subr.bf16.mxu0 0
        %725 = vmatpush2.bf16.msra.mxu0 0
        %726 = vmatprep.subr.bf16.mxu0 0
        %727 = vmatpush2.bf16.msra.mxu0 0
        %728 = vmatprep.subr.bf16.mxu0 0
        %729 = vmatpush2.bf16.msra.mxu0 0
        %730 = vmatprep.subr.bf16.mxu0 0
        %731 = vmatpush2.bf16.msra.mxu0 0
        %732 = vmatprep.subr.bf16.mxu0 0
        %733 = vmatpush2.bf16.msra.mxu0 0
        %734 = vmatprep.mubr.bf16.mxu0 0
        %735 = vmatmul.mubr.bf16.gmra.mxu0 %v697
        %v736 = vpop.f32.mrf.mxu0
        %v737 = vadd.f32 0.0, %v736
        %v738 = vpop.f32.mrf.mxu0
        %v739 = vpop.f32.mrf.mxu0
        %v740 = vpop.f32.mrf.mxu0
        %741 = vdwg.mxu0
        %743 = vrot.lane.b32.xlu0 %v513, 8
        %v744 = vpop.permute.xlu0 %743
        %747 = vrot.lane.b32.xlu0 %v625, 16
        %v748 = vpop.permute.xlu0 %747
        %751 = vrot.lane.b32.xlu0 %v737, 24
        %v752 = vpop.permute.xlu0 %751
        %v754 = vsel %vm287, %v392, %v744
        %vm755 = vcmask 130048
        %v756 = vsel %vm755, %v754, %v748
        %vm757 = vcmask 195584
        %v758 = vsel %vm757, %v756, %v752
        %v759 = vpack.c.bf16 %v758, %v758
        %vm760 = vcmask 257024
        %761 = vst.msk [vmem:[%s281] sm:$0xf] %vm760, %v759
        %p762 = scmp.lt.s32.totalorder %s20, 1
        %s763 = scalar_select %p762, %s20, 1
        %s764 = smul.addr %s763, 4
        %s765 = scalar_lea.vmem %s4, %s764
        %s766 = sand.u32 %s158, 1
        %s767 = scalar_lea.sflag [#allocation3], %s766
        %s768 = sand.u32 %s158, 1
        %s769 = smul.addr %s768, 8
        %s770 = scalar_lea.vmem [#allocation2], %s769
        // Predicated region
        $region37: #{transformer_decoder_layer.13} parent=35 // pred_check
          %p771 = pneg %p142
        $region38: #{transformer_decoder_layer.13} parent=35 // pred_check_branch
          %773 = sbr.rel (%p771) target = $region40
        $region39: #{transformer_decoder_layer.13} parent=35 // pred_region
          _
        $region40: #{transformer_decoder_layer.13} parent=35 // pred_fallthru
          _
        // Predicated region
        $region41: #{transformer_decoder_layer.13} parent=35 // pred_check
          %p774 = pneg %p168
        $region42: #{transformer_decoder_layer.13} parent=35 // pred_check_branch
          %776 = sbr.rel (%p774) target = $region44
        $region43: #{transformer_decoder_layer.13} parent=35 // pred_region
          %s778 = ssub.s32 128, 128
          %779 = vsyncadd %s767, %s778
          %s780 = smul.addr %s20, 128
          %s781 = scalar_lea.hbm %s5, %s780
          %s783 = sshll.u32 %s770, 4
          %s784 = int_to_ptr.vmem [resolvable:$true] %s783
          %786 = dma.vmem_to_hbm [thread:$0]  %s784, 128, %s781, %s767
        $region44: #{transformer_decoder_layer.13} parent=35 // pred_fallthru
          _
      $region36: #{transformer_decoder_layer.13} parent=5 // pred_fallthru
        _
      %p787 = scmp.le.s32.totalorder 2, %s15
      // Predicated region
      $region45: #{transformer_decoder_layer.13} parent=5 // pred_check
        %p788 = pneg %p787
      $region46: #{transformer_decoder_layer.13} parent=5 // pred_check_branch
        %790 = sbr.rel (%p788) target = $region48
      $region47: #{transformer_decoder_layer.13} parent=5 // pred_region
        %s791 = ssub.s32 %s15, 2
        // Predicated region
        $region49: #{transformer_decoder_layer.13} parent=47 // pred_check
          %p792 = pneg %p148
        $region50: #{transformer_decoder_layer.13} parent=47 // pred_check_branch
          %794 = sbr.rel (%p792) target = $region52
        $region51: #{transformer_decoder_layer.13} parent=47 // pred_region
          %p795 = scmp.lt.s32.totalorder %s21, 1
          %s796 = scalar_select %p795, %s21, 1
          %s797 = smul.addr %s796, 4
          %s798 = scalar_lea.vmem %s4, %s797
        $region52: #{transformer_decoder_layer.13} parent=47 // pred_fallthru
          _
        // Predicated region
        $region53: #{transformer_decoder_layer.13} parent=47 // pred_check
          %p799 = pneg %p174
        $region54: #{transformer_decoder_layer.13} parent=47 // pred_check_branch
          %801 = sbr.rel (%p799) target = $region56
        $region55: #{transformer_decoder_layer.13} parent=47 // pred_region
          %s802 = sand.u32 %s159, 1
          %s803 = scalar_lea.sflag [#allocation3], %s802
          %s804 = sand.u32 %s159, 1
          %s805 = smul.addr %s804, 8
          %s806 = scalar_lea.vmem [#allocation2], %s805
          %807 = dma.done %s803, 128
        $region56: #{transformer_decoder_layer.13} parent=47 // pred_fallthru
          _
      $region48: #{transformer_decoder_layer.13} parent=5 // pred_fallthru
        _
    $region6: #{transformer_decoder_layer.13} parent=1 // loop_footer
      %s19 = sadd.s32 1, %s15
    $region7: #{transformer_decoder_layer.13} parent=1 // loop_footer_branch
      %14 = sbr.rel target = $region3
    $region8: #{transformer_decoder_layer.13} parent=1 // loop_exit
      _
    %808 = vsyncpa [#allocation3], 1
    %s809 = scalar_lea.sflag [#allocation3], 1
    %810 = vsyncpa %s809, 1

// kernel: transformer_decoder_layer.17
$region0: #{transformer_decoder_layer.17}
  #allocation0 [shape = 'u32[]', space=smem, size = 0x4, offset = 0x4, fixed_abs, tag = 'smem constant byte address 0x4 - core index']
  #allocation1 [shape = 'u32[144,128]{1,0:T(1,128)}', space=vmem, size = 0x12000, scoped, tag = 'internal scratch']
  %s0 = inlined_call_operand.vmem [shape: bf16[16,32], index: 0, kind: input, shape index: {}]
  %s1 = inlined_call_operand.vmem [shape: bf16[32,32], index: 1, kind: input, shape index: {}]
  %s2 = inlined_call_operand.vmem [shape: f32[1,32], index: 2, kind: input, shape index: {}]
  %s3 = inlined_call_operand.vmem [shape: f32[16,32], index: 3, kind: input, shape index: {}]
  %s4 = inlined_call_operand.vmem [shape: f32[1,32], index: 4, kind: input, shape index: {}]
  %s5 = inlined_call_operand.vmem [shape: f32[1,32], index: 5, kind: input, shape index: {}]
  %s6 = inlined_call_operand.vmem [shape: bf16[32,64], index: 6, kind: input, shape index: {}]
  %s7 = inlined_call_operand.vmem [shape: f32[1,64], index: 7, kind: input, shape index: {}]
  %s8 = inlined_call_operand.vmem [shape: bf16[64,32], index: 8, kind: input, shape index: {}]
  %s9 = inlined_call_operand.vmem [shape: f32[1,32], index: 9, kind: input, shape index: {}]
  %s10 = inlined_call_operand.hbm [shape: f32[16,32], index: 10, kind: output, shape index: {}]
  %s11 = sld [smem:[#allocation0]]
  $region50: #{transformer_decoder_layer.17} parent=0
    _
  %s13 = ssub.s32 1, %s11
  %s14 = scalar_select 0, %s13, %s11
  $region1: #{transformer_decoder_layer.17} parent=0
    #allocation2 [shape = 'u8[8192]{0}', space=vmem, size = 0x2000, scoped, tag = 'output window, operand 0, single buffered']
    #allocation3 [shape = 's32[1]{0}', space=sflag, size = 0x4, scoped, tag = 'scoped memory for transformer_decoder_layer.17']
    %15 = vsyncpa [#allocation3], 0
    // Predicated region
    $region2: #{transformer_decoder_layer.17} parent=1 // pred_check
      _
    $region3: #{transformer_decoder_layer.17} parent=1 // pred_check_branch
      %17 = sbr.rel (0) target = $region5
    $region4: #{transformer_decoder_layer.17} parent=1 // pred_region
      _
    $region5: #{transformer_decoder_layer.17} parent=1 // pred_fallthru
      _
    // Predicated region
    $region6: #{transformer_decoder_layer.17} parent=1 // pred_check
      _
    $region7: #{transformer_decoder_layer.17} parent=1 // pred_check_branch
      %19 = sbr.rel (0) target = $region9
    $region8: #{transformer_decoder_layer.17} parent=1 // pred_region
      _
    $region9: #{transformer_decoder_layer.17} parent=1 // pred_fallthru
      _
    // Predicated region
    $region10: #{transformer_decoder_layer.17} parent=1 // pred_check
      _
    $region11: #{transformer_decoder_layer.17} parent=1 // pred_check_branch
      %21 = sbr.rel (0) target = $region13
    $region12: #{transformer_decoder_layer.17} parent=1 // pred_region
      _
    $region13: #{transformer_decoder_layer.17} parent=1 // pred_fallthru
      _
    // Predicated region
    $region14: #{transformer_decoder_layer.17} parent=1 // pred_check
      _
    $region15: #{transformer_decoder_layer.17} parent=1 // pred_check_branch
      %23 = sbr.rel (0) target = $region17
    $region16: #{transformer_decoder_layer.17} parent=1 // pred_region
      _
    $region17: #{transformer_decoder_layer.17} parent=1 // pred_fallthru
      _
    // Predicated region
    $region18: #{transformer_decoder_layer.17} parent=1 // pred_check
      _
    $region19: #{transformer_decoder_layer.17} parent=1 // pred_check_branch
      %25 = sbr.rel (0) target = $region21
    $region20: #{transformer_decoder_layer.17} parent=1 // pred_region
      _
    $region21: #{transformer_decoder_layer.17} parent=1 // pred_fallthru
      _
    // Predicated region
    $region22: #{transformer_decoder_layer.17} parent=1 // pred_check
      _
    $region23: #{transformer_decoder_layer.17} parent=1 // pred_check_branch
      %27 = sbr.rel (0) target = $region25
    $region24: #{transformer_decoder_layer.17} parent=1 // pred_region
      _
    $region25: #{transformer_decoder_layer.17} parent=1 // pred_fallthru
      _
    // Predicated region
    $region26: #{transformer_decoder_layer.17} parent=1 // pred_check
      _
    $region27: #{transformer_decoder_layer.17} parent=1 // pred_check_branch
      %29 = sbr.rel (0) target = $region29
    $region28: #{transformer_decoder_layer.17} parent=1 // pred_region
      _
    $region29: #{transformer_decoder_layer.17} parent=1 // pred_fallthru
      _
    // Predicated region
    $region30: #{transformer_decoder_layer.17} parent=1 // pred_check
      _
    $region31: #{transformer_decoder_layer.17} parent=1 // pred_check_branch
      %31 = sbr.rel (0) target = $region33
    $region32: #{transformer_decoder_layer.17} parent=1 // pred_region
      _
    $region33: #{transformer_decoder_layer.17} parent=1 // pred_fallthru
      _
    // Predicated region
    $region34: #{transformer_decoder_layer.17} parent=1 // pred_check
      _
    $region35: #{transformer_decoder_layer.17} parent=1 // pred_check_branch
      %33 = sbr.rel (0) target = $region37
    $region36: #{transformer_decoder_layer.17} parent=1 // pred_region
      _
    $region37: #{transformer_decoder_layer.17} parent=1 // pred_fallthru
      _
    // Predicated region
    $region38: #{transformer_decoder_layer.17} parent=1 // pred_check
      _
    $region39: #{transformer_decoder_layer.17} parent=1 // pred_check_branch
      %35 = sbr.rel (0) target = $region41
    $region40: #{transformer_decoder_layer.17} parent=1 // pred_region
      _
    $region41: #{transformer_decoder_layer.17} parent=1 // pred_fallthru
      _
    %v37 = vld [vmem:[%s0] sm:$0xf]
    %v38 = vld [vmem:[%s0 + $0x4] sm:$0xf]
    %v39 = vld [vmem:[%s1] sm:$0xf]
    %v40 = vld [vmem:[%s1 + $0x4] sm:$0xf]
    %v41 = vld [vmem:[%s1 + $0x8] sm:$0xf]
    %v42 = vld [vmem:[%s1 + $0xc] sm:$0xf]
    %v43 = vld [vmem:[%s2] sm:$0x1]
    %v45 = vlaneseq
    %v46 = vshrl.u32 %v45, 7
    %v47 = vsub.s32 0, %v46
    %v48 = vrot.slane %v43, %v47
    %v52 = vunpack.c.l.b16 %v37
    %v53 = vunpack.c.l.b16 %v38
    %v54 = vpack.c.b16 %v53, %v52
    %v59 = vunpack.c.l.b16 %v39
    %v60 = vunpack.c.l.b16 %v40
    %v61 = vunpack.c.l.b16 %v41
    %v62 = vunpack.c.l.b16 %v42
    %v63 = vpack.c.b16 %v60, %v59
    %v64 = vpack.c.b16 %v62, %v61
    %vm67 = vcmask 261120
    %v69 = vsel %vm67, %v54, 0
    %71 = vmatprep.subr.bf16.mxu0 0
    %72 = vmatpush1.bf16.msra.mxu0 0
    %73 = vmatprep.subr.bf16.mxu0 0
    %74 = vmatpush1.bf16.msra.mxu0 0
    %75 = vmatprep.subr.bf16.mxu0 0
    %76 = vmatpush1.bf16.msra.mxu0 0
    %77 = vmatprep.subr.bf16.mxu0 0
    %78 = vmatpush1.bf16.msra.mxu0 0
    %79 = vmatprep.subr.bf16.mxu0 0
    %80 = vmatpush1.bf16.msra.mxu0 0
    %81 = vmatprep.subr.bf16.mxu0 0
    %82 = vmatpush1.bf16.msra.mxu0 0
    %83 = vmatprep.subr.bf16.mxu0 0
    %84 = vmatpush1.bf16.msra.mxu0 %v64
    %85 = vmatprep.subr.bf16.mxu0 0
    %86 = vmatpush1.bf16.msra.mxu0 %v63
    %87 = vmatprep.subr.bf16.mxu0 0
    %88 = vmatpush2.bf16.msra.mxu0 0
    %89 = vmatprep.subr.bf16.mxu0 0
    %90 = vmatpush2.bf16.msra.mxu0 0
    %91 = vmatprep.subr.bf16.mxu0 0
    %92 = vmatpush2.bf16.msra.mxu0 0
    %93 = vmatprep.subr.bf16.mxu0 0
    %94 = vmatpush2.bf16.msra.mxu0 0
    %95 = vmatprep.subr.bf16.mxu0 0
    %96 = vmatpush2.bf16.msra.mxu0 0
    %97 = vmatprep.subr.bf16.mxu0 0
    %98 = vmatpush2.bf16.msra.mxu0 0
    %99 = vmatprep.subr.bf16.mxu0 0
    %100 = vmatpush2.bf16.msra.mxu0 0
    %101 = vmatprep.subr.bf16.mxu0 0
    %102 = vmatpush2.bf16.msra.mxu0 0
    %103 = vmatprep.mubr.bf16.mxu0 0
    %104 = vmatmul.mubr.bf16.gmra.mxu0 %v69
    %v105 = vpop.f32.mrf.mxu0
    %v106 = vadd.f32 %v48, %v105
    %v107 = vpop.f32.mrf.mxu0
    %v108 = vpop.f32.mrf.mxu0
    %v109 = vadd.f32 %v48, %v108
    %v110 = vpop.f32.mrf.mxu0
    %111 = vdwg.mxu0
    %v112 = vld [vmem:[%s3] sm:$0xff]
    %v113 = vld [vmem:[%s3 + $0x8] sm:$0xff]
    %v114 = vadd.f32 %v106, %v112
    %v115 = vadd.f32 %v109, %v113
    %v116 = vld [vmem:[%s4] sm:$0x1]
    %v117 = vld [vmem:[%s5] sm:$0x1]
    %v118 = vsel %vm67, %v114, 0.0
    %119 = vadd.xlane.f32.xlu0 %v118
    %v120 = vpop.xlane.xlu0 %119
    %v121 = vsel %vm67, %v115, 0.0
    %122 = vadd.xlane.f32.xlu0 %v121
    %v123 = vpop.xlane.xlu0 %122
    %v124 = vrcp.pop 32.0
    %v125 = vmul.f32 %v120, %v124
    %v126 = vmul.f32 %v123, %v124
    %v127 = vsub.f32 %v114, %v125
    %v128 = vsub.f32 %v115, %v126
    %v129 = vmul.f32 %v127, %v127
    %v130 = vmul.f32 %v128, %v128
    %v131 = vsel %vm67, %v129, 0.0
    %132 = vadd.xlane.f32.xlu0 %v131
    %v133 = vpop.xlane.xlu0 %132
    %v134 = vsel %vm67, %v130, 0.0
    %135 = vadd.xlane.f32.xlu0 %v134
    %v136 = vpop.xlane.xlu0 %135
    %v137 = vmul.f32 %v133, %v124
    %v138 = vmul.f32 %v136, %v124
    %v139 = vadd.f32 %v137, 1e-06
    %v140 = vadd.f32 %v138, 1e-06
    %v141 = vrsqrt.pop %v139
    %v142 = vrsqrt.pop %v140
    %v143 = vmul.f32 %v127, %v141
    %v144 = vmul.f32 %v128, %v142
    %v146 = vlaneseq
    %v147 = vshrl.u32 %v146, 7
    %v148 = vsub.s32 0, %v147
    %v149 = vrot.slane %v116, %v148
    %v151 = vmul.f32 %v143, %v149
    %v152 = vmul.f32 %v144, %v149
    %v154 = vlaneseq
    %v155 = vshrl.u32 %v154, 7
    %v156 = vsub.s32 0, %v155
    %v157 = vrot.slane %v117, %v156
    %v159 = vadd.f32 %v151, %v157
    %v160 = vadd.f32 %v152, %v157
    %v161 = vpack.c.bf16 %v160, %v159
    %v162 = vld [vmem:[%s6] sm:$0xf]
    %v163 = vld [vmem:[%s6 + $0x4] sm:$0xf]
    %v164 = vld [vmem:[%s6 + $0x8] sm:$0xf]
    %v165 = vld [vmem:[%s6 + $0xc] sm:$0xf]
    %v166 = vld [vmem:[%s7] sm:$0x1]
    %v168 = vlaneseq
    %v169 = vshrl.u32 %v168, 7
    %v170 = vsub.s32 0, %v169
    %v171 = vrot.slane %v166, %v170
    %v177 = vunpack.c.l.b16 %v162
    %v178 = vunpack.c.l.b16 %v163
    %v179 = vunpack.c.l.b16 %v164
    %v180 = vunpack.c.l.b16 %v165
    %v181 = vpack.c.b16 %v178, %v177
    %v182 = vpack.c.b16 %v180, %v179
    %v186 = vsel %vm67, %v161, 0
    %188 = vmatprep.subr.bf16.mxu0 0
    %189 = vmatpush1.bf16.msra.mxu0 0
    %190 = vmatprep.subr.bf16.mxu0 0
    %191 = vmatpush1.bf16.msra.mxu0 0
    %192 = vmatprep.subr.bf16.mxu0 0
    %193 = vmatpush1.bf16.msra.mxu0 0
    %194 = vmatprep.subr.bf16.mxu0 0
    %195 = vmatpush1.bf16.msra.mxu0 0
    %196 = vmatprep.subr.bf16.mxu0 0
    %197 = vmatpush1.bf16.msra.mxu0 0
    %198 = vmatprep.subr.bf16.mxu0 0
    %199 = vmatpush1.bf16.msra.mxu0 0
    %200 = vmatprep.subr.bf16.mxu0 0
    %201 = vmatpush1.bf16.msra.mxu0 %v182
    %202 = vmatprep.subr.bf16.mxu0 0
    %203 = vmatpush1.bf16.msra.mxu0 %v181
    %204 = vmatprep.subr.bf16.mxu0 0
    %205 = vmatpush2.bf16.msra.mxu0 0
    %206 = vmatprep.subr.bf16.mxu0 0
    %207 = vmatpush2.bf16.msra.mxu0 0
    %208 = vmatprep.subr.bf16.mxu0 0
    %209 = vmatpush2.bf16.msra.mxu0 0
    %210 = vmatprep.subr.bf16.mxu0 0
    %211 = vmatpush2.bf16.msra.mxu0 0
    %212 = vmatprep.subr.bf16.mxu0 0
    %213 = vmatpush2.bf16.msra.mxu0 0
    %214 = vmatprep.subr.bf16.mxu0 0
    %215 = vmatpush2.bf16.msra.mxu0 0
    %216 = vmatprep.subr.bf16.mxu0 0
    %217 = vmatpush2.bf16.msra.mxu0 0
    %218 = vmatprep.subr.bf16.mxu0 0
    %219 = vmatpush2.bf16.msra.mxu0 0
    %220 = vmatprep.mubr.bf16.mxu0 0
    %221 = vmatmul.mubr.bf16.gmra.mxu0 %v186
    %v222 = vpop.f32.mrf.mxu0
    %v223 = vadd.f32 %v171, %v222
    %v224 = vpop.f32.mrf.mxu0
    %v225 = vpop.f32.mrf.mxu0
    %v226 = vadd.f32 %v171, %v225
    %v227 = vpop.f32.mrf.mxu0
    %228 = vdwg.mxu0
    %v229 = vmax.f32 %v223, 0.0
    %v230 = vmax.f32 %v226, 0.0
    %v231 = vpack.c.bf16 %v230, %v229
    %v232 = vld [vmem:[%s8] sm:$0xf]
    %v233 = vld [vmem:[%s8 + $0x4] sm:$0xf]
    %v234 = vld [vmem:[%s8 + $0x8] sm:$0xf]
    %v235 = vld [vmem:[%s8 + $0xc] sm:$0xf]
    %v236 = vld [vmem:[%s8 + $0x10] sm:$0xf]
    %v237 = vld [vmem:[%s8 + $0x14] sm:$0xf]
    %v238 = vld [vmem:[%s8 + $0x18] sm:$0xf]
    %v239 = vld [vmem:[%s8 + $0x1c] sm:$0xf]
    %v240 = vld [vmem:[%s9] sm:$0x1]
    %v242 = vlaneseq
    %v243 = vshrl.u32 %v242, 7
    %v244 = vsub.s32 0, %v243
    %v245 = vrot.slane %v240, %v244
    %v255 = vunpack.c.l.b16 %v232
    %v256 = vunpack.c.l.b16 %v233
    %v257 = vunpack.c.l.b16 %v234
    %v258 = vunpack.c.l.b16 %v235
    %v259 = vunpack.c.l.b16 %v236
    %v260 = vunpack.c.l.b16 %v237
    %v261 = vunpack.c.l.b16 %v238
    %v262 = vunpack.c.l.b16 %v239
    %v263 = vpack.c.b16 %v256, %v255
    %v264 = vpack.c.b16 %v258, %v257
    %v265 = vpack.c.b16 %v260, %v259
    %v266 = vpack.c.b16 %v262, %v261
    %vm271 = vcmask 523264
    %v273 = vsel %vm271, %v231, 0
    %275 = vmatprep.subr.bf16.mxu0 0
    %276 = vmatpush1.bf16.msra.mxu0 0
    %277 = vmatprep.subr.bf16.mxu0 0
    %278 = vmatpush1.bf16.msra.mxu0 0
    %279 = vmatprep.subr.bf16.mxu0 0
    %280 = vmatpush1.bf16.msra.mxu0 0
    %281 = vmatprep.subr.bf16.mxu0 0
    %282 = vmatpush1.bf16.msra.mxu0 0
    %283 = vmatprep.subr.bf16.mxu0 0
    %284 = vmatpush1.bf16.msra.mxu0 %v266
    %285 = vmatprep.subr.bf16.mxu0 0
    %286 = vmatpush1.bf16.msra.mxu0 %v265
    %287 = vmatprep.subr.bf16.mxu0 0
    %288 = vmatpush1.bf16.msra.mxu0 %v264
    %289 = vmatprep.subr.bf16.mxu0 0
    %290 = vmatpush1.bf16.msra.mxu0 %v263
    %291 = vmatprep.subr.bf16.mxu0 0
    %292 = vmatpush2.bf16.msra.mxu0 0
    %293 = vmatprep.subr.bf16.mxu0 0
    %294 = vmatpush2.bf16.msra.mxu0 0
    %295 = vmatprep.subr.bf16.mxu0 0
    %296 = vmatpush2.bf16.msra.mxu0 0
    %297 = vmatprep.subr.bf16.mxu0 0
    %298 = vmatpush2.bf16.msra.mxu0 0
    %299 = vmatprep.subr.bf16.mxu0 0
    %300 = vmatpush2.bf16.msra.mxu0 0
    %301 = vmatprep.subr.bf16.mxu0 0
    %302 = vmatpush2.bf16.msra.mxu0 0
    %303 = vmatprep.subr.bf16.mxu0 0
    %304 = vmatpush2.bf16.msra.mxu0 0
    %305 = vmatprep.subr.bf16.mxu0 0
    %306 = vmatpush2.bf16.msra.mxu0 0
    %307 = vmatprep.mubr.bf16.mxu0 0
    %308 = vmatmul.mubr.bf16.gmra.mxu0 %v273
    %v309 = vpop.f32.mrf.mxu0
    %v310 = vadd.f32 %v245, %v309
    %v311 = vpop.f32.mrf.mxu0
    %v312 = vpop.f32.mrf.mxu0
    %v313 = vadd.f32 %v245, %v312
    %v314 = vpop.f32.mrf.mxu0
    %315 = vdwg.mxu0
    %v316 = vadd.f32 %v310, %v114
    %v317 = vadd.f32 %v313, %v115
    %318 = vst.msk [vmem:[#allocation2] sm:$0xff] %vm67, %v316
    %319 = vst.msk [vmem:[#allocation2 + $0x8] sm:$0xff] %vm67, %v317
    // Predicated region
    $region42: #{transformer_decoder_layer.17} parent=1 // pred_check
      _
    $region43: #{transformer_decoder_layer.17} parent=1 // pred_check_branch
      %321 = sbr.rel (0) target = $region45
    $region44: #{transformer_decoder_layer.17} parent=1 // pred_region
      %s323 = ssub.s32 256, 256
      %324 = vsyncadd [#allocation3], %s323
      %s325 = sshll.u32 [#allocation2], 4
      %s326 = int_to_ptr.vmem [resolvable:$true] %s325
      %331 = dma.vmem_to_hbm [thread:$0]  %s326, 256, %s10, [#allocation3], 128, 128, 8
    $region45: #{transformer_decoder_layer.17} parent=1 // pred_fallthru
      _
    // Predicated region
    $region46: #{transformer_decoder_layer.17} parent=1 // pred_check
      _
    $region47: #{transformer_decoder_layer.17} parent=1 // pred_check_branch
      %333 = sbr.rel (0) target = $region49
    $region48: #{transformer_decoder_layer.17} parent=1 // pred_region
      %334 = dma.done [#allocation3], 256
    $region49: #{transformer_decoder_layer.17} parent=1 // pred_fallthru
      _
    %335 = vsyncpa [#allocation3], 1

</llo_original>
